<compile_context>
chip_gen: v7x
topology: tpu7x:2x2x1
jax: 0.10.0
libtpu: 0.0.40
codegen_flags: <defaults>
</compile_context>

<pallas_src>
import functools

import jax
import jax.numpy as jnp
from jax.experimental import pallas as pl
from jax.experimental.pallas import tpu as pltpu

# ----------------------------- small synthetic CLIP config -----------------------------
BATCH = 2
TEXT_SEQ = 8
VOCAB = 64
HIDDEN = 32          # shared text / vision width for this synthetic config
NUM_HEADS = 2
HEAD_DIM = HIDDEN // NUM_HEADS
MLP_DIM = 4 * HIDDEN
NUM_LAYERS = 2
IMG = 16
CHANNELS = 3
PATCH = 8
NUM_PATCHES = (IMG // PATCH) ** 2        # 4
VIS_SEQ = NUM_PATCHES + 1                # +1 class token
PATCH_DIM = CHANNELS * PATCH * PATCH     # 192
PROJ_DIM = 16
EPS = 1e-5
NEG_INF = -1e9

# order of the per-layer stacked weights as fed to the tower kernels
LAYER_KEYS = ('ln1_w', 'ln1_b', 'wqkv', 'bqkv', 'wo', 'bo',
              'ln2_w', 'ln2_b', 'w1', 'b1', 'w2', 'b2')


# ----------------------------------- kernel helpers ------------------------------------
def _layer_norm(x, g, b):
    mu = jnp.mean(x, axis=-1, keepdims=True)
    var = jnp.mean(jnp.square(x - mu), axis=-1, keepdims=True)
    return (x - mu) * jax.lax.rsqrt(var + EPS) * g + b


def _l2_normalize(y):
    return y * jax.lax.rsqrt(jnp.maximum(jnp.sum(y * y, axis=-1, keepdims=True), 1e-24))


def _encoder_layer(x, bias, ln1w, ln1b, wqkv, bqkv, wo, bo,
                   ln2w, ln2b, w1, b1, w2, b2, *, num_heads, head_dim):
    """One pre-LN CLIP encoder layer on an (S, D) f32 residual slab (one batch row)."""
    s, d = x.shape

    # ---- self-attention: ONE fused (S,D)x(D,3D) QKV matmul (q-scale folded in) ----
    h = _layer_norm(x, ln1w, ln1b).astype(jnp.bfloat16)
    qkv = jnp.dot(h, wqkv, preferred_element_type=jnp.float32) + bqkv        # (S, 3D) f32
    # contiguous D-wide slices (no sub-128-lane per-head slicing), then head split
    q = qkv[:, :d].astype(jnp.bfloat16).reshape(s, num_heads, head_dim)
    k = qkv[:, d:2 * d].astype(jnp.bfloat16).reshape(s, num_heads, head_dim)
    v = qkv[:, 2 * d:].astype(jnp.bfloat16).reshape(s, num_heads, head_dim)
    sc = jnp.einsum('qhd,khd->hqk', q, k, preferred_element_type=jnp.float32)
    if bias is not None:
        sc = sc + bias[None, :, :]
    sc = sc - jnp.max(sc, axis=-1, keepdims=True)            # softmax in f32 (v5e-safe)
    p = jnp.exp(sc)
    p = p * pl.reciprocal(jnp.sum(p, axis=-1, keepdims=True), approx=True)   # EUP slot
    ctx = jnp.einsum('hqk,khd->qhd', p.astype(jnp.bfloat16), v,
                     preferred_element_type=jnp.float32)
    # ONE (S,D)x(D,D) output projection (full wo, not per-head accumulation)
    attn = jnp.dot(ctx.reshape(s, d).astype(jnp.bfloat16), wo,
                   preferred_element_type=jnp.float32) + bo
    x = x + attn

    # ---- MLP with quick_gelu (pre-LN) ----
    h2 = _layer_norm(x, ln2w, ln2b).astype(jnp.bfloat16)
    f = jnp.dot(h2, w1, preferred_element_type=jnp.float32) + b1
    f = f * jax.nn.sigmoid(1.702 * f)                         # quick_gelu in f32
    m = jnp.dot(f.astype(jnp.bfloat16), w2, preferred_element_type=jnp.float32) + b2
    return x + m


# ------------------------------------ Pallas kernels -----------------------------------
def text_stack_kernel(tok_ref, pos_ref, pad_ref, eos_ref,
                      ln1w_ref, ln1b_ref, wqkv_ref, bqkv_ref, wo_ref, bo_ref,
                      ln2w_ref, ln2b_ref, w1_ref, b1_ref, w2_ref, b2_ref,
                      flnw_ref, flnb_ref, wproj_ref,
                      temb_ref, res_ref, *, num_heads, head_dim):
    l = pl.program_id(1)

    @pl.when(l == 0)
    def _():                                      # token + positional embedding
        res_ref[...] = tok_ref[0] + pos_ref[...]

    s = res_ref.shape[0]
    # attention bias built in-kernel: causal(iota) + (1,S) key-padding bias
    qi = jax.lax.broadcasted_iota(jnp.int32, (s, s), 0)
    ki = jax.lax.broadcasted_iota(jnp.int32, (s, s), 1)
    bias = jnp.where(ki <= qi, 0.0, NEG_INF).astype(jnp.float32) + pad_ref[0]   # (S,S)

    x = _encoder_layer(
        res_ref[...], bias,
        ln1w_ref[0], ln1b_ref[0], wqkv_ref[0], bqkv_ref[0], wo_ref[0], bo_ref[0],
        ln2w_ref[0], ln2b_ref[0], w1_ref[0], b1_ref[0], w2_ref[0], b2_ref[0],
        num_heads=num_heads, head_dim=head_dim)
    res_ref[...] = x

    @pl.when(l == pl.num_programs(1) - 1)
    def _():
        # EOS pooling via one-hot select, then final LN (per-token, so pooling first
        # is equivalent), text projection and L2 normalize — all fused in-kernel.
        pooled = jnp.sum(x * eos_ref[0], axis=0, keepdims=True)          # (1, D)
        pooled = _layer_norm(pooled, flnw_ref[...], flnb_ref[...])
        y = jnp.dot(pooled.astype(jnp.bfloat16), wproj_ref[...],
                    preferred_element_type=jnp.float32)
        temb_ref[...] = _l2_normalize(y)[None]                            # (1,1,P)


def vision_stack_kernel(patch_ref, wpe_ref, poscls_ref, plnw_ref, plnb_ref,
                        ln1w_ref, ln1b_ref, wqkv_ref, bqkv_ref, wo_ref, bo_ref,
                        ln2w_ref, ln2b_ref, w1_ref, b1_ref, w2_ref, b2_ref,
                        postw_ref, postb_ref, wproj_ref,
                        iemb_ref, res_ref, *, num_heads, head_dim):
    l = pl.program_id(1)

    @pl.when(l == 0)
    def _():
        # Patch "conv" as one matmul.  Row 0 of patch_ref is zero-padded, so the
        # class token comes entirely from poscls (= pos_embedding[0] + class_emb).
        proj = jnp.dot(patch_ref[0].astype(jnp.bfloat16), wpe_ref[...],
                       preferred_element_type=jnp.float32)               # (VIS_SEQ, D)
        emb = proj + poscls_ref[...]
        res_ref[...] = _layer_norm(emb, plnw_ref[...], plnb_ref[...])     # pre-LN

    x = _encoder_layer(
        res_ref[...], None,                       # vision tower: no attention mask
        ln1w_ref[0], ln1b_ref[0], wqkv_ref[0], bqkv_ref[0], wo_ref[0], bo_ref[0],
        ln2w_ref[0], ln2b_ref[0], w1_ref[0], b1_ref[0], w2_ref[0], b2_ref[0],
        num_heads=num_heads, head_dim=head_dim)
    res_ref[...] = x

    @pl.when(l == pl.num_programs(1) - 1)
    def _():
        # class-token pooling + post-LN + visual projection + L2 normalize, fused.
        pooled = _layer_norm(x[0:1, :], postw_ref[...], postb_ref[...])   # (1, D)
        y = jnp.dot(pooled.astype(jnp.bfloat16), wproj_ref[...],
                    preferred_element_type=jnp.float32)
        iemb_ref[...] = _l2_normalize(y)[None]                            # (1,1,P)


# --------------------------------- pallas_call wrappers ---------------------------------
def _bcast_spec(shape):
    zeros = (0,) * len(shape)
    return pl.BlockSpec(tuple(shape), lambda b, l: zeros)


def _batch_spec(shape):
    block = (1,) + tuple(shape[1:])
    tail = (0,) * (len(shape) - 1)
    return pl.BlockSpec(block, lambda b, l: (b,) + tail)


def _layer_spec(arr):
    block = (1,) + tuple(arr.shape[1:])
    tail = (0,) * (arr.ndim - 1)
    return pl.BlockSpec(block, lambda b, l: (l,) + tail)


def _tower_cost(bsz, s, d, mlp, n_layers, n_heads):
    per_layer = (2 * s * d * 3 * d          # fused QKV
                 + 4 * s * s * d            # scores + ctx
                 + 2 * s * d * d            # output projection
                 + 4 * s * d * mlp)         # MLP
    weight_bytes = n_layers * 2 * (3 * d * d + d * d + 2 * d * mlp)   # bf16 weights
    return pl.CostEstimate(
        flops=bsz * n_layers * per_layer,
        transcendentals=bsz * n_layers * (n_heads * s * s + s * mlp),
        bytes_accessed=bsz * weight_bytes + 4 * bsz * s * d)


_COMPILER_PARAMS = pltpu.CompilerParams(
    # batch axis may be sharded across v7x's two TensorCores; layer axis is the
    # sequential residual-carry axis.
    dimension_semantics=("parallel", "arbitrary"),
    vmem_limit_bytes=32 * 1024 * 1024,   # explicit budget (v5e default is only 16 MiB)
)


def pallas_text_tower(tok, pos, pad_bias, eos_sel, stacks, fln_w, fln_b, wproj):
    bsz, s, d = tok.shape
    n_layers = stacks['ln1_w'].shape[0]
    proj = wproj.shape[1]
    in_arrays = ([tok, pos, pad_bias, eos_sel] + [stacks[k] for k in LAYER_KEYS]
                 + [fln_w, fln_b, wproj])
    in_specs = ([_batch_spec(tok.shape), _bcast_spec(pos.shape),
                 _batch_spec(pad_bias.shape), _batch_spec(eos_sel.shape)]
                + [_layer_spec(stacks[k]) for k in LAYER_KEYS]
                + [_bcast_spec(fln_w.shape), _bcast_spec(fln_b.shape),
                   _bcast_spec(wproj.shape)])
    kern = functools.partial(text_stack_kernel, num_heads=NUM_HEADS, head_dim=HEAD_DIM)
    return pl.pallas_call(
        kern,
        out_shape=jax.ShapeDtypeStruct((bsz, 1, proj), jnp.float32),
        grid_spec=pltpu.PrefetchScalarGridSpec(
            num_scalar_prefetch=0, grid=(bsz, n_layers),
            in_specs=in_specs,
            out_specs=pl.BlockSpec((1, 1, proj), lambda b, l: (b, 0, 0)),
            scratch_shapes=[pltpu.VMEM((s, d), jnp.float32)]),   # resident residual
        compiler_params=_COMPILER_PARAMS,
        cost_estimate=_tower_cost(bsz, s, d, MLP_DIM, n_layers, NUM_HEADS),
    )(*in_arrays)


def pallas_vision_tower(patches, wpe, pos_cls, pre_ln_w, pre_ln_b, stacks,
                        post_ln_w, post_ln_b, wproj):
    bsz, s, _ = patches.shape
    d = pos_cls.shape[-1]
    n_layers = stacks['ln1_w'].shape[0]
    proj = wproj.shape[1]
    in_arrays = ([patches, wpe, pos_cls, pre_ln_w, pre_ln_b]
                 + [stacks[k] for k in LAYER_KEYS]
                 + [post_ln_w, post_ln_b, wproj])
    in_specs = ([_batch_spec(patches.shape), _bcast_spec(wpe.shape),
                 _bcast_spec(pos_cls.shape), _bcast_spec(pre_ln_w.shape),
                 _bcast_spec(pre_ln_b.shape)]
                + [_layer_spec(stacks[k]) for k in LAYER_KEYS]
                + [_bcast_spec(post_ln_w.shape), _bcast_spec(post_ln_b.shape),
                   _bcast_spec(wproj.shape)])
    kern = functools.partial(vision_stack_kernel, num_heads=NUM_HEADS, head_dim=HEAD_DIM)
    return pl.pallas_call(
        kern,
        out_shape=jax.ShapeDtypeStruct((bsz, 1, proj), jnp.float32),
        grid_spec=pltpu.PrefetchScalarGridSpec(
            num_scalar_prefetch=0, grid=(bsz, n_layers),
            in_specs=in_specs,
            out_specs=pl.BlockSpec((1, 1, proj), lambda b, l: (b, 0, 0)),
            scratch_shapes=[pltpu.VMEM((s, d), jnp.float32)]),
        compiler_params=_COMPILER_PARAMS,
        cost_estimate=_tower_cost(bsz, s, d, MLP_DIM, n_layers, NUM_HEADS),
    )(*in_arrays)


# -------------------------------- parameter construction --------------------------------
def init_params(key):
    kit = iter(jax.random.split(key, 256))

    def nrm(shape, scale=0.02):
        return scale * jax.random.normal(next(kit), shape, dtype=jnp.float32)

    def make_layer(d, mlp):
        return dict(
            ln1_w=jnp.ones((1, d), jnp.float32), ln1_b=jnp.zeros((1, d), jnp.float32),
            q_w=nrm((d, d)), q_b=nrm((1, d), 0.01),
            k_w=nrm((d, d)), k_b=nrm((1, d), 0.01),
            v_w=nrm((d, d)), v_b=nrm((1, d), 0.01),
            o_w=nrm((d, d)), o_b=nrm((1, d), 0.01),
            ln2_w=jnp.ones((1, d), jnp.float32), ln2_b=jnp.zeros((1, d), jnp.float32),
            fc1_w=nrm((mlp, d)), fc1_b=nrm((1, mlp), 0.01),
            fc2_w=nrm((d, mlp)), fc2_b=nrm((1, d), 0.01),
        )

    return dict(
        text=dict(
            token_embedding=nrm((VOCAB, HIDDEN)),
            pos_embedding=nrm((TEXT_SEQ, HIDDEN)),
            layers=[make_layer(HIDDEN, MLP_DIM) for _ in range(NUM_LAYERS)],
            final_ln_w=jnp.ones((1, HIDDEN), jnp.float32),
            final_ln_b=jnp.zeros((1, HIDDEN), jnp.float32),
        ),
        vision=dict(
            patch_embed=nrm((HIDDEN, CHANNELS, PATCH, PATCH)),   # conv, no bias
            class_embedding=nrm((1, HIDDEN)),
            pos_embedding=nrm((VIS_SEQ, HIDDEN)),
            pre_ln_w=jnp.ones((1, HIDDEN), jnp.float32),
            pre_ln_b=jnp.zeros((1, HIDDEN), jnp.float32),
            layers=[make_layer(HIDDEN, MLP_DIM) for _ in range(NUM_LAYERS)],
            post_ln_w=jnp.ones((1, HIDDEN), jnp.float32),
            post_ln_b=jnp.zeros((1, HIDDEN), jnp.float32),
        ),
        text_projection=nrm((PROJ_DIM, HIDDEN)),    # Linear, bias=False (torch layout)
        visual_projection=nrm((PROJ_DIM, HIDDEN)),
    )


def prepare_params(params):
    """Convert torch-layout params into kernel layout ONCE: fused-QKV (q-scale folded
    in), full (D,D) output projection, transposed bf16 Linear weights, stacked over
    layers for the per-layer BlockSpec DMA pipeline."""
    scale = HEAD_DIM ** -0.5

    def stack(layers):
        def cat(fn, dtype=None):
            a = jnp.stack([fn(lp) for lp in layers], axis=0)
            return a.astype(dtype) if dtype is not None else a
        return dict(
            ln1_w=cat(lambda lp: lp['ln1_w']), ln1_b=cat(lambda lp: lp['ln1_b']),
            wqkv=cat(lambda lp: jnp.concatenate(
                [lp['q_w'].T * scale, lp['k_w'].T, lp['v_w'].T], axis=1), jnp.bfloat16),
            bqkv=cat(lambda lp: jnp.concatenate(
                [lp['q_b'] * scale, lp['k_b'], lp['v_b']], axis=1)),
            wo=cat(lambda lp: lp['o_w'].T, jnp.bfloat16),           # full (D, D)
            bo=cat(lambda lp: lp['o_b']),
            ln2_w=cat(lambda lp: lp['ln2_w']), ln2_b=cat(lambda lp: lp['ln2_b']),
            w1=cat(lambda lp: lp['fc1_w'].T, jnp.bfloat16),
            b1=cat(lambda lp: lp['fc1_b']),
            w2=cat(lambda lp: lp['fc2_w'].T, jnp.bfloat16),
            b2=cat(lambda lp: lp['fc2_b']),
        )

    t, v = params['text'], params['vision']
    return dict(
        text=dict(
            token_embedding=t['token_embedding'],
            pos_embedding=t['pos_embedding'],
            stacks=stack(t['layers']),
            final_ln_w=t['final_ln_w'], final_ln_b=t['final_ln_b'],
        ),
        vision=dict(
            wpe=v['patch_embed'].reshape(HIDDEN, PATCH_DIM).T.astype(jnp.bfloat16),
            # class token folded into positional row 0 (patch row 0 is zero-padded)
            pos_cls=v['pos_embedding'].at[0].add(v['class_embedding'][0]),
            pre_ln_w=v['pre_ln_w'], pre_ln_b=v['pre_ln_b'],
            stacks=stack(v['layers']),
            post_ln_w=v['post_ln_w'], post_ln_b=v['post_ln_b'],
        ),
        text_proj_t=params['text_projection'].T.astype(jnp.bfloat16),
        visual_proj_t=params['visual_projection'].T.astype(jnp.bfloat16),
    )


# --------------------------------------- forward ----------------------------------------
@jax.jit
def clip_forward(prep, input_ids, attention_mask, pixel_values):
    bsz = input_ids.shape[0]

    # ----- text tower -----
    text = prep['text']
    tok = jnp.take(text['token_embedding'], input_ids, axis=0)          # gather (glue)
    pad_bias = jnp.where(attention_mask > 0, 0.0, NEG_INF).astype(jnp.float32)[:, None, :]
    eos_idx = jnp.argmax(input_ids, axis=-1)
    # TODO(synk): argmax-as-EOS only matches HF when EOS has the largest token id.
    eos_sel = jax.nn.one_hot(eos_idx, input_ids.shape[1], dtype=jnp.float32)[:, :, None]

    text_embeds = pallas_text_tower(
        tok, text['pos_embedding'], pad_bias, eos_sel, text['stacks'],
        text['final_ln_w'], text['final_ln_b'], prep['text_proj_t'])     # (B, 1, P)

    # ----- vision tower -----
    vis = prep['vision']
    b, c, hh, ww = pixel_values.shape
    hp, wp = hh // PATCH, ww // PATCH
    patches = pixel_values.reshape(b, c, hp, PATCH, wp, PATCH)
    patches = patches.transpose(0, 2, 4, 1, 3, 5).reshape(b, hp * wp, c * PATCH * PATCH)
    patches = jnp.pad(patches, ((0, 0), (1, 0), (0, 0)))                 # row 0 = class slot

    image_embeds = pallas_vision_tower(
        patches, vis['wpe'], vis['pos_cls'], vis['pre_ln_w'], vis['pre_ln_b'],
        vis['stacks'], vis['post_ln_w'], vis['post_ln_b'], prep['visual_proj_t'])

    return text_embeds.reshape(bsz, -1), image_embeds.reshape(b, -1)


# ----------------------------------------- main ------------------------------------------
if __name__ == "__main__":
    key = jax.random.PRNGKey(0)
    pk, ik, xk = jax.random.split(key, 3)

    params = init_params(pk)
    prep = prepare_params(params)          # kernel-layout weights, computed once

    input_ids = jax.random.randint(ik, (BATCH, TEXT_SEQ), 1, VOCAB - 1, dtype=jnp.int32)
    # place "EOS" (highest id) at the last non-padded position of each sequence
    input_ids = input_ids.at[0, TEXT_SEQ - 1].set(VOCAB - 1)
    input_ids = input_ids.at[1, TEXT_SEQ - 3].set(VOCAB - 1)
    attention_mask = jnp.ones((BATCH, TEXT_SEQ), jnp.int32)
    attention_mask = attention_mask.at[1, TEXT_SEQ - 2:].set(0)
    pixel_values = jax.random.normal(xk, (BATCH, CHANNELS, IMG, IMG), jnp.float32)

    text_embeds, image_embeds = clip_forward(prep, input_ids, attention_mask,
                                             pixel_values)
    jax.block_until_ready((text_embeds, image_embeds))
    assert text_embeds.shape == (BATCH, PROJ_DIM)
    assert image_embeds.shape == (BATCH, PROJ_DIM)
    print("KERNEL_OK")
</pallas_src>

<mosaic_0001>
module attributes {stable_mosaic.version = 11 : i64} {
  func.func @vision_stack_kernel(%arg0: i32, %arg1: i32, %arg2: memref<1x5x192xf32, #tpu.memory_space<vmem>>, %arg3: memref<192x32xbf16, #tpu.memory_space<vmem>>, %arg4: memref<5x32xf32, #tpu.memory_space<vmem>>, %arg5: memref<1x32xf32, #tpu.memory_space<vmem>>, %arg6: memref<1x32xf32, #tpu.memory_space<vmem>>, %arg7: memref<1x1x32xf32, #tpu.memory_space<vmem>>, %arg8: memref<1x1x32xf32, #tpu.memory_space<vmem>>, %arg9: memref<1x32x96xbf16, #tpu.memory_space<vmem>>, %arg10: memref<1x1x96xf32, #tpu.memory_space<vmem>>, %arg11: memref<1x32x32xbf16, #tpu.memory_space<vmem>>, %arg12: memref<1x1x32xf32, #tpu.memory_space<vmem>>, %arg13: memref<1x1x32xf32, #tpu.memory_space<vmem>>, %arg14: memref<1x1x32xf32, #tpu.memory_space<vmem>>, %arg15: memref<1x32x128xbf16, #tpu.memory_space<vmem>>, %arg16: memref<1x1x128xf32, #tpu.memory_space<vmem>>, %arg17: memref<1x128x32xbf16, #tpu.memory_space<vmem>>, %arg18: memref<1x1x32xf32, #tpu.memory_space<vmem>>, %arg19: memref<1x32xf32, #tpu.memory_space<vmem>>, %arg20: memref<1x32xf32, #tpu.memory_space<vmem>>, %arg21: memref<32x16xbf16, #tpu.memory_space<vmem>>, %arg22: memref<1x1x16xf32, #tpu.memory_space<vmem>>, %arg23: memref<5x32xf32, #tpu.memory_space<vmem>>) attributes {dimension_semantics = [#tpu.dimension_semantics<parallel>, #tpu.dimension_semantics<arbitrary>], iteration_bounds = array<i64: 2, 2>, scalar_prefetch = 0 : i64, scratch_operands = 1 : i64, tpu.core_type = #tpu.core_type<tc>, window_params = [{transform_indices = @transform_0, window_bounds = array<i64: 1, 5, 192>}, {pipeline_mode = #tpu.pipeline_mode<synchronous>, transform_indices = @transform_1, window_bounds = array<i64: 192, 32>}, {pipeline_mode = #tpu.pipeline_mode<synchronous>, transform_indices = @transform_2, window_bounds = array<i64: 5, 32>}, {pipeline_mode = #tpu.pipeline_mode<synchronous>, transform_indices = @transform_3, window_bounds = array<i64: 1, 32>}, {pipeline_mode = #tpu.pipeline_mode<synchronous>, transform_indices = @transform_4, window_bounds = array<i64: 1, 32>}, {transform_indices = @transform_5, window_bounds = array<i64: 1, 1, 32>}, {transform_indices = @transform_6, window_bounds = array<i64: 1, 1, 32>}, {transform_indices = @transform_7, window_bounds = array<i64: 1, 32, 96>}, {transform_indices = @transform_8, window_bounds = array<i64: 1, 1, 96>}, {transform_indices = @transform_9, window_bounds = array<i64: 1, 32, 32>}, {transform_indices = @transform_10, window_bounds = array<i64: 1, 1, 32>}, {transform_indices = @transform_11, window_bounds = array<i64: 1, 1, 32>}, {transform_indices = @transform_12, window_bounds = array<i64: 1, 1, 32>}, {transform_indices = @transform_13, window_bounds = array<i64: 1, 32, 128>}, {transform_indices = @transform_14, window_bounds = array<i64: 1, 1, 128>}, {transform_indices = @transform_15, window_bounds = array<i64: 1, 128, 32>}, {transform_indices = @transform_16, window_bounds = array<i64: 1, 1, 32>}, {pipeline_mode = #tpu.pipeline_mode<synchronous>, transform_indices = @transform_17, window_bounds = array<i64: 1, 32>}, {pipeline_mode = #tpu.pipeline_mode<synchronous>, transform_indices = @transform_18, window_bounds = array<i64: 1, 32>}, {pipeline_mode = #tpu.pipeline_mode<synchronous>, transform_indices = @transform_19, window_bounds = array<i64: 32, 16>}, {transform_indices = @transform_20, window_bounds = array<i64: 1, 1, 16>}]} {
    %c0_i32 = arith.constant 0 : i32
    %0 = arith.cmpi eq, %arg1, %c0_i32 : i32
    %1 = arith.extui %0 : i1 to i32
    %c0_i32_0 = arith.constant 0 : i32
    %2 = arith.cmpi ne, %1, %c0_i32_0 : i32
    scf.if %2 {
      %c0_60 = arith.constant 0 : index
      %c0_61 = arith.constant 0 : index
      %c0_62 = arith.constant 0 : index
      %126 = vector.load %arg2[%c0_60, %c0_61, %c0_62] : memref<1x5x192xf32, #tpu.memory_space<vmem>>, vector<1x5x192xf32>
      %127 = vector.shape_cast %126 : vector<1x5x192xf32> to vector<5x192xf32>
      %128 = arith.truncf %127 : vector<5x192xf32> to vector<5x192xbf16>
      %c0_63 = arith.constant 0 : index
      %c0_64 = arith.constant 0 : index
      %129 = vector.load %arg3[%c0_63, %c0_64] : memref<192x32xbf16, #tpu.memory_space<vmem>>, vector<192x32xbf16>
      %cst_65 = arith.constant dense<0.000000e+00> : vector<5x32xf32>
      %130 = tpu.matmul %128, %129, %cst_65 {dimension_numbers = #tpu.dot_dimension_numbers<[1], [0], [0], [1], [0, 0, 1, 1], [], []>} : vector<5x192xbf16>, vector<192x32xbf16>, vector<5x32xf32> -> vector<5x32xf32>
      %c0_66 = arith.constant 0 : index
      %c0_67 = arith.constant 0 : index
      %131 = vector.load %arg4[%c0_66, %c0_67] : memref<5x32xf32, #tpu.memory_space<vmem>>, vector<5x32xf32>
      %132 = arith.addf %130, %131 : vector<5x32xf32>
      %c0_68 = arith.constant 0 : index
      %c0_69 = arith.constant 0 : index
      %133 = vector.load %arg5[%c0_68, %c0_69] : memref<1x32xf32, #tpu.memory_space<vmem>>, vector<1x32xf32>
      %c0_70 = arith.constant 0 : index
      %c0_71 = arith.constant 0 : index
      %134 = vector.load %arg6[%c0_70, %c0_71] : memref<1x32xf32, #tpu.memory_space<vmem>>, vector<1x32xf32>
      %cst_72 = arith.constant dense<0.000000e+00> : vector<5xf32>
      %135 = vector.multi_reduction <add>, %132, %cst_72 [1] : vector<5x32xf32> to vector<5xf32>
      %136 = vector.shape_cast %135 : vector<5xf32> to vector<5x1xf32>
      %cst_73 = arith.constant 3.200000e+01 : f32
      %137 = vector.broadcast %cst_73 : f32 to vector<5x1xf32>
      %138 = arith.divf %136, %137 : vector<5x1xf32>
      %139 = vector.broadcast %138 : vector<5x1xf32> to vector<5x32xf32>
      %140 = arith.subf %132, %139 : vector<5x32xf32>
      %141 = arith.mulf %140, %140 : vector<5x32xf32>
      %cst_74 = arith.constant dense<0.000000e+00> : vector<5xf32>
      %142 = vector.multi_reduction <add>, %141, %cst_74 [1] : vector<5x32xf32> to vector<5xf32>
      %143 = vector.shape_cast %142 : vector<5xf32> to vector<5x1xf32>
      %cst_75 = arith.constant 3.200000e+01 : f32
      %144 = vector.broadcast %cst_75 : f32 to vector<5x1xf32>
      %145 = arith.divf %143, %144 : vector<5x1xf32>
      %146 = vector.broadcast %138 : vector<5x1xf32> to vector<5x32xf32>
      %147 = arith.subf %132, %146 : vector<5x32xf32>
      %cst_76 = arith.constant 9.99999974E-6 : f32
      %148 = vector.broadcast %cst_76 : f32 to vector<5x1xf32>
      %149 = arith.addf %145, %148 : vector<5x1xf32>
      %150 = math.rsqrt %149 : vector<5x1xf32>
      %151 = vector.broadcast %150 : vector<5x1xf32> to vector<5x32xf32>
      %152 = arith.mulf %147, %151 : vector<5x32xf32>
      %153 = vector.broadcast %133 : vector<1x32xf32> to vector<5x32xf32>
      %154 = arith.mulf %152, %153 : vector<5x32xf32>
      %155 = vector.broadcast %134 : vector<1x32xf32> to vector<5x32xf32>
      %156 = arith.addf %154, %155 : vector<5x32xf32>
      %c0_77 = arith.constant 0 : index
      %c0_78 = arith.constant 0 : index
      %157 = vector.load %arg23[%c0_77, %c0_78] : memref<5x32xf32, #tpu.memory_space<vmem>>, vector<5x32xf32>
      tpu.vector_store %arg23[%c0_77, %c0_78], %156 {strides = array<i32>} : memref<5x32xf32, #tpu.memory_space<vmem>>, vector<5x32xf32>,
    } else {
    }
    %c0 = arith.constant 0 : index
    %c0_1 = arith.constant 0 : index
    %3 = vector.load %arg23[%c0, %c0_1] : memref<5x32xf32, #tpu.memory_space<vmem>>, vector<5x32xf32>
    %c0_2 = arith.constant 0 : index
    %c0_3 = arith.constant 0 : index
    %c0_4 = arith.constant 0 : index
    %4 = vector.load %arg7[%c0_2, %c0_3, %c0_4] : memref<1x1x32xf32, #tpu.memory_space<vmem>>, vector<1x1x32xf32>
    %5 = vector.shape_cast %4 : vector<1x1x32xf32> to vector<1x32xf32>
    %c0_5 = arith.constant 0 : index
    %c0_6 = arith.constant 0 : index
    %c0_7 = arith.constant 0 : index
    %6 = vector.load %arg8[%c0_5, %c0_6, %c0_7] : memref<1x1x32xf32, #tpu.memory_space<vmem>>, vector<1x1x32xf32>
    %7 = vector.shape_cast %6 : vector<1x1x32xf32> to vector<1x32xf32>
    %c0_8 = arith.constant 0 : index
    %c0_9 = arith.constant 0 : index
    %c0_10 = arith.constant 0 : index
    %8 = vector.load %arg9[%c0_8, %c0_9, %c0_10] : memref<1x32x96xbf16, #tpu.memory_space<vmem>>, vector<1x32x96xbf16>
    %9 = vector.shape_cast %8 : vector<1x32x96xbf16> to vector<32x96xbf16>
    %c0_11 = arith.constant 0 : index
    %c0_12 = arith.constant 0 : index
    %c0_13 = arith.constant 0 : index
    %10 = vector.load %arg10[%c0_11, %c0_12, %c0_13] : memref<1x1x96xf32, #tpu.memory_space<vmem>>, vector<1x1x96xf32>
    %11 = vector.shape_cast %10 : vector<1x1x96xf32> to vector<1x96xf32>
    %c0_14 = arith.constant 0 : index
    %c0_15 = arith.constant 0 : index
    %c0_16 = arith.constant 0 : index
    %12 = vector.load %arg11[%c0_14, %c0_15, %c0_16] : memref<1x32x32xbf16, #tpu.memory_space<vmem>>, vector<1x32x32xbf16>
    %13 = vector.shape_cast %12 : vector<1x32x32xbf16> to vector<32x32xbf16>
    %c0_17 = arith.constant 0 : index
    %c0_18 = arith.constant 0 : index
    %c0_19 = arith.constant 0 : index
    %14 = vector.load %arg12[%c0_17, %c0_18, %c0_19] : memref<1x1x32xf32, #tpu.memory_space<vmem>>, vector<1x1x32xf32>
    %15 = vector.shape_cast %14 : vector<1x1x32xf32> to vector<1x32xf32>
    %c0_20 = arith.constant 0 : index
    %c0_21 = arith.constant 0 : index
    %c0_22 = arith.constant 0 : index
    %16 = vector.load %arg13[%c0_20, %c0_21, %c0_22] : memref<1x1x32xf32, #tpu.memory_space<vmem>>, vector<1x1x32xf32>
    %17 = vector.shape_cast %16 : vector<1x1x32xf32> to vector<1x32xf32>
    %c0_23 = arith.constant 0 : index
    %c0_24 = arith.constant 0 : index
    %c0_25 = arith.constant 0 : index
    %18 = vector.load %arg14[%c0_23, %c0_24, %c0_25] : memref<1x1x32xf32, #tpu.memory_space<vmem>>, vector<1x1x32xf32>
    %19 = vector.shape_cast %18 : vector<1x1x32xf32> to vector<1x32xf32>
    %c0_26 = arith.constant 0 : index
    %c0_27 = arith.constant 0 : index
    %c0_28 = arith.constant 0 : index
    %20 = vector.load %arg15[%c0_26, %c0_27, %c0_28] : memref<1x32x128xbf16, #tpu.memory_space<vmem>>, vector<1x32x128xbf16>
    %21 = vector.shape_cast %20 : vector<1x32x128xbf16> to vector<32x128xbf16>
    %c0_29 = arith.constant 0 : index
    %c0_30 = arith.constant 0 : index
    %c0_31 = arith.constant 0 : index
    %22 = vector.load %arg16[%c0_29, %c0_30, %c0_31] : memref<1x1x128xf32, #tpu.memory_space<vmem>>, vector<1x1x128xf32>
    %23 = vector.shape_cast %22 : vector<1x1x128xf32> to vector<1x128xf32>
    %c0_32 = arith.constant 0 : index
    %c0_33 = arith.constant 0 : index
    %c0_34 = arith.constant 0 : index
    %24 = vector.load %arg17[%c0_32, %c0_33, %c0_34] : memref<1x128x32xbf16, #tpu.memory_space<vmem>>, vector<1x128x32xbf16>
    %25 = vector.shape_cast %24 : vector<1x128x32xbf16> to vector<128x32xbf16>
    %c0_35 = arith.constant 0 : index
    %c0_36 = arith.constant 0 : index
    %c0_37 = arith.constant 0 : index
    %26 = vector.load %arg18[%c0_35, %c0_36, %c0_37] : memref<1x1x32xf32, #tpu.memory_space<vmem>>, vector<1x1x32xf32>
    %27 = vector.shape_cast %26 : vector<1x1x32xf32> to vector<1x32xf32>
    %cst = arith.constant dense<0.000000e+00> : vector<5xf32>
    %28 = vector.multi_reduction <add>, %3, %cst [1] : vector<5x32xf32> to vector<5xf32>
    %29 = vector.shape_cast %28 : vector<5xf32> to vector<5x1xf32>
    %cst_38 = arith.constant 3.200000e+01 : f32
    %30 = vector.broadcast %cst_38 : f32 to vector<5x1xf32>
    %31 = arith.divf %29, %30 : vector<5x1xf32>
    %32 = vector.broadcast %31 : vector<5x1xf32> to vector<5x32xf32>
    %33 = arith.subf %3, %32 : vector<5x32xf32>
    %34 = arith.mulf %33, %33 : vector<5x32xf32>
    %cst_39 = arith.constant dense<0.000000e+00> : vector<5xf32>
    %35 = vector.multi_reduction <add>, %34, %cst_39 [1] : vector<5x32xf32> to vector<5xf32>
    %36 = vector.shape_cast %35 : vector<5xf32> to vector<5x1xf32>
    %cst_40 = arith.constant 3.200000e+01 : f32
    %37 = vector.broadcast %cst_40 : f32 to vector<5x1xf32>
    %38 = arith.divf %36, %37 : vector<5x1xf32>
    %39 = vector.broadcast %31 : vector<5x1xf32> to vector<5x32xf32>
    %40 = arith.subf %3, %39 : vector<5x32xf32>
    %cst_41 = arith.constant 9.99999974E-6 : f32
    %41 = vector.broadcast %cst_41 : f32 to vector<5x1xf32>
    %42 = arith.addf %38, %41 : vector<5x1xf32>
    %43 = math.rsqrt %42 : vector<5x1xf32>
    %44 = vector.broadcast %43 : vector<5x1xf32> to vector<5x32xf32>
    %45 = arith.mulf %40, %44 : vector<5x32xf32>
    %46 = vector.broadcast %5 : vector<1x32xf32> to vector<5x32xf32>
    %47 = arith.mulf %45, %46 : vector<5x32xf32>
    %48 = vector.broadcast %7 : vector<1x32xf32> to vector<5x32xf32>
    %49 = arith.addf %47, %48 : vector<5x32xf32>
    %50 = arith.truncf %49 : vector<5x32xf32> to vector<5x32xbf16>
    %cst_42 = arith.constant dense<0.000000e+00> : vector<5x96xf32>
    %51 = tpu.matmul %50, %9, %cst_42 {dimension_numbers = #tpu.dot_dimension_numbers<[1], [0], [0], [1], [0, 0, 1, 1], [], []>} : vector<5x32xbf16>, vector<32x96xbf16>, vector<5x96xf32> -> vector<5x96xf32>
    %52 = vector.broadcast %11 : vector<1x96xf32> to vector<5x96xf32>
    %53 = arith.addf %51, %52 : vector<5x96xf32>
    %54 = vector.extract_strided_slice %53 {offsets = [0, 0], sizes = [5, 32], strides = [1, 1]} : vector<5x96xf32> to vector<5x32xf32>
    %55 = arith.truncf %54 : vector<5x32xf32> to vector<5x32xbf16>
    %56 = vector.shape_cast %55 : vector<5x32xbf16> to vector<5x2x16xbf16>
    %57 = vector.extract_strided_slice %53 {offsets = [0, 32], sizes = [5, 32], strides = [1, 1]} : vector<5x96xf32> to vector<5x32xf32>
    %58 = arith.truncf %57 : vector<5x32xf32> to vector<5x32xbf16>
    %59 = vector.shape_cast %58 : vector<5x32xbf16> to vector<5x2x16xbf16>
    %60 = vector.extract_strided_slice %53 {offsets = [0, 64], sizes = [5, 32], strides = [1, 1]} : vector<5x96xf32> to vector<5x32xf32>
    %61 = arith.truncf %60 : vector<5x32xf32> to vector<5x32xbf16>
    %62 = vector.shape_cast %61 : vector<5x32xbf16> to vector<5x2x16xbf16>
    "tpu.trace_start"() <{level = 10 : i32, message = "qhd,khd->hqk"}> : () -> ()
    %cst_43 = arith.constant dense<0.000000e+00> : vector<2x5x5xf32>
    %63 = tpu.matmul %56, %59, %cst_43 {dimension_numbers = #tpu.dot_dimension_numbers<[2], [2], [0], [0], [0, 1, 0, 0, 1, 0], [1], [1]>} : vector<5x2x16xbf16>, vector<5x2x16xbf16>, vector<2x5x5xf32> -> vector<2x5x5xf32>
    "tpu.trace_stop"() : () -> ()
    %cst_44 = arith.constant dense<0xFF800000> : vector<2x5xf32>
    %64 = vector.multi_reduction <maximumf>, %63, %cst_44 [2] : vector<2x5x5xf32> to vector<2x5xf32>
    %65 = vector.shape_cast %64 : vector<2x5xf32> to vector<2x5x1xf32>
    %66 = vector.broadcast %65 : vector<2x5x1xf32> to vector<2x5x5xf32>
    %67 = arith.subf %63, %66 : vector<2x5x5xf32>
    %68 = math.exp %67 : vector<2x5x5xf32>
    %cst_45 = arith.constant dense<0.000000e+00> : vector<2x5xf32>
    %69 = vector.multi_reduction <add>, %68, %cst_45 [2] : vector<2x5x5xf32> to vector<2x5xf32>
    %70 = vector.shape_cast %69 : vector<2x5xf32> to vector<2x5x1xf32>
    %71 = tpu.reciprocal %70 {approx = true} : vector<2x5x1xf32> -> vector<2x5x1xf32>
    %72 = vector.broadcast %71 : vector<2x5x1xf32> to vector<2x5x5xf32>
    %73 = arith.mulf %68, %72 : vector<2x5x5xf32>
    %74 = arith.truncf %73 : vector<2x5x5xf32> to vector<2x5x5xbf16>
    "tpu.trace_start"() <{level = 10 : i32, message = "hqk,khd->qhd"}> : () -> ()
    %cst_46 = arith.constant dense<0.000000e+00> : vector<2x16x5xf32>
    %75 = tpu.matmul %62, %74, %cst_46 {dimension_numbers = #tpu.dot_dimension_numbers<[0], [2], [2], [1], [0, 1, 0, 2, 1, 1], [1], [0]>} : vector<5x2x16xbf16>, vector<2x5x5xbf16>, vector<2x16x5xf32> -> vector<2x16x5xf32>
    %76 = tpu.transpose %75, [2, 0, 1] : vector<2x16x5xf32> -> vector<5x2x16xf32>
    "tpu.trace_stop"() : () -> ()
    %77 = vector.shape_cast %76 : vector<5x2x16xf32> to vector<5x32xf32>
    %78 = arith.truncf %77 : vector<5x32xf32> to vector<5x32xbf16>
    %cst_47 = arith.constant dense<0.000000e+00> : vector<5x32xf32>
    %79 = tpu.matmul %78, %13, %cst_47 {dimension_numbers = #tpu.dot_dimension_numbers<[1], [0], [0], [1], [0, 0, 1, 1], [], []>} : vector<5x32xbf16>, vector<32x32xbf16>, vector<5x32xf32> -> vector<5x32xf32>
    %80 = vector.broadcast %15 : vector<1x32xf32> to vector<5x32xf32>
    %81 = arith.addf %79, %80 : vector<5x32xf32>
    %82 = arith.addf %3, %81 : vector<5x32xf32>
    %cst_48 = arith.constant dense<0.000000e+00> : vector<5xf32>
    %83 = vector.multi_reduction <add>, %82, %cst_48 [1] : vector<5x32xf32> to vector<5xf32>
    %84 = vector.shape_cast %83 : vector<5xf32> to vector<5x1xf32>
    %cst_49 = arith.constant 3.200000e+01 : f32
    %85 = vector.broadcast %cst_49 : f32 to vector<5x1xf32>
    %86 = arith.divf %84, %85 : vector<5x1xf32>
    %87 = vector.broadcast %86 : vector<5x1xf32> to vector<5x32xf32>
    %88 = arith.subf %82, %87 : vector<5x32xf32>
    %89 = arith.mulf %88, %88 : vector<5x32xf32>
    %cst_50 = arith.constant dense<0.000000e+00> : vector<5xf32>
    %90 = vector.multi_reduction <add>, %89, %cst_50 [1] : vector<5x32xf32> to vector<5xf32>
    %91 = vector.shape_cast %90 : vector<5xf32> to vector<5x1xf32>
    %cst_51 = arith.constant 3.200000e+01 : f32
    %92 = vector.broadcast %cst_51 : f32 to vector<5x1xf32>
    %93 = arith.divf %91, %92 : vector<5x1xf32>
    %94 = vector.broadcast %86 : vector<5x1xf32> to vector<5x32xf32>
    %95 = arith.subf %82, %94 : vector<5x32xf32>
    %cst_52 = arith.constant 9.99999974E-6 : f32
    %96 = vector.broadcast %cst_52 : f32 to vector<5x1xf32>
    %97 = arith.addf %93, %96 : vector<5x1xf32>
    %98 = math.rsqrt %97 : vector<5x1xf32>
    %99 = vector.broadcast %98 : vector<5x1xf32> to vector<5x32xf32>
    %100 = arith.mulf %95, %99 : vector<5x32xf32>
    %101 = vector.broadcast %17 : vector<1x32xf32> to vector<5x32xf32>
    %102 = arith.mulf %100, %101 : vector<5x32xf32>
    %103 = vector.broadcast %19 : vector<1x32xf32> to vector<5x32xf32>
    %104 = arith.addf %102, %103 : vector<5x32xf32>
    %105 = arith.truncf %104 : vector<5x32xf32> to vector<5x32xbf16>
    %cst_53 = arith.constant dense<0.000000e+00> : vector<5x128xf32>
    %106 = tpu.matmul %105, %21, %cst_53 {dimension_numbers = #tpu.dot_dimension_numbers<[1], [0], [0], [1], [0, 0, 1, 1], [], []>} : vector<5x32xbf16>, vector<32x128xbf16>, vector<5x128xf32> -> vector<5x128xf32>
    %107 = vector.broadcast %23 : vector<1x128xf32> to vector<5x128xf32>
    %108 = arith.addf %106, %107 : vector<5x128xf32>
    %cst_54 = arith.constant 1.702000e+00 : f32
    %109 = vector.broadcast %cst_54 : f32 to vector<5x128xf32>
    %110 = arith.mulf %109, %108 : vector<5x128xf32>
    %111 = arith.negf %110 : vector<5x128xf32>
    %112 = math.exp %111 : vector<5x128xf32>
    %cst_55 = arith.constant 1.000000e+00 : f32
    %113 = vector.broadcast %cst_55 : f32 to vector<5x128xf32>
    %114 = arith.addf %113, %112 : vector<5x128xf32>
    %115 = arith.divf %113, %114 : vector<5x128xf32>
    %116 = arith.mulf %108, %115 : vector<5x128xf32>
    %117 = arith.truncf %116 : vector<5x128xf32> to vector<5x128xbf16>
    %cst_56 = arith.constant dense<0.000000e+00> : vector<5x32xf32>
    %118 = tpu.matmul %117, %25, %cst_56 {dimension_numbers = #tpu.dot_dimension_numbers<[1], [0], [0], [1], [0, 0, 1, 1], [], []>} : vector<5x128xbf16>, vector<128x32xbf16>, vector<5x32xf32> -> vector<5x32xf32>
    %119 = vector.broadcast %27 : vector<1x32xf32> to vector<5x32xf32>
    %120 = arith.addf %118, %119 : vector<5x32xf32>
    %121 = arith.addf %82, %120 : vector<5x32xf32>
    %c0_57 = arith.constant 0 : index
    %c0_58 = arith.constant 0 : index
    %122 = vector.load %arg23[%c0_57, %c0_58] : memref<5x32xf32, #tpu.memory_space<vmem>>, vector<5x32xf32>
    tpu.vector_store %arg23[%c0_57, %c0_58], %121 {strides = array<i32>} : memref<5x32xf32, #tpu.memory_space<vmem>>, vector<5x32xf32>,
    %c1_i32 = arith.constant 1 : i32
    %123 = arith.cmpi eq, %arg1, %c1_i32 : i32
    %124 = arith.extui %123 : i1 to i32
    %c0_i32_59 = arith.constant 0 : i32
    %125 = arith.cmpi ne, %124, %c0_i32_59 : i32
    scf.if %125 {
      %126 = vector.extract_strided_slice %121 {offsets = [0, 0], sizes = [1, 32], strides = [1, 1]} : vector<5x32xf32> to vector<1x32xf32>
      %c0_60 = arith.constant 0 : index
      %c0_61 = arith.constant 0 : index
      %127 = vector.load %arg19[%c0_60, %c0_61] : memref<1x32xf32, #tpu.memory_space<vmem>>, vector<1x32xf32>
      %c0_62 = arith.constant 0 : index
      %c0_63 = arith.constant 0 : index
      %128 = vector.load %arg20[%c0_62, %c0_63] : memref<1x32xf32, #tpu.memory_space<vmem>>, vector<1x32xf32>
      %cst_64 = arith.constant dense<0.000000e+00> : vector<1xf32>
      %129 = vector.multi_reduction <add>, %126, %cst_64 [1] : vector<1x32xf32> to vector<1xf32>
      %130 = vector.shape_cast %129 : vector<1xf32> to vector<1x1xf32>
      %cst_65 = arith.constant 3.200000e+01 : f32
      %131 = vector.broadcast %cst_65 : f32 to vector<1x1xf32>
      %132 = arith.divf %130, %131 : vector<1x1xf32>
      %133 = vector.broadcast %132 : vector<1x1xf32> to vector<1x32xf32>
      %134 = arith.subf %126, %133 : vector<1x32xf32>
      %135 = arith.mulf %134, %134 : vector<1x32xf32>
      %cst_66 = arith.constant dense<0.000000e+00> : vector<1xf32>
      %136 = vector.multi_reduction <add>, %135, %cst_66 [1] : vector<1x32xf32> to vector<1xf32>
      %137 = vector.shape_cast %136 : vector<1xf32> to vector<1x1xf32>
      %cst_67 = arith.constant 3.200000e+01 : f32
      %138 = vector.broadcast %cst_67 : f32 to vector<1x1xf32>
      %139 = arith.divf %137, %138 : vector<1x1xf32>
      %140 = vector.broadcast %132 : vector<1x1xf32> to vector<1x32xf32>
      %141 = arith.subf %126, %140 : vector<1x32xf32>
      %cst_68 = arith.constant 9.99999974E-6 : f32
      %142 = vector.broadcast %cst_68 : f32 to vector<1x1xf32>
      %143 = arith.addf %139, %142 : vector<1x1xf32>
      %144 = math.rsqrt %143 : vector<1x1xf32>
      %145 = vector.broadcast %144 : vector<1x1xf32> to vector<1x32xf32>
      %146 = arith.mulf %141, %145 : vector<1x32xf32>
      %147 = arith.mulf %146, %127 : vector<1x32xf32>
      %148 = arith.addf %147, %128 : vector<1x32xf32>
      %149 = arith.truncf %148 : vector<1x32xf32> to vector<1x32xbf16>
      %c0_69 = arith.constant 0 : index
      %c0_70 = arith.constant 0 : index
      %150 = vector.load %arg21[%c0_69, %c0_70] : memref<32x16xbf16, #tpu.memory_space<vmem>>, vector<32x16xbf16>
      %cst_71 = arith.constant dense<0.000000e+00> : vector<1x16xf32>
      %151 = tpu.matmul %149, %150, %cst_71 {dimension_numbers = #tpu.dot_dimension_numbers<[1], [0], [0], [1], [0, 0, 1, 1], [], []>} : vector<1x32xbf16>, vector<32x16xbf16>, vector<1x16xf32> -> vector<1x16xf32>
      %152 = arith.mulf %151, %151 : vector<1x16xf32>
      %cst_72 = arith.constant dense<0.000000e+00> : vector<1xf32>
      %153 = vector.multi_reduction <add>, %152, %cst_72 [1] : vector<1x16xf32> to vector<1xf32>
      %154 = vector.shape_cast %153 : vector<1xf32> to vector<1x1xf32>
      %cst_73 = arith.constant 1.000000e-24 : f32
      %155 = vector.broadcast %cst_73 : f32 to vector<1x1xf32>
      %156 = arith.maximumf %154, %155 : vector<1x1xf32>
      %157 = math.rsqrt %156 : vector<1x1xf32>
      %158 = vector.broadcast %157 : vector<1x1xf32> to vector<1x16xf32>
      %159 = arith.mulf %151, %158 : vector<1x16xf32>
      %160 = vector.shape_cast %159 : vector<1x16xf32> to vector<1x1x16xf32>
      %c0_74 = arith.constant 0 : index
      %c0_75 = arith.constant 0 : index
      %c0_76 = arith.constant 0 : index
      %161 = vector.load %arg22[%c0_74, %c0_75, %c0_76] : memref<1x1x16xf32, #tpu.memory_space<vmem>>, vector<1x1x16xf32>
      tpu.vector_store %arg22[%c0_74, %c0_75, %c0_76], %160 {strides = array<i32>} : memref<1x1x16xf32, #tpu.memory_space<vmem>>, vector<1x1x16xf32>,
    } else {
    }
    return
  }
  func.func @transform_0(%arg0: i32, %arg1: i32) -> (i32, i32, i32) {
    %c0_i32 = arith.constant 0 : i32
    %c0_i32_0 = arith.constant 0 : i32
    %c0_i32_1 = arith.constant 0 : i32
    return %arg0, %c0_i32, %c0_i32_0 : i32, i32, i32
  }
  func.func @transform_1(%arg0: i32, %arg1: i32) -> (i32, i32) {
    %c0_i32 = arith.constant 0 : i32
    %c0_i32_0 = arith.constant 0 : i32
    %c0_i32_1 = arith.constant 0 : i32
    return %c0_i32, %c0_i32_0 : i32, i32
  }
  func.func @transform_2(%arg0: i32, %arg1: i32) -> (i32, i32) {
    %c0_i32 = arith.constant 0 : i32
    %c0_i32_0 = arith.constant 0 : i32
    %c0_i32_1 = arith.constant 0 : i32
    return %c0_i32, %c0_i32_0 : i32, i32
  }
  func.func @transform_3(%arg0: i32, %arg1: i32) -> (i32, i32) {
    %c0_i32 = arith.constant 0 : i32
    %c0_i32_0 = arith.constant 0 : i32
    %c0_i32_1 = arith.constant 0 : i32
    return %c0_i32, %c0_i32_0 : i32, i32
  }
  func.func @transform_4(%arg0: i32, %arg1: i32) -> (i32, i32) {
    %c0_i32 = arith.constant 0 : i32
    %c0_i32_0 = arith.constant 0 : i32
    %c0_i32_1 = arith.constant 0 : i32
    return %c0_i32, %c0_i32_0 : i32, i32
  }
  func.func @transform_5(%arg0: i32, %arg1: i32) -> (i32, i32, i32) {
    %c0_i32 = arith.constant 0 : i32
    %c0_i32_0 = arith.constant 0 : i32
    %c0_i32_1 = arith.constant 0 : i32
    return %arg1, %c0_i32, %c0_i32_0 : i32, i32, i32
  }
  func.func @transform_6(%arg0: i32, %arg1: i32) -> (i32, i32, i32) {
    %c0_i32 = arith.constant 0 : i32
    %c0_i32_0 = arith.constant 0 : i32
    %c0_i32_1 = arith.constant 0 : i32
    return %arg1, %c0_i32, %c0_i32_0 : i32, i32, i32
  }
  func.func @transform_7(%arg0: i32, %arg1: i32) -> (i32, i32, i32) {
    %c0_i32 = arith.constant 0 : i32
    %c0_i32_0 = arith.constant 0 : i32
    %c0_i32_1 = arith.constant 0 : i32
    return %arg1, %c0_i32, %c0_i32_0 : i32, i32, i32
  }
  func.func @transform_8(%arg0: i32, %arg1: i32) -> (i32, i32, i32) {
    %c0_i32 = arith.constant 0 : i32
    %c0_i32_0 = arith.constant 0 : i32
    %c0_i32_1 = arith.constant 0 : i32
    return %arg1, %c0_i32, %c0_i32_0 : i32, i32, i32
  }
  func.func @transform_9(%arg0: i32, %arg1: i32) -> (i32, i32, i32) {
    %c0_i32 = arith.constant 0 : i32
    %c0_i32_0 = arith.constant 0 : i32
    %c0_i32_1 = arith.constant 0 : i32
    return %arg1, %c0_i32, %c0_i32_0 : i32, i32, i32
  }
  func.func @transform_10(%arg0: i32, %arg1: i32) -> (i32, i32, i32) {
    %c0_i32 = arith.constant 0 : i32
    %c0_i32_0 = arith.constant 0 : i32
    %c0_i32_1 = arith.constant 0 : i32
    return %arg1, %c0_i32, %c0_i32_0 : i32, i32, i32
  }
  func.func @transform_11(%arg0: i32, %arg1: i32) -> (i32, i32, i32) {
    %c0_i32 = arith.constant 0 : i32
    %c0_i32_0 = arith.constant 0 : i32
    %c0_i32_1 = arith.constant 0 : i32
    return %arg1, %c0_i32, %c0_i32_0 : i32, i32, i32
  }
  func.func @transform_12(%arg0: i32, %arg1: i32) -> (i32, i32, i32) {
    %c0_i32 = arith.constant 0 : i32
    %c0_i32_0 = arith.constant 0 : i32
    %c0_i32_1 = arith.constant 0 : i32
    return %arg1, %c0_i32, %c0_i32_0 : i32, i32, i32
  }
  func.func @transform_13(%arg0: i32, %arg1: i32) -> (i32, i32, i32) {
    %c0_i32 = arith.constant 0 : i32
    %c0_i32_0 = arith.constant 0 : i32
    %c0_i32_1 = arith.constant 0 : i32
    return %arg1, %c0_i32, %c0_i32_0 : i32, i32, i32
  }
  func.func @transform_14(%arg0: i32, %arg1: i32) -> (i32, i32, i32) {
    %c0_i32 = arith.constant 0 : i32
    %c0_i32_0 = arith.constant 0 : i32
    %c0_i32_1 = arith.constant 0 : i32
    return %arg1, %c0_i32, %c0_i32_0 : i32, i32, i32
  }
  func.func @transform_15(%arg0: i32, %arg1: i32) -> (i32, i32, i32) {
    %c0_i32 = arith.constant 0 : i32
    %c0_i32_0 = arith.constant 0 : i32
    %c0_i32_1 = arith.constant 0 : i32
    return %arg1, %c0_i32, %c0_i32_0 : i32, i32, i32
  }
  func.func @transform_16(%arg0: i32, %arg1: i32) -> (i32, i32, i32) {
    %c0_i32 = arith.constant 0 : i32
    %c0_i32_0 = arith.constant 0 : i32
    %c0_i32_1 = arith.constant 0 : i32
    return %arg1, %c0_i32, %c0_i32_0 : i32, i32, i32
  }
  func.func @transform_17(%arg0: i32, %arg1: i32) -> (i32, i32) {
    %c0_i32 = arith.constant 0 : i32
    %c0_i32_0 = arith.constant 0 : i32
    %c0_i32_1 = arith.constant 0 : i32
    return %c0_i32, %c0_i32_0 : i32, i32
  }
  func.func @transform_18(%arg0: i32, %arg1: i32) -> (i32, i32) {
    %c0_i32 = arith.constant 0 : i32
    %c0_i32_0 = arith.constant 0 : i32
    %c0_i32_1 = arith.constant 0 : i32
    return %c0_i32, %c0_i32_0 : i32, i32
  }
  func.func @transform_19(%arg0: i32, %arg1: i32) -> (i32, i32) {
    %c0_i32 = arith.constant 0 : i32
    %c0_i32_0 = arith.constant 0 : i32
    %c0_i32_1 = arith.constant 0 : i32
    return %c0_i32, %c0_i32_0 : i32, i32
  }
  func.func @transform_20(%arg0: i32, %arg1: i32) -> (i32, i32, i32) {
    %c0_i32 = arith.constant 0 : i32
    %c0_i32_0 = arith.constant 0 : i32
    %c0_i32_1 = arith.constant 0 : i32
    return %arg0, %c0_i32, %c0_i32_0 : i32, i32, i32
  }
}

module attributes {stable_mosaic.version = 11 : i64} {
  func.func @text_stack_kernel(%arg0: i32, %arg1: i32, %arg2: memref<1x8x32xf32, #tpu.memory_space<vmem>>, %arg3: memref<8x32xf32, #tpu.memory_space<vmem>>, %arg4: memref<1x1x8xf32, #tpu.memory_space<vmem>>, %arg5: memref<1x8x1xf32, #tpu.memory_space<vmem>>, %arg6: memref<1x1x32xf32, #tpu.memory_space<vmem>>, %arg7: memref<1x1x32xf32, #tpu.memory_space<vmem>>, %arg8: memref<1x32x96xbf16, #tpu.memory_space<vmem>>, %arg9: memref<1x1x96xf32, #tpu.memory_space<vmem>>, %arg10: memref<1x32x32xbf16, #tpu.memory_space<vmem>>, %arg11: memref<1x1x32xf32, #tpu.memory_space<vmem>>, %arg12: memref<1x1x32xf32, #tpu.memory_space<vmem>>, %arg13: memref<1x1x32xf32, #tpu.memory_space<vmem>>, %arg14: memref<1x32x128xbf16, #tpu.memory_space<vmem>>, %arg15: memref<1x1x128xf32, #tpu.memory_space<vmem>>, %arg16: memref<1x128x32xbf16, #tpu.memory_space<vmem>>, %arg17: memref<1x1x32xf32, #tpu.memory_space<vmem>>, %arg18: memref<1x32xf32, #tpu.memory_space<vmem>>, %arg19: memref<1x32xf32, #tpu.memory_space<vmem>>, %arg20: memref<32x16xbf16, #tpu.memory_space<vmem>>, %arg21: memref<1x1x16xf32, #tpu.memory_space<vmem>>, %arg22: memref<8x32xf32, #tpu.memory_space<vmem>>) attributes {dimension_semantics = [#tpu.dimension_semantics<parallel>, #tpu.dimension_semantics<arbitrary>], iteration_bounds = array<i64: 2, 2>, scalar_prefetch = 0 : i64, scratch_operands = 1 : i64, tpu.core_type = #tpu.core_type<tc>, window_params = [{transform_indices = @transform_0, window_bounds = array<i64: 1, 8, 32>}, {pipeline_mode = #tpu.pipeline_mode<synchronous>, transform_indices = @transform_1, window_bounds = array<i64: 8, 32>}, {transform_indices = @transform_2, window_bounds = array<i64: 1, 1, 8>}, {transform_indices = @transform_3, window_bounds = array<i64: 1, 8, 1>}, {transform_indices = @transform_4, window_bounds = array<i64: 1, 1, 32>}, {transform_indices = @transform_5, window_bounds = array<i64: 1, 1, 32>}, {transform_indices = @transform_6, window_bounds = array<i64: 1, 32, 96>}, {transform_indices = @transform_7, window_bounds = array<i64: 1, 1, 96>}, {transform_indices = @transform_8, window_bounds = array<i64: 1, 32, 32>}, {transform_indices = @transform_9, window_bounds = array<i64: 1, 1, 32>}, {transform_indices = @transform_10, window_bounds = array<i64: 1, 1, 32>}, {transform_indices = @transform_11, window_bounds = array<i64: 1, 1, 32>}, {transform_indices = @transform_12, window_bounds = array<i64: 1, 32, 128>}, {transform_indices = @transform_13, window_bounds = array<i64: 1, 1, 128>}, {transform_indices = @transform_14, window_bounds = array<i64: 1, 128, 32>}, {transform_indices = @transform_15, window_bounds = array<i64: 1, 1, 32>}, {pipeline_mode = #tpu.pipeline_mode<synchronous>, transform_indices = @transform_16, window_bounds = array<i64: 1, 32>}, {pipeline_mode = #tpu.pipeline_mode<synchronous>, transform_indices = @transform_17, window_bounds = array<i64: 1, 32>}, {pipeline_mode = #tpu.pipeline_mode<synchronous>, transform_indices = @transform_18, window_bounds = array<i64: 32, 16>}, {transform_indices = @transform_19, window_bounds = array<i64: 1, 1, 16>}]} {
    %c0_i32 = arith.constant 0 : i32
    %0 = arith.cmpi eq, %arg1, %c0_i32 : i32
    %1 = arith.extui %0 : i1 to i32
    %c0_i32_0 = arith.constant 0 : i32
    %2 = arith.cmpi ne, %1, %c0_i32_0 : i32
    scf.if %2 {
      %c0_65 = arith.constant 0 : index
      %c0_66 = arith.constant 0 : index
      %c0_67 = arith.constant 0 : index
      %139 = vector.load %arg2[%c0_65, %c0_66, %c0_67] : memref<1x8x32xf32, #tpu.memory_space<vmem>>, vector<1x8x32xf32>
      %140 = vector.shape_cast %139 : vector<1x8x32xf32> to vector<8x32xf32>
      %c0_68 = arith.constant 0 : index
      %c0_69 = arith.constant 0 : index
      %141 = vector.load %arg3[%c0_68, %c0_69] : memref<8x32xf32, #tpu.memory_space<vmem>>, vector<8x32xf32>
      %142 = arith.addf %140, %141 : vector<8x32xf32>
      %c0_70 = arith.constant 0 : index
      %c0_71 = arith.constant 0 : index
      %143 = vector.load %arg22[%c0_70, %c0_71] : memref<8x32xf32, #tpu.memory_space<vmem>>, vector<8x32xf32>
      tpu.vector_store %arg22[%c0_70, %c0_71], %142 {strides = array<i32>} : memref<8x32xf32, #tpu.memory_space<vmem>>, vector<8x32xf32>,
    } else {
    }
    %3 = tpu.iota {dimensions = array<i32: 0>} : vector<8x8xi32>
    %4 = tpu.iota {dimensions = array<i32: 1>} : vector<8x8xi32>
    %5 = arith.cmpi sle, %4, %3 : vector<8x8xi32>
    %cst = arith.constant 0.000000e+00 : f32
    %cst_1 = arith.constant -1.000000e+09 : f32
    %6 = vector.broadcast %cst : f32 to vector<8x8xf32>
    %7 = vector.broadcast %cst_1 : f32 to vector<8x8xf32>
    %8 = arith.select %5, %6, %7 : vector<8x8xi1>, vector<8x8xf32>
    %c0 = arith.constant 0 : index
    %c0_2 = arith.constant 0 : index
    %c0_3 = arith.constant 0 : index
    %9 = vector.load %arg4[%c0, %c0_2, %c0_3] : memref<1x1x8xf32, #tpu.memory_space<vmem>>, vector<1x1x8xf32>
    %10 = vector.shape_cast %9 : vector<1x1x8xf32> to vector<1x8xf32>
    %11 = vector.broadcast %10 : vector<1x8xf32> to vector<8x8xf32>
    %12 = arith.addf %8, %11 : vector<8x8xf32>
    %c0_4 = arith.constant 0 : index
    %c0_5 = arith.constant 0 : index
    %13 = vector.load %arg22[%c0_4, %c0_5] : memref<8x32xf32, #tpu.memory_space<vmem>>, vector<8x32xf32>
    %c0_6 = arith.constant 0 : index
    %c0_7 = arith.constant 0 : index
    %c0_8 = arith.constant 0 : index
    %14 = vector.load %arg6[%c0_6, %c0_7, %c0_8] : memref<1x1x32xf32, #tpu.memory_space<vmem>>, vector<1x1x32xf32>
    %15 = vector.shape_cast %14 : vector<1x1x32xf32> to vector<1x32xf32>
    %c0_9 = arith.constant 0 : index
    %c0_10 = arith.constant 0 : index
    %c0_11 = arith.constant 0 : index
    %16 = vector.load %arg7[%c0_9, %c0_10, %c0_11] : memref<1x1x32xf32, #tpu.memory_space<vmem>>, vector<1x1x32xf32>
    %17 = vector.shape_cast %16 : vector<1x1x32xf32> to vector<1x32xf32>
    %c0_12 = arith.constant 0 : index
    %c0_13 = arith.constant 0 : index
    %c0_14 = arith.constant 0 : index
    %18 = vector.load %arg8[%c0_12, %c0_13, %c0_14] : memref<1x32x96xbf16, #tpu.memory_space<vmem>>, vector<1x32x96xbf16>
    %19 = vector.shape_cast %18 : vector<1x32x96xbf16> to vector<32x96xbf16>
    %c0_15 = arith.constant 0 : index
    %c0_16 = arith.constant 0 : index
    %c0_17 = arith.constant 0 : index
    %20 = vector.load %arg9[%c0_15, %c0_16, %c0_17] : memref<1x1x96xf32, #tpu.memory_space<vmem>>, vector<1x1x96xf32>
    %21 = vector.shape_cast %20 : vector<1x1x96xf32> to vector<1x96xf32>
    %c0_18 = arith.constant 0 : index
    %c0_19 = arith.constant 0 : index
    %c0_20 = arith.constant 0 : index
    %22 = vector.load %arg10[%c0_18, %c0_19, %c0_20] : memref<1x32x32xbf16, #tpu.memory_space<vmem>>, vector<1x32x32xbf16>
    %23 = vector.shape_cast %22 : vector<1x32x32xbf16> to vector<32x32xbf16>
    %c0_21 = arith.constant 0 : index
    %c0_22 = arith.constant 0 : index
    %c0_23 = arith.constant 0 : index
    %24 = vector.load %arg11[%c0_21, %c0_22, %c0_23] : memref<1x1x32xf32, #tpu.memory_space<vmem>>, vector<1x1x32xf32>
    %25 = vector.shape_cast %24 : vector<1x1x32xf32> to vector<1x32xf32>
    %c0_24 = arith.constant 0 : index
    %c0_25 = arith.constant 0 : index
    %c0_26 = arith.constant 0 : index
    %26 = vector.load %arg12[%c0_24, %c0_25, %c0_26] : memref<1x1x32xf32, #tpu.memory_space<vmem>>, vector<1x1x32xf32>
    %27 = vector.shape_cast %26 : vector<1x1x32xf32> to vector<1x32xf32>
    %c0_27 = arith.constant 0 : index
    %c0_28 = arith.constant 0 : index
    %c0_29 = arith.constant 0 : index
    %28 = vector.load %arg13[%c0_27, %c0_28, %c0_29] : memref<1x1x32xf32, #tpu.memory_space<vmem>>, vector<1x1x32xf32>
    %29 = vector.shape_cast %28 : vector<1x1x32xf32> to vector<1x32xf32>
    %c0_30 = arith.constant 0 : index
    %c0_31 = arith.constant 0 : index
    %c0_32 = arith.constant 0 : index
    %30 = vector.load %arg14[%c0_30, %c0_31, %c0_32] : memref<1x32x128xbf16, #tpu.memory_space<vmem>>, vector<1x32x128xbf16>
    %31 = vector.shape_cast %30 : vector<1x32x128xbf16> to vector<32x128xbf16>
    %c0_33 = arith.constant 0 : index
    %c0_34 = arith.constant 0 : index
    %c0_35 = arith.constant 0 : index
    %32 = vector.load %arg15[%c0_33, %c0_34, %c0_35] : memref<1x1x128xf32, #tpu.memory_space<vmem>>, vector<1x1x128xf32>
    %33 = vector.shape_cast %32 : vector<1x1x128xf32> to vector<1x128xf32>
    %c0_36 = arith.constant 0 : index
    %c0_37 = arith.constant 0 : index
    %c0_38 = arith.constant 0 : index
    %34 = vector.load %arg16[%c0_36, %c0_37, %c0_38] : memref<1x128x32xbf16, #tpu.memory_space<vmem>>, vector<1x128x32xbf16>
    %35 = vector.shape_cast %34 : vector<1x128x32xbf16> to vector<128x32xbf16>
    %c0_39 = arith.constant 0 : index
    %c0_40 = arith.constant 0 : index
    %c0_41 = arith.constant 0 : index
    %36 = vector.load %arg17[%c0_39, %c0_40, %c0_41] : memref<1x1x32xf32, #tpu.memory_space<vmem>>, vector<1x1x32xf32>
    %37 = vector.shape_cast %36 : vector<1x1x32xf32> to vector<1x32xf32>
    %cst_42 = arith.constant dense<0.000000e+00> : vector<8xf32>
    %38 = vector.multi_reduction <add>, %13, %cst_42 [1] : vector<8x32xf32> to vector<8xf32>
    %39 = vector.shape_cast %38 : vector<8xf32> to vector<8x1xf32>
    %cst_43 = arith.constant 3.200000e+01 : f32
    %40 = vector.broadcast %cst_43 : f32 to vector<8x1xf32>
    %41 = arith.divf %39, %40 : vector<8x1xf32>
    %42 = vector.broadcast %41 : vector<8x1xf32> to vector<8x32xf32>
    %43 = arith.subf %13, %42 : vector<8x32xf32>
    %44 = arith.mulf %43, %43 : vector<8x32xf32>
    %cst_44 = arith.constant dense<0.000000e+00> : vector<8xf32>
    %45 = vector.multi_reduction <add>, %44, %cst_44 [1] : vector<8x32xf32> to vector<8xf32>
    %46 = vector.shape_cast %45 : vector<8xf32> to vector<8x1xf32>
    %cst_45 = arith.constant 3.200000e+01 : f32
    %47 = vector.broadcast %cst_45 : f32 to vector<8x1xf32>
    %48 = arith.divf %46, %47 : vector<8x1xf32>
    %49 = vector.broadcast %41 : vector<8x1xf32> to vector<8x32xf32>
    %50 = arith.subf %13, %49 : vector<8x32xf32>
    %cst_46 = arith.constant 9.99999974E-6 : f32
    %51 = vector.broadcast %cst_46 : f32 to vector<8x1xf32>
    %52 = arith.addf %48, %51 : vector<8x1xf32>
    %53 = math.rsqrt %52 : vector<8x1xf32>
    %54 = vector.broadcast %53 : vector<8x1xf32> to vector<8x32xf32>
    %55 = arith.mulf %50, %54 : vector<8x32xf32>
    %56 = vector.broadcast %15 : vector<1x32xf32> to vector<8x32xf32>
    %57 = arith.mulf %55, %56 : vector<8x32xf32>
    %58 = vector.broadcast %17 : vector<1x32xf32> to vector<8x32xf32>
    %59 = arith.addf %57, %58 : vector<8x32xf32>
    %60 = arith.truncf %59 : vector<8x32xf32> to vector<8x32xbf16>
    %cst_47 = arith.constant dense<0.000000e+00> : vector<8x96xf32>
    %61 = tpu.matmul %60, %19, %cst_47 {dimension_numbers = #tpu.dot_dimension_numbers<[1], [0], [0], [1], [0, 0, 1, 1], [], []>} : vector<8x32xbf16>, vector<32x96xbf16>, vector<8x96xf32> -> vector<8x96xf32>
    %62 = vector.broadcast %21 : vector<1x96xf32> to vector<8x96xf32>
    %63 = arith.addf %61, %62 : vector<8x96xf32>
    %64 = vector.extract_strided_slice %63 {offsets = [0, 0], sizes = [8, 32], strides = [1, 1]} : vector<8x96xf32> to vector<8x32xf32>
    %65 = arith.truncf %64 : vector<8x32xf32> to vector<8x32xbf16>
    %66 = vector.shape_cast %65 : vector<8x32xbf16> to vector<8x2x16xbf16>
    %67 = vector.extract_strided_slice %63 {offsets = [0, 32], sizes = [8, 32], strides = [1, 1]} : vector<8x96xf32> to vector<8x32xf32>
    %68 = arith.truncf %67 : vector<8x32xf32> to vector<8x32xbf16>
    %69 = vector.shape_cast %68 : vector<8x32xbf16> to vector<8x2x16xbf16>
    %70 = vector.extract_strided_slice %63 {offsets = [0, 64], sizes = [8, 32], strides = [1, 1]} : vector<8x96xf32> to vector<8x32xf32>
    %71 = arith.truncf %70 : vector<8x32xf32> to vector<8x32xbf16>
    %72 = vector.shape_cast %71 : vector<8x32xbf16> to vector<8x2x16xbf16>
    "tpu.trace_start"() <{level = 10 : i32, message = "qhd,khd->hqk"}> : () -> ()
    %cst_48 = arith.constant dense<0.000000e+00> : vector<2x8x8xf32>
    %73 = tpu.matmul %66, %69, %cst_48 {dimension_numbers = #tpu.dot_dimension_numbers<[2], [2], [0], [0], [0, 1, 0, 0, 1, 0], [1], [1]>} : vector<8x2x16xbf16>, vector<8x2x16xbf16>, vector<2x8x8xf32> -> vector<2x8x8xf32>
    "tpu.trace_stop"() : () -> ()
    %74 = vector.shape_cast %12 : vector<8x8xf32> to vector<1x8x8xf32>
    %75 = vector.broadcast %74 : vector<1x8x8xf32> to vector<2x8x8xf32>
    %76 = arith.addf %73, %75 : vector<2x8x8xf32>
    %cst_49 = arith.constant dense<0xFF800000> : vector<2x8xf32>
    %77 = vector.multi_reduction <maximumf>, %76, %cst_49 [2] : vector<2x8x8xf32> to vector<2x8xf32>
    %78 = vector.shape_cast %77 : vector<2x8xf32> to vector<2x8x1xf32>
    %79 = vector.broadcast %78 : vector<2x8x1xf32> to vector<2x8x8xf32>
    %80 = arith.subf %76, %79 : vector<2x8x8xf32>
    %81 = math.exp %80 : vector<2x8x8xf32>
    %cst_50 = arith.constant dense<0.000000e+00> : vector<2x8xf32>
    %82 = vector.multi_reduction <add>, %81, %cst_50 [2] : vector<2x8x8xf32> to vector<2x8xf32>
    %83 = vector.shape_cast %82 : vector<2x8xf32> to vector<2x8x1xf32>
    %84 = tpu.reciprocal %83 {approx = true} : vector<2x8x1xf32> -> vector<2x8x1xf32>
    %85 = vector.broadcast %84 : vector<2x8x1xf32> to vector<2x8x8xf32>
    %86 = arith.mulf %81, %85 : vector<2x8x8xf32>
    %87 = arith.truncf %86 : vector<2x8x8xf32> to vector<2x8x8xbf16>
    "tpu.trace_start"() <{level = 10 : i32, message = "hqk,khd->qhd"}> : () -> ()
    %cst_51 = arith.constant dense<0.000000e+00> : vector<2x16x8xf32>
    %88 = tpu.matmul %72, %87, %cst_51 {dimension_numbers = #tpu.dot_dimension_numbers<[0], [2], [2], [1], [0, 1, 0, 2, 1, 1], [1], [0]>} : vector<8x2x16xbf16>, vector<2x8x8xbf16>, vector<2x16x8xf32> -> vector<2x16x8xf32>
    %89 = tpu.transpose %88, [2, 0, 1] : vector<2x16x8xf32> -> vector<8x2x16xf32>
    "tpu.trace_stop"() : () -> ()
    %90 = vector.shape_cast %89 : vector<8x2x16xf32> to vector<8x32xf32>
    %91 = arith.truncf %90 : vector<8x32xf32> to vector<8x32xbf16>
    %cst_52 = arith.constant dense<0.000000e+00> : vector<8x32xf32>
    %92 = tpu.matmul %91, %23, %cst_52 {dimension_numbers = #tpu.dot_dimension_numbers<[1], [0], [0], [1], [0, 0, 1, 1], [], []>} : vector<8x32xbf16>, vector<32x32xbf16>, vector<8x32xf32> -> vector<8x32xf32>
    %93 = vector.broadcast %25 : vector<1x32xf32> to vector<8x32xf32>
    %94 = arith.addf %92, %93 : vector<8x32xf32>
    %95 = arith.addf %13, %94 : vector<8x32xf32>
    %cst_53 = arith.constant dense<0.000000e+00> : vector<8xf32>
    %96 = vector.multi_reduction <add>, %95, %cst_53 [1] : vector<8x32xf32> to vector<8xf32>
    %97 = vector.shape_cast %96 : vector<8xf32> to vector<8x1xf32>
    %cst_54 = arith.constant 3.200000e+01 : f32
    %98 = vector.broadcast %cst_54 : f32 to vector<8x1xf32>
    %99 = arith.divf %97, %98 : vector<8x1xf32>
    %100 = vector.broadcast %99 : vector<8x1xf32> to vector<8x32xf32>
    %101 = arith.subf %95, %100 : vector<8x32xf32>
    %102 = arith.mulf %101, %101 : vector<8x32xf32>
    %cst_55 = arith.constant dense<0.000000e+00> : vector<8xf32>
    %103 = vector.multi_reduction <add>, %102, %cst_55 [1] : vector<8x32xf32> to vector<8xf32>
    %104 = vector.shape_cast %103 : vector<8xf32> to vector<8x1xf32>
    %cst_56 = arith.constant 3.200000e+01 : f32
    %105 = vector.broadcast %cst_56 : f32 to vector<8x1xf32>
    %106 = arith.divf %104, %105 : vector<8x1xf32>
    %107 = vector.broadcast %99 : vector<8x1xf32> to vector<8x32xf32>
    %108 = arith.subf %95, %107 : vector<8x32xf32>
    %cst_57 = arith.constant 9.99999974E-6 : f32
    %109 = vector.broadcast %cst_57 : f32 to vector<8x1xf32>
    %110 = arith.addf %106, %109 : vector<8x1xf32>
    %111 = math.rsqrt %110 : vector<8x1xf32>
    %112 = vector.broadcast %111 : vector<8x1xf32> to vector<8x32xf32>
    %113 = arith.mulf %108, %112 : vector<8x32xf32>
    %114 = vector.broadcast %27 : vector<1x32xf32> to vector<8x32xf32>
    %115 = arith.mulf %113, %114 : vector<8x32xf32>
    %116 = vector.broadcast %29 : vector<1x32xf32> to vector<8x32xf32>
    %117 = arith.addf %115, %116 : vector<8x32xf32>
    %118 = arith.truncf %117 : vector<8x32xf32> to vector<8x32xbf16>
    %cst_58 = arith.constant dense<0.000000e+00> : vector<8x128xf32>
    %119 = tpu.matmul %118, %31, %cst_58 {dimension_numbers = #tpu.dot_dimension_numbers<[1], [0], [0], [1], [0, 0, 1, 1], [], []>} : vector<8x32xbf16>, vector<32x128xbf16>, vector<8x128xf32> -> vector<8x128xf32>
    %120 = vector.broadcast %33 : vector<1x128xf32> to vector<8x128xf32>
    %121 = arith.addf %119, %120 : vector<8x128xf32>
    %cst_59 = arith.constant 1.702000e+00 : f32
    %122 = vector.broadcast %cst_59 : f32 to vector<8x128xf32>
    %123 = arith.mulf %122, %121 : vector<8x128xf32>
    %124 = arith.negf %123 : vector<8x128xf32>
    %125 = math.exp %124 : vector<8x128xf32>
    %cst_60 = arith.constant 1.000000e+00 : f32
    %126 = vector.broadcast %cst_60 : f32 to vector<8x128xf32>
    %127 = arith.addf %126, %125 : vector<8x128xf32>
    %128 = arith.divf %126, %127 : vector<8x128xf32>
    %129 = arith.mulf %121, %128 : vector<8x128xf32>
    %130 = arith.truncf %129 : vector<8x128xf32> to vector<8x128xbf16>
    %cst_61 = arith.constant dense<0.000000e+00> : vector<8x32xf32>
    %131 = tpu.matmul %130, %35, %cst_61 {dimension_numbers = #tpu.dot_dimension_numbers<[1], [0], [0], [1], [0, 0, 1, 1], [], []>} : vector<8x128xbf16>, vector<128x32xbf16>, vector<8x32xf32> -> vector<8x32xf32>
    %132 = vector.broadcast %37 : vector<1x32xf32> to vector<8x32xf32>
    %133 = arith.addf %131, %132 : vector<8x32xf32>
    %134 = arith.addf %95, %133 : vector<8x32xf32>
    %c0_62 = arith.constant 0 : index
    %c0_63 = arith.constant 0 : index
    %135 = vector.load %arg22[%c0_62, %c0_63] : memref<8x32xf32, #tpu.memory_space<vmem>>, vector<8x32xf32>
    tpu.vector_store %arg22[%c0_62, %c0_63], %134 {strides = array<i32>} : memref<8x32xf32, #tpu.memory_space<vmem>>, vector<8x32xf32>,
    %c1_i32 = arith.constant 1 : i32
    %136 = arith.cmpi eq, %arg1, %c1_i32 : i32
    %137 = arith.extui %136 : i1 to i32
    %c0_i32_64 = arith.constant 0 : i32
    %138 = arith.cmpi ne, %137, %c0_i32_64 : i32
    scf.if %138 {
      %c0_65 = arith.constant 0 : index
      %c0_66 = arith.constant 0 : index
      %c0_67 = arith.constant 0 : index
      %139 = vector.load %arg5[%c0_65, %c0_66, %c0_67] : memref<1x8x1xf32, #tpu.memory_space<vmem>>, vector<1x8x1xf32>
      %140 = vector.shape_cast %139 : vector<1x8x1xf32> to vector<8x1xf32>
      %141 = vector.broadcast %140 : vector<8x1xf32> to vector<8x32xf32>
      %142 = arith.mulf %134, %141 : vector<8x32xf32>
      %cst_68 = arith.constant dense<0.000000e+00> : vector<32xf32>
      %143 = vector.multi_reduction <add>, %142, %cst_68 [0] : vector<8x32xf32> to vector<32xf32>
      %144 = vector.shape_cast %143 : vector<32xf32> to vector<1x32xf32>
      %c0_69 = arith.constant 0 : index
      %c0_70 = arith.constant 0 : index
      %145 = vector.load %arg18[%c0_69, %c0_70] : memref<1x32xf32, #tpu.memory_space<vmem>>, vector<1x32xf32>
      %c0_71 = arith.constant 0 : index
      %c0_72 = arith.constant 0 : index
      %146 = vector.load %arg19[%c0_71, %c0_72] : memref<1x32xf32, #tpu.memory_space<vmem>>, vector<1x32xf32>
      %cst_73 = arith.constant dense<0.000000e+00> : vector<1xf32>
      %147 = vector.multi_reduction <add>, %144, %cst_73 [1] : vector<1x32xf32> to vector<1xf32>
      %148 = vector.shape_cast %147 : vector<1xf32> to vector<1x1xf32>
      %cst_74 = arith.constant 3.200000e+01 : f32
      %149 = vector.broadcast %cst_74 : f32 to vector<1x1xf32>
      %150 = arith.divf %148, %149 : vector<1x1xf32>
      %151 = vector.broadcast %150 : vector<1x1xf32> to vector<1x32xf32>
      %152 = arith.subf %144, %151 : vector<1x32xf32>
      %153 = arith.mulf %152, %152 : vector<1x32xf32>
      %cst_75 = arith.constant dense<0.000000e+00> : vector<1xf32>
      %154 = vector.multi_reduction <add>, %153, %cst_75 [1] : vector<1x32xf32> to vector<1xf32>
      %155 = vector.shape_cast %154 : vector<1xf32> to vector<1x1xf32>
      %cst_76 = arith.constant 3.200000e+01 : f32
      %156 = vector.broadcast %cst_76 : f32 to vector<1x1xf32>
      %157 = arith.divf %155, %156 : vector<1x1xf32>
      %158 = vector.broadcast %150 : vector<1x1xf32> to vector<1x32xf32>
      %159 = arith.subf %144, %158 : vector<1x32xf32>
      %cst_77 = arith.constant 9.99999974E-6 : f32
      %160 = vector.broadcast %cst_77 : f32 to vector<1x1xf32>
      %161 = arith.addf %157, %160 : vector<1x1xf32>
      %162 = math.rsqrt %161 : vector<1x1xf32>
      %163 = vector.broadcast %162 : vector<1x1xf32> to vector<1x32xf32>
      %164 = arith.mulf %159, %163 : vector<1x32xf32>
      %165 = arith.mulf %164, %145 : vector<1x32xf32>
      %166 = arith.addf %165, %146 : vector<1x32xf32>
      %167 = arith.truncf %166 : vector<1x32xf32> to vector<1x32xbf16>
      %c0_78 = arith.constant 0 : index
      %c0_79 = arith.constant 0 : index
      %168 = vector.load %arg20[%c0_78, %c0_79] : memref<32x16xbf16, #tpu.memory_space<vmem>>, vector<32x16xbf16>
      %cst_80 = arith.constant dense<0.000000e+00> : vector<1x16xf32>
      %169 = tpu.matmul %167, %168, %cst_80 {dimension_numbers = #tpu.dot_dimension_numbers<[1], [0], [0], [1], [0, 0, 1, 1], [], []>} : vector<1x32xbf16>, vector<32x16xbf16>, vector<1x16xf32> -> vector<1x16xf32>
      %170 = arith.mulf %169, %169 : vector<1x16xf32>
      %cst_81 = arith.constant dense<0.000000e+00> : vector<1xf32>
      %171 = vector.multi_reduction <add>, %170, %cst_81 [1] : vector<1x16xf32> to vector<1xf32>
      %172 = vector.shape_cast %171 : vector<1xf32> to vector<1x1xf32>
      %cst_82 = arith.constant 1.000000e-24 : f32
      %173 = vector.broadcast %cst_82 : f32 to vector<1x1xf32>
      %174 = arith.maximumf %172, %173 : vector<1x1xf32>
      %175 = math.rsqrt %174 : vector<1x1xf32>
      %176 = vector.broadcast %175 : vector<1x1xf32> to vector<1x16xf32>
      %177 = arith.mulf %169, %176 : vector<1x16xf32>
      %178 = vector.shape_cast %177 : vector<1x16xf32> to vector<1x1x16xf32>
      %c0_83 = arith.constant 0 : index
      %c0_84 = arith.constant 0 : index
      %c0_85 = arith.constant 0 : index
      %179 = vector.load %arg21[%c0_83, %c0_84, %c0_85] : memref<1x1x16xf32, #tpu.memory_space<vmem>>, vector<1x1x16xf32>
      tpu.vector_store %arg21[%c0_83, %c0_84, %c0_85], %178 {strides = array<i32>} : memref<1x1x16xf32, #tpu.memory_space<vmem>>, vector<1x1x16xf32>,
    } else {
    }
    return
  }
  func.func @transform_0(%arg0: i32, %arg1: i32) -> (i32, i32, i32) {
    %c0_i32 = arith.constant 0 : i32
    %c0_i32_0 = arith.constant 0 : i32
    %c0_i32_1 = arith.constant 0 : i32
    return %arg0, %c0_i32, %c0_i32_0 : i32, i32, i32
  }
  func.func @transform_1(%arg0: i32, %arg1: i32) -> (i32, i32) {
    %c0_i32 = arith.constant 0 : i32
    %c0_i32_0 = arith.constant 0 : i32
    %c0_i32_1 = arith.constant 0 : i32
    return %c0_i32, %c0_i32_0 : i32, i32
  }
  func.func @transform_2(%arg0: i32, %arg1: i32) -> (i32, i32, i32) {
    %c0_i32 = arith.constant 0 : i32
    %c0_i32_0 = arith.constant 0 : i32
    %c0_i32_1 = arith.constant 0 : i32
    return %arg0, %c0_i32, %c0_i32_0 : i32, i32, i32
  }
  func.func @transform_3(%arg0: i32, %arg1: i32) -> (i32, i32, i32) {
    %c0_i32 = arith.constant 0 : i32
    %c0_i32_0 = arith.constant 0 : i32
    %c0_i32_1 = arith.constant 0 : i32
    return %arg0, %c0_i32, %c0_i32_0 : i32, i32, i32
  }
  func.func @transform_4(%arg0: i32, %arg1: i32) -> (i32, i32, i32) {
    %c0_i32 = arith.constant 0 : i32
    %c0_i32_0 = arith.constant 0 : i32
    %c0_i32_1 = arith.constant 0 : i32
    return %arg1, %c0_i32, %c0_i32_0 : i32, i32, i32
  }
  func.func @transform_5(%arg0: i32, %arg1: i32) -> (i32, i32, i32) {
    %c0_i32 = arith.constant 0 : i32
    %c0_i32_0 = arith.constant 0 : i32
    %c0_i32_1 = arith.constant 0 : i32
    return %arg1, %c0_i32, %c0_i32_0 : i32, i32, i32
  }
  func.func @transform_6(%arg0: i32, %arg1: i32) -> (i32, i32, i32) {
    %c0_i32 = arith.constant 0 : i32
    %c0_i32_0 = arith.constant 0 : i32
    %c0_i32_1 = arith.constant 0 : i32
    return %arg1, %c0_i32, %c0_i32_0 : i32, i32, i32
  }
  func.func @transform_7(%arg0: i32, %arg1: i32) -> (i32, i32, i32) {
    %c0_i32 = arith.constant 0 : i32
    %c0_i32_0 = arith.constant 0 : i32
    %c0_i32_1 = arith.constant 0 : i32
    return %arg1, %c0_i32, %c0_i32_0 : i32, i32, i32
  }
  func.func @transform_8(%arg0: i32, %arg1: i32) -> (i32, i32, i32) {
    %c0_i32 = arith.constant 0 : i32
    %c0_i32_0 = arith.constant 0 : i32
    %c0_i32_1 = arith.constant 0 : i32
    return %arg1, %c0_i32, %c0_i32_0 : i32, i32, i32
  }
  func.func @transform_9(%arg0: i32, %arg1: i32) -> (i32, i32, i32) {
    %c0_i32 = arith.constant 0 : i32
    %c0_i32_0 = arith.constant 0 : i32
    %c0_i32_1 = arith.constant 0 : i32
    return %arg1, %c0_i32, %c0_i32_0 : i32, i32, i32
  }
  func.func @transform_10(%arg0: i32, %arg1: i32) -> (i32, i32, i32) {
    %c0_i32 = arith.constant 0 : i32
    %c0_i32_0 = arith.constant 0 : i32
    %c0_i32_1 = arith.constant 0 : i32
    return %arg1, %c0_i32, %c0_i32_0 : i32, i32, i32
  }
  func.func @transform_11(%arg0: i32, %arg1: i32) -> (i32, i32, i32) {
    %c0_i32 = arith.constant 0 : i32
    %c0_i32_0 = arith.constant 0 : i32
    %c0_i32_1 = arith.constant 0 : i32
    return %arg1, %c0_i32, %c0_i32_0 : i32, i32, i32
  }
  func.func @transform_12(%arg0: i32, %arg1: i32) -> (i32, i32, i32) {
    %c0_i32 = arith.constant 0 : i32
    %c0_i32_0 = arith.constant 0 : i32
    %c0_i32_1 = arith.constant 0 : i32
    return %arg1, %c0_i32, %c0_i32_0 : i32, i32, i32
  }
  func.func @transform_13(%arg0: i32, %arg1: i32) -> (i32, i32, i32) {
    %c0_i32 = arith.constant 0 : i32
    %c0_i32_0 = arith.constant 0 : i32
    %c0_i32_1 = arith.constant 0 : i32
    return %arg1, %c0_i32, %c0_i32_0 : i32, i32, i32
  }
  func.func @transform_14(%arg0: i32, %arg1: i32) -> (i32, i32, i32) {
    %c0_i32 = arith.constant 0 : i32
    %c0_i32_0 = arith.constant 0 : i32
    %c0_i32_1 = arith.constant 0 : i32
    return %arg1, %c0_i32, %c0_i32_0 : i32, i32, i32
  }
  func.func @transform_15(%arg0: i32, %arg1: i32) -> (i32, i32, i32) {
    %c0_i32 = arith.constant 0 : i32
    %c0_i32_0 = arith.constant 0 : i32
    %c0_i32_1 = arith.constant 0 : i32
    return %arg1, %c0_i32, %c0_i32_0 : i32, i32, i32
  }
  func.func @transform_16(%arg0: i32, %arg1: i32) -> (i32, i32) {
    %c0_i32 = arith.constant 0 : i32
    %c0_i32_0 = arith.constant 0 : i32
    %c0_i32_1 = arith.constant 0 : i32
    return %c0_i32, %c0_i32_0 : i32, i32
  }
  func.func @transform_17(%arg0: i32, %arg1: i32) -> (i32, i32) {
    %c0_i32 = arith.constant 0 : i32
    %c0_i32_0 = arith.constant 0 : i32
    %c0_i32_1 = arith.constant 0 : i32
    return %c0_i32, %c0_i32_0 : i32, i32
  }
  func.func @transform_18(%arg0: i32, %arg1: i32) -> (i32, i32) {
    %c0_i32 = arith.constant 0 : i32
    %c0_i32_0 = arith.constant 0 : i32
    %c0_i32_1 = arith.constant 0 : i32
    return %c0_i32, %c0_i32_0 : i32, i32
  }
  func.func @transform_19(%arg0: i32, %arg1: i32) -> (i32, i32, i32) {
    %c0_i32 = arith.constant 0 : i32
    %c0_i32_0 = arith.constant 0 : i32
    %c0_i32_1 = arith.constant 0 : i32
    return %arg0, %c0_i32, %c0_i32_0 : i32, i32, i32
  }
}

</mosaic_0001>

<llo_original>
// kernel: clip_forward.2
$region0: #{clip_forward.2}
  #allocation0 [shape = 'u32[]', space=smem, size = 0x4, offset = 0x4, fixed_abs, tag = 'smem constant byte address 0x4 - core index']
  #allocation1 [shape = 'u32[144,128]{1,0:T(1,128)}', space=vmem, size = 0x12000, scoped, tag = 'internal scratch']
  #allocation2 [shape = 'f32[8,32]{1,0:T(8,128)}', space=vmem, size = 0x1000, scoped, tag = 'scratch operand']
  %s0 = inlined_call_operand.vmem [shape: f32[2,8,32], index: 0, kind: input, shape index: {}]
  %s1 = inlined_call_operand.vmem [shape: f32[8,32], index: 1, kind: input, shape index: {}]
  %s2 = inlined_call_operand.vmem [shape: f32[2,1,8], index: 2, kind: input, shape index: {}]
  %s3 = inlined_call_operand.vmem [shape: f32[2,8,1], index: 3, kind: input, shape index: {}]
  %s4 = inlined_call_operand.vmem [shape: f32[2,1,32], index: 4, kind: input, shape index: {}]
  %s5 = inlined_call_operand.vmem [shape: f32[2,1,32], index: 5, kind: input, shape index: {}]
  %s6 = inlined_call_operand.vmem [shape: bf16[2,32,96], index: 6, kind: input, shape index: {}]
  %s7 = inlined_call_operand.vmem [shape: f32[2,1,96], index: 7, kind: input, shape index: {}]
  %s8 = inlined_call_operand.vmem [shape: bf16[2,32,32], index: 8, kind: input, shape index: {}]
  %s9 = inlined_call_operand.vmem [shape: f32[2,1,32], index: 9, kind: input, shape index: {}]
  %s10 = inlined_call_operand.vmem [shape: f32[2,1,32], index: 10, kind: input, shape index: {}]
  %s11 = inlined_call_operand.vmem [shape: f32[2,1,32], index: 11, kind: input, shape index: {}]
  %s12 = inlined_call_operand.vmem [shape: bf16[2,32,128], index: 12, kind: input, shape index: {}]
  %s13 = inlined_call_operand.vmem [shape: f32[2,1,128], index: 13, kind: input, shape index: {}]
  %s14 = inlined_call_operand.vmem [shape: bf16[2,128,32], index: 14, kind: input, shape index: {}]
  %s15 = inlined_call_operand.vmem [shape: f32[2,1,32], index: 15, kind: input, shape index: {}]
  %s16 = inlined_call_operand.vmem [shape: f32[1,32], index: 16, kind: input, shape index: {}]
  %s17 = inlined_call_operand.vmem [shape: f32[1,32], index: 17, kind: input, shape index: {}]
  %s18 = inlined_call_operand.vmem [shape: bf16[32,16], index: 18, kind: input, shape index: {}]
  %s19 = inlined_call_operand.hbm [shape: f32[2,1,16], index: 19, kind: output, shape index: {}]
  %s20 = sld [smem:[#allocation0]]
  $region117: #{clip_forward.2} parent=0
    _
  %s22 = ssub.s32 1, %s20
  %s23 = scalar_select 0, %s22, %s20
  $region1: #{clip_forward.2} parent=0
    #allocation3 [shape = 'u8[1024]{0}', space=vmem, size = 0x400, scoped, tag = 'output window, operand 0']
    #allocation4 [shape = 's32[2]{0}', space=sflag, size = 0x8, scoped, tag = 'scoped memory for clip_forward.2']
    %24 = vsyncpa [#allocation4], 0
    %s25 = scalar_lea.sflag [#allocation4], 1
    %26 = vsyncpa %s25, 0
    loop: start=0, step=1, limit=6
    $region2: #{clip_forward.2} parent=1 // loop_pre_header
      _
    $region3: #{clip_forward.2} parent=1 // loop_header
      %s28 = sphi 0, %s32
      %p29 = scmp.ge.s32.totalorder %s28, 6
      %s35 = sphi 0, %s47
      %s36 = sphi 0, %s43
      %s37 = sphi 0, %s35
      %s38 = sphi 0, %s36
      %s39 = sphi 0, %s37
      %s40 = sphi 0, %s38
      %s50 = sphi 0, %s52
      %s53 = sphi 0, %s50
      %s54 = sphi 0, %s53
      %s70 = sphi 0, %s54
      %s74 = sphi 0, %s74
      %s76 = sphi 0, %s74
      %s77 = sphi 0, %s76
      %s91 = sphi 0, %s77
      %s97 = sphi 0, %s99
      %s100 = sphi 0, %s97
      %s101 = sphi 0, %s100
      %s117 = sphi 0, %s101
      %s123 = sphi 0, %s125
      %s126 = sphi 0, %s123
      %s127 = sphi 0, %s126
      %s143 = sphi 0, %s127
      %s149 = sphi 0, %s151
      %s152 = sphi 0, %s149
      %s153 = sphi 0, %s152
      %s169 = sphi 0, %s153
      %s175 = sphi 0, %s177
      %s178 = sphi 0, %s175
      %s179 = sphi 0, %s178
      %s195 = sphi 0, %s179
      %s201 = sphi 0, %s203
      %s204 = sphi 0, %s201
      %s205 = sphi 0, %s204
      %s221 = sphi 0, %s205
      %s227 = sphi 0, %s229
      %s230 = sphi 0, %s227
      %s231 = sphi 0, %s230
      %s247 = sphi 0, %s231
      %s253 = sphi 0, %s255
      %s256 = sphi 0, %s253
      %s257 = sphi 0, %s256
      %s273 = sphi 0, %s257
      %s279 = sphi 0, %s281
      %s282 = sphi 0, %s279
      %s283 = sphi 0, %s282
      %s299 = sphi 0, %s283
      %s305 = sphi 0, %s307
      %s308 = sphi 0, %s305
      %s309 = sphi 0, %s308
      %s325 = sphi 0, %s309
      %s331 = sphi 0, %s333
      %s334 = sphi 0, %s331
      %s335 = sphi 0, %s334
      %s351 = sphi 0, %s335
      %s357 = sphi 0, %s359
      %s360 = sphi 0, %s357
      %s361 = sphi 0, %s360
      %s377 = sphi 0, %s361
      %s383 = sphi 0, %s385
      %s386 = sphi 0, %s383
      %s387 = sphi 0, %s386
      %s403 = sphi 0, %s387
      %s409 = sphi 0, %s411
      %s412 = sphi 0, %s409
      %s413 = sphi 0, %s412
      %s429 = sphi 0, %s413
      %s435 = sphi 0, %s437
      %s438 = sphi 0, %s435
      %s439 = sphi 0, %s438
      %s455 = sphi 0, %s439
      %s459 = sphi 0, %s459
      %s461 = sphi 0, %s459
      %s462 = sphi 0, %s461
      %s476 = sphi 0, %s462
      %s480 = sphi 0, %s480
      %s482 = sphi 0, %s480
      %s483 = sphi 0, %s482
      %s497 = sphi 0, %s483
      %s501 = sphi 0, %s501
      %s503 = sphi 0, %s501
      %s504 = sphi 0, %s503
      %s518 = sphi 0, %s504
      %s524 = sphi 0, %s526
      %s527 = sphi 0, %s524
      %s528 = sphi 0, %s527
      %s544 = sphi 0, %s528
    $region4: #{clip_forward.2} parent=1 // loop_header_branch
      %31 = sbr.rel (%p29) target = $region8
    $region5: #{clip_forward.2} parent=1 // loop_body
      %s33 = ssub.s32 %s28, 1
      %s34 = ssub.s32 %s28, 2
      %s41 = sadd.s32 1, %s36
      %p42 = scmp.ge.s32.totalorder %s41, 2
      %s43 = scalar_select %p42, 0, %s41
      %s44 = sadd.s32 1, %s35
      %s45 = scalar_select %p42, %s44, %s35
      %p46 = scmp.ge.s32.totalorder %s45, 2
      %s47 = scalar_select %p46, 0, %s45
      %s48 = ssub.s32 %s35, %s47
      %p49 = scmp.eq.s32.totalorder %s48, 0
      %s51 = sadd.s32 %s50, 1
      %s52 = scalar_select %p49, %s50, %s51
      %p55 = pneg %p49
      %p56 = scmp.eq.s32.totalorder %s28, 3
      %p57 = por %p55, %p56
      %p58 = scmp.ne.s32.totalorder %s50, %s53
      %p59 = scmp.eq.s32.totalorder %s28, 0
      %p60 = por %p58, %p59
      %p61 = scmp.ne.s32.totalorder %s50, %s53
      %p62 = scmp.eq.s32.totalorder %s33, 3
      %p63 = por %p61, %p62
      %p64 = scmp.ne.s32.totalorder %s53, %s54
      %p65 = scmp.eq.s32.totalorder %s33, 0
      %p66 = por %p64, %p65
      %p67 = scmp.ne.s32.totalorder %s53, %s54
      %p68 = scmp.eq.s32.totalorder %s34, 3
      %p69 = por %p67, %p68
      %p71 = scmp.ne.s32.totalorder %s54, %s70
      %p72 = scmp.eq.s32.totalorder %s34, 0
      %p73 = por %p71, %p72
      %s75 = sadd.s32 %s74, 1
      %p78 = scmp.eq.s32.totalorder %s28, 3
      %p79 = scmp.ne.s32.totalorder %s74, %s76
      %p80 = scmp.eq.s32.totalorder %s28, 0
      %p81 = por %p79, %p80
      %p82 = scmp.ne.s32.totalorder %s74, %s76
      %p83 = scmp.eq.s32.totalorder %s33, 3
      %p84 = por %p82, %p83
      %p85 = scmp.ne.s32.totalorder %s76, %s77
      %p86 = scmp.eq.s32.totalorder %s33, 0
      %p87 = por %p85, %p86
      %p88 = scmp.ne.s32.totalorder %s76, %s77
      %p89 = scmp.eq.s32.totalorder %s34, 3
      %p90 = por %p88, %p89
      %p92 = scmp.ne.s32.totalorder %s77, %s91
      %p93 = scmp.eq.s32.totalorder %s34, 0
      %p94 = por %p92, %p93
      %s95 = ssub.s32 %s35, %s47
      %p96 = scmp.eq.s32.totalorder %s95, 0
      %s98 = sadd.s32 %s97, 1
      %s99 = scalar_select %p96, %s97, %s98
      %p102 = pneg %p96
      %p103 = scmp.eq.s32.totalorder %s28, 3
      %p104 = por %p102, %p103
      %p105 = scmp.ne.s32.totalorder %s97, %s100
      %p106 = scmp.eq.s32.totalorder %s28, 0
      %p107 = por %p105, %p106
      %p108 = scmp.ne.s32.totalorder %s97, %s100
      %p109 = scmp.eq.s32.totalorder %s33, 3
      %p110 = por %p108, %p109
      %p111 = scmp.ne.s32.totalorder %s100, %s101
      %p112 = scmp.eq.s32.totalorder %s33, 0
      %p113 = por %p111, %p112
      %p114 = scmp.ne.s32.totalorder %s100, %s101
      %p115 = scmp.eq.s32.totalorder %s34, 3
      %p116 = por %p114, %p115
      %p118 = scmp.ne.s32.totalorder %s101, %s117
      %p119 = scmp.eq.s32.totalorder %s34, 0
      %p120 = por %p118, %p119
      %s121 = ssub.s32 %s35, %s47
      %p122 = scmp.eq.s32.totalorder %s121, 0
      %s124 = sadd.s32 %s123, 1
      %s125 = scalar_select %p122, %s123, %s124
      %p128 = pneg %p122
      %p129 = scmp.eq.s32.totalorder %s28, 3
      %p130 = por %p128, %p129
      %p131 = scmp.ne.s32.totalorder %s123, %s126
      %p132 = scmp.eq.s32.totalorder %s28, 0
      %p133 = por %p131, %p132
      %p134 = scmp.ne.s32.totalorder %s123, %s126
      %p135 = scmp.eq.s32.totalorder %s33, 3
      %p136 = por %p134, %p135
      %p137 = scmp.ne.s32.totalorder %s126, %s127
      %p138 = scmp.eq.s32.totalorder %s33, 0
      %p139 = por %p137, %p138
      %p140 = scmp.ne.s32.totalorder %s126, %s127
      %p141 = scmp.eq.s32.totalorder %s34, 3
      %p142 = por %p140, %p141
      %p144 = scmp.ne.s32.totalorder %s127, %s143
      %p145 = scmp.eq.s32.totalorder %s34, 0
      %p146 = por %p144, %p145
      %s147 = ssub.s32 %s36, %s43
      %p148 = scmp.eq.s32.totalorder %s147, 0
      %s150 = sadd.s32 %s149, 1
      %s151 = scalar_select %p148, %s149, %s150
      %p154 = pneg %p148
      %p155 = scmp.eq.s32.totalorder %s28, 3
      %p156 = por %p154, %p155
      %p157 = scmp.ne.s32.totalorder %s149, %s152
      %p158 = scmp.eq.s32.totalorder %s28, 0
      %p159 = por %p157, %p158
      %p160 = scmp.ne.s32.totalorder %s149, %s152
      %p161 = scmp.eq.s32.totalorder %s33, 3
      %p162 = por %p160, %p161
      %p163 = scmp.ne.s32.totalorder %s152, %s153
      %p164 = scmp.eq.s32.totalorder %s33, 0
      %p165 = por %p163, %p164
      %p166 = scmp.ne.s32.totalorder %s152, %s153
      %p167 = scmp.eq.s32.totalorder %s34, 3
      %p168 = por %p166, %p167
      %p170 = scmp.ne.s32.totalorder %s153, %s169
      %p171 = scmp.eq.s32.totalorder %s34, 0
      %p172 = por %p170, %p171
      %s173 = ssub.s32 %s36, %s43
      %p174 = scmp.eq.s32.totalorder %s173, 0
      %s176 = sadd.s32 %s175, 1
      %s177 = scalar_select %p174, %s175, %s176
      %p180 = pneg %p174
      %p181 = scmp.eq.s32.totalorder %s28, 3
      %p182 = por %p180, %p181
      %p183 = scmp.ne.s32.totalorder %s175, %s178
      %p184 = scmp.eq.s32.totalorder %s28, 0
      %p185 = por %p183, %p184
      %p186 = scmp.ne.s32.totalorder %s175, %s178
      %p187 = scmp.eq.s32.totalorder %s33, 3
      %p188 = por %p186, %p187
      %p189 = scmp.ne.s32.totalorder %s178, %s179
      %p190 = scmp.eq.s32.totalorder %s33, 0
      %p191 = por %p189, %p190
      %p192 = scmp.ne.s32.totalorder %s178, %s179
      %p193 = scmp.eq.s32.totalorder %s34, 3
      %p194 = por %p192, %p193
      %p196 = scmp.ne.s32.totalorder %s179, %s195
      %p197 = scmp.eq.s32.totalorder %s34, 0
      %p198 = por %p196, %p197
      %s199 = ssub.s32 %s36, %s43
      %p200 = scmp.eq.s32.totalorder %s199, 0
      %s202 = sadd.s32 %s201, 1
      %s203 = scalar_select %p200, %s201, %s202
      %p206 = pneg %p200
      %p207 = scmp.eq.s32.totalorder %s28, 3
      %p208 = por %p206, %p207
      %p209 = scmp.ne.s32.totalorder %s201, %s204
      %p210 = scmp.eq.s32.totalorder %s28, 0
      %p211 = por %p209, %p210
      %p212 = scmp.ne.s32.totalorder %s201, %s204
      %p213 = scmp.eq.s32.totalorder %s33, 3
      %p214 = por %p212, %p213
      %p215 = scmp.ne.s32.totalorder %s204, %s205
      %p216 = scmp.eq.s32.totalorder %s33, 0
      %p217 = por %p215, %p216
      %p218 = scmp.ne.s32.totalorder %s204, %s205
      %p219 = scmp.eq.s32.totalorder %s34, 3
      %p220 = por %p218, %p219
      %p222 = scmp.ne.s32.totalorder %s205, %s221
      %p223 = scmp.eq.s32.totalorder %s34, 0
      %p224 = por %p222, %p223
      %s225 = ssub.s32 %s36, %s43
      %p226 = scmp.eq.s32.totalorder %s225, 0
      %s228 = sadd.s32 %s227, 1
      %s229 = scalar_select %p226, %s227, %s228
      %p232 = pneg %p226
      %p233 = scmp.eq.s32.totalorder %s28, 3
      %p234 = por %p232, %p233
      %p235 = scmp.ne.s32.totalorder %s227, %s230
      %p236 = scmp.eq.s32.totalorder %s28, 0
      %p237 = por %p235, %p236
      %p238 = scmp.ne.s32.totalorder %s227, %s230
      %p239 = scmp.eq.s32.totalorder %s33, 3
      %p240 = por %p238, %p239
      %p241 = scmp.ne.s32.totalorder %s230, %s231
      %p242 = scmp.eq.s32.totalorder %s33, 0
      %p243 = por %p241, %p242
      %p244 = scmp.ne.s32.totalorder %s230, %s231
      %p245 = scmp.eq.s32.totalorder %s34, 3
      %p246 = por %p244, %p245
      %p248 = scmp.ne.s32.totalorder %s231, %s247
      %p249 = scmp.eq.s32.totalorder %s34, 0
      %p250 = por %p248, %p249
      %s251 = ssub.s32 %s36, %s43
      %p252 = scmp.eq.s32.totalorder %s251, 0
      %s254 = sadd.s32 %s253, 1
      %s255 = scalar_select %p252, %s253, %s254
      %p258 = pneg %p252
      %p259 = scmp.eq.s32.totalorder %s28, 3
      %p260 = por %p258, %p259
      %p261 = scmp.ne.s32.totalorder %s253, %s256
      %p262 = scmp.eq.s32.totalorder %s28, 0
      %p263 = por %p261, %p262
      %p264 = scmp.ne.s32.totalorder %s253, %s256
      %p265 = scmp.eq.s32.totalorder %s33, 3
      %p266 = por %p264, %p265
      %p267 = scmp.ne.s32.totalorder %s256, %s257
      %p268 = scmp.eq.s32.totalorder %s33, 0
      %p269 = por %p267, %p268
      %p270 = scmp.ne.s32.totalorder %s256, %s257
      %p271 = scmp.eq.s32.totalorder %s34, 3
      %p272 = por %p270, %p271
      %p274 = scmp.ne.s32.totalorder %s257, %s273
      %p275 = scmp.eq.s32.totalorder %s34, 0
      %p276 = por %p274, %p275
      %s277 = ssub.s32 %s36, %s43
      %p278 = scmp.eq.s32.totalorder %s277, 0
      %s280 = sadd.s32 %s279, 1
      %s281 = scalar_select %p278, %s279, %s280
      %p284 = pneg %p278
      %p285 = scmp.eq.s32.totalorder %s28, 3
      %p286 = por %p284, %p285
      %p287 = scmp.ne.s32.totalorder %s279, %s282
      %p288 = scmp.eq.s32.totalorder %s28, 0
      %p289 = por %p287, %p288
      %p290 = scmp.ne.s32.totalorder %s279, %s282
      %p291 = scmp.eq.s32.totalorder %s33, 3
      %p292 = por %p290, %p291
      %p293 = scmp.ne.s32.totalorder %s282, %s283
      %p294 = scmp.eq.s32.totalorder %s33, 0
      %p295 = por %p293, %p294
      %p296 = scmp.ne.s32.totalorder %s282, %s283
      %p297 = scmp.eq.s32.totalorder %s34, 3
      %p298 = por %p296, %p297
      %p300 = scmp.ne.s32.totalorder %s283, %s299
      %p301 = scmp.eq.s32.totalorder %s34, 0
      %p302 = por %p300, %p301
      %s303 = ssub.s32 %s36, %s43
      %p304 = scmp.eq.s32.totalorder %s303, 0
      %s306 = sadd.s32 %s305, 1
      %s307 = scalar_select %p304, %s305, %s306
      %p310 = pneg %p304
      %p311 = scmp.eq.s32.totalorder %s28, 3
      %p312 = por %p310, %p311
      %p313 = scmp.ne.s32.totalorder %s305, %s308
      %p314 = scmp.eq.s32.totalorder %s28, 0
      %p315 = por %p313, %p314
      %p316 = scmp.ne.s32.totalorder %s305, %s308
      %p317 = scmp.eq.s32.totalorder %s33, 3
      %p318 = por %p316, %p317
      %p319 = scmp.ne.s32.totalorder %s308, %s309
      %p320 = scmp.eq.s32.totalorder %s33, 0
      %p321 = por %p319, %p320
      %p322 = scmp.ne.s32.totalorder %s308, %s309
      %p323 = scmp.eq.s32.totalorder %s34, 3
      %p324 = por %p322, %p323
      %p326 = scmp.ne.s32.totalorder %s309, %s325
      %p327 = scmp.eq.s32.totalorder %s34, 0
      %p328 = por %p326, %p327
      %s329 = ssub.s32 %s36, %s43
      %p330 = scmp.eq.s32.totalorder %s329, 0
      %s332 = sadd.s32 %s331, 1
      %s333 = scalar_select %p330, %s331, %s332
      %p336 = pneg %p330
      %p337 = scmp.eq.s32.totalorder %s28, 3
      %p338 = por %p336, %p337
      %p339 = scmp.ne.s32.totalorder %s331, %s334
      %p340 = scmp.eq.s32.totalorder %s28, 0
      %p341 = por %p339, %p340
      %p342 = scmp.ne.s32.totalorder %s331, %s334
      %p343 = scmp.eq.s32.totalorder %s33, 3
      %p344 = por %p342, %p343
      %p345 = scmp.ne.s32.totalorder %s334, %s335
      %p346 = scmp.eq.s32.totalorder %s33, 0
      %p347 = por %p345, %p346
      %p348 = scmp.ne.s32.totalorder %s334, %s335
      %p349 = scmp.eq.s32.totalorder %s34, 3
      %p350 = por %p348, %p349
      %p352 = scmp.ne.s32.totalorder %s335, %s351
      %p353 = scmp.eq.s32.totalorder %s34, 0
      %p354 = por %p352, %p353
      %s355 = ssub.s32 %s36, %s43
      %p356 = scmp.eq.s32.totalorder %s355, 0
      %s358 = sadd.s32 %s357, 1
      %s359 = scalar_select %p356, %s357, %s358
      %p362 = pneg %p356
      %p363 = scmp.eq.s32.totalorder %s28, 3
      %p364 = por %p362, %p363
      %p365 = scmp.ne.s32.totalorder %s357, %s360
      %p366 = scmp.eq.s32.totalorder %s28, 0
      %p367 = por %p365, %p366
      %p368 = scmp.ne.s32.totalorder %s357, %s360
      %p369 = scmp.eq.s32.totalorder %s33, 3
      %p370 = por %p368, %p369
      %p371 = scmp.ne.s32.totalorder %s360, %s361
      %p372 = scmp.eq.s32.totalorder %s33, 0
      %p373 = por %p371, %p372
      %p374 = scmp.ne.s32.totalorder %s360, %s361
      %p375 = scmp.eq.s32.totalorder %s34, 3
      %p376 = por %p374, %p375
      %p378 = scmp.ne.s32.totalorder %s361, %s377
      %p379 = scmp.eq.s32.totalorder %s34, 0
      %p380 = por %p378, %p379
      %s381 = ssub.s32 %s36, %s43
      %p382 = scmp.eq.s32.totalorder %s381, 0
      %s384 = sadd.s32 %s383, 1
      %s385 = scalar_select %p382, %s383, %s384
      %p388 = pneg %p382
      %p389 = scmp.eq.s32.totalorder %s28, 3
      %p390 = por %p388, %p389
      %p391 = scmp.ne.s32.totalorder %s383, %s386
      %p392 = scmp.eq.s32.totalorder %s28, 0
      %p393 = por %p391, %p392
      %p394 = scmp.ne.s32.totalorder %s383, %s386
      %p395 = scmp.eq.s32.totalorder %s33, 3
      %p396 = por %p394, %p395
      %p397 = scmp.ne.s32.totalorder %s386, %s387
      %p398 = scmp.eq.s32.totalorder %s33, 0
      %p399 = por %p397, %p398
      %p400 = scmp.ne.s32.totalorder %s386, %s387
      %p401 = scmp.eq.s32.totalorder %s34, 3
      %p402 = por %p400, %p401
      %p404 = scmp.ne.s32.totalorder %s387, %s403
      %p405 = scmp.eq.s32.totalorder %s34, 0
      %p406 = por %p404, %p405
      %s407 = ssub.s32 %s36, %s43
      %p408 = scmp.eq.s32.totalorder %s407, 0
      %s410 = sadd.s32 %s409, 1
      %s411 = scalar_select %p408, %s409, %s410
      %p414 = pneg %p408
      %p415 = scmp.eq.s32.totalorder %s28, 3
      %p416 = por %p414, %p415
      %p417 = scmp.ne.s32.totalorder %s409, %s412
      %p418 = scmp.eq.s32.totalorder %s28, 0
      %p419 = por %p417, %p418
      %p420 = scmp.ne.s32.totalorder %s409, %s412
      %p421 = scmp.eq.s32.totalorder %s33, 3
      %p422 = por %p420, %p421
      %p423 = scmp.ne.s32.totalorder %s412, %s413
      %p424 = scmp.eq.s32.totalorder %s33, 0
      %p425 = por %p423, %p424
      %p426 = scmp.ne.s32.totalorder %s412, %s413
      %p427 = scmp.eq.s32.totalorder %s34, 3
      %p428 = por %p426, %p427
      %p430 = scmp.ne.s32.totalorder %s413, %s429
      %p431 = scmp.eq.s32.totalorder %s34, 0
      %p432 = por %p430, %p431
      %s433 = ssub.s32 %s36, %s43
      %p434 = scmp.eq.s32.totalorder %s433, 0
      %s436 = sadd.s32 %s435, 1
      %s437 = scalar_select %p434, %s435, %s436
      %p440 = pneg %p434
      %p441 = scmp.eq.s32.totalorder %s28, 3
      %p442 = por %p440, %p441
      %p443 = scmp.ne.s32.totalorder %s435, %s438
      %p444 = scmp.eq.s32.totalorder %s28, 0
      %p445 = por %p443, %p444
      %p446 = scmp.ne.s32.totalorder %s435, %s438
      %p447 = scmp.eq.s32.totalorder %s33, 3
      %p448 = por %p446, %p447
      %p449 = scmp.ne.s32.totalorder %s438, %s439
      %p450 = scmp.eq.s32.totalorder %s33, 0
      %p451 = por %p449, %p450
      %p452 = scmp.ne.s32.totalorder %s438, %s439
      %p453 = scmp.eq.s32.totalorder %s34, 3
      %p454 = por %p452, %p453
      %p456 = scmp.ne.s32.totalorder %s439, %s455
      %p457 = scmp.eq.s32.totalorder %s34, 0
      %p458 = por %p456, %p457
      %s460 = sadd.s32 %s459, 1
      %p463 = scmp.eq.s32.totalorder %s28, 3
      %p464 = scmp.ne.s32.totalorder %s459, %s461
      %p465 = scmp.eq.s32.totalorder %s28, 0
      %p466 = por %p464, %p465
      %p467 = scmp.ne.s32.totalorder %s459, %s461
      %p468 = scmp.eq.s32.totalorder %s33, 3
      %p469 = por %p467, %p468
      %p470 = scmp.ne.s32.totalorder %s461, %s462
      %p471 = scmp.eq.s32.totalorder %s33, 0
      %p472 = por %p470, %p471
      %p473 = scmp.ne.s32.totalorder %s461, %s462
      %p474 = scmp.eq.s32.totalorder %s34, 3
      %p475 = por %p473, %p474
      %p477 = scmp.ne.s32.totalorder %s462, %s476
      %p478 = scmp.eq.s32.totalorder %s34, 0
      %p479 = por %p477, %p478
      %s481 = sadd.s32 %s480, 1
      %p484 = scmp.eq.s32.totalorder %s28, 3
      %p485 = scmp.ne.s32.totalorder %s480, %s482
      %p486 = scmp.eq.s32.totalorder %s28, 0
      %p487 = por %p485, %p486
      %p488 = scmp.ne.s32.totalorder %s480, %s482
      %p489 = scmp.eq.s32.totalorder %s33, 3
      %p490 = por %p488, %p489
      %p491 = scmp.ne.s32.totalorder %s482, %s483
      %p492 = scmp.eq.s32.totalorder %s33, 0
      %p493 = por %p491, %p492
      %p494 = scmp.ne.s32.totalorder %s482, %s483
      %p495 = scmp.eq.s32.totalorder %s34, 3
      %p496 = por %p494, %p495
      %p498 = scmp.ne.s32.totalorder %s483, %s497
      %p499 = scmp.eq.s32.totalorder %s34, 0
      %p500 = por %p498, %p499
      %s502 = sadd.s32 %s501, 1
      %p505 = scmp.eq.s32.totalorder %s28, 3
      %p506 = scmp.ne.s32.totalorder %s501, %s503
      %p507 = scmp.eq.s32.totalorder %s28, 0
      %p508 = por %p506, %p507
      %p509 = scmp.ne.s32.totalorder %s501, %s503
      %p510 = scmp.eq.s32.totalorder %s33, 3
      %p511 = por %p509, %p510
      %p512 = scmp.ne.s32.totalorder %s503, %s504
      %p513 = scmp.eq.s32.totalorder %s33, 0
      %p514 = por %p512, %p513
      %p515 = scmp.ne.s32.totalorder %s503, %s504
      %p516 = scmp.eq.s32.totalorder %s34, 3
      %p517 = por %p515, %p516
      %p519 = scmp.ne.s32.totalorder %s504, %s518
      %p520 = scmp.eq.s32.totalorder %s34, 0
      %p521 = por %p519, %p520
      %s522 = ssub.s32 %s35, %s47
      %p523 = scmp.eq.s32.totalorder %s522, 0
      %s525 = sadd.s32 %s524, 1
      %s526 = scalar_select %p523, %s524, %s525
      %p529 = pneg %p523
      %p530 = scmp.eq.s32.totalorder %s28, 3
      %p531 = por %p529, %p530
      %p532 = scmp.ne.s32.totalorder %s524, %s527
      %p533 = scmp.eq.s32.totalorder %s28, 0
      %p534 = por %p532, %p533
      %p535 = scmp.ne.s32.totalorder %s524, %s527
      %p536 = scmp.eq.s32.totalorder %s33, 3
      %p537 = por %p535, %p536
      %p538 = scmp.ne.s32.totalorder %s527, %s528
      %p539 = scmp.eq.s32.totalorder %s33, 0
      %p540 = por %p538, %p539
      %p541 = scmp.ne.s32.totalorder %s527, %s528
      %p542 = scmp.eq.s32.totalorder %s34, 3
      %p543 = por %p541, %p542
      %p545 = scmp.ne.s32.totalorder %s528, %s544
      %p546 = scmp.eq.s32.totalorder %s34, 0
      %p547 = por %p545, %p546
      %p548 = scmp.le.s32.totalorder 1, %s28
      %p549 = scmp.lt.s32.totalorder %s28, 5
      %p550 = pnand %p548, %p549
      %p551 = pneg %p550
      // Predicated region
      $region9: #{clip_forward.2} parent=5 // pred_check
        _
      $region10: #{clip_forward.2} parent=5 // pred_check_branch
        %553 = sbr.rel (%p550) target = $region12
      $region11: #{clip_forward.2} parent=5 // pred_region
        %s554 = ssub.s32 %s28, 1
        // Predicated region
        $region13: #{clip_forward.2} parent=11 // pred_check
          %p555 = pneg %p87
        $region14: #{clip_forward.2} parent=11 // pred_check_branch
          %557 = sbr.rel (%p555) target = $region16
        $region15: #{clip_forward.2} parent=11 // pred_region
          _
        $region16: #{clip_forward.2} parent=11 // pred_fallthru
          _
        // Predicated region
        $region17: #{clip_forward.2} parent=11 // pred_check
          %p558 = pneg %p472
        $region18: #{clip_forward.2} parent=11 // pred_check_branch
          %560 = sbr.rel (%p558) target = $region20
        $region19: #{clip_forward.2} parent=11 // pred_region
          _
        $region20: #{clip_forward.2} parent=11 // pred_fallthru
          _
        // Predicated region
        $region21: #{clip_forward.2} parent=11 // pred_check
          %p561 = pneg %p493
        $region22: #{clip_forward.2} parent=11 // pred_check_branch
          %563 = sbr.rel (%p561) target = $region24
        $region23: #{clip_forward.2} parent=11 // pred_region
          _
        $region24: #{clip_forward.2} parent=11 // pred_fallthru
          _
        // Predicated region
        $region25: #{clip_forward.2} parent=11 // pred_check
          %p564 = pneg %p514
        $region26: #{clip_forward.2} parent=11 // pred_check_branch
          %566 = sbr.rel (%p564) target = $region28
        $region27: #{clip_forward.2} parent=11 // pred_region
          _
        $region28: #{clip_forward.2} parent=11 // pred_fallthru
          _
      $region12: #{clip_forward.2} parent=5 // pred_fallthru
        _
      %p567 = scmp.lt.s32.totalorder %s28, 4
      // Predicated region
      $region29: #{clip_forward.2} parent=5 // pred_check
        %p568 = pneg %p567
      $region30: #{clip_forward.2} parent=5 // pred_check_branch
        %570 = sbr.rel (%p568) target = $region32
      $region31: #{clip_forward.2} parent=5 // pred_region
        // Predicated region
        $region33: #{clip_forward.2} parent=31 // pred_check
          %p571 = pneg %p60
        $region34: #{clip_forward.2} parent=31 // pred_check_branch
          %573 = sbr.rel (%p571) target = $region36
        $region35: #{clip_forward.2} parent=31 // pred_region
          %p574 = scmp.lt.s32.totalorder %s35, 1
          %s575 = scalar_select %p574, %s35, 1
          %s576 = smul.addr %s575, 8
          %s577 = scalar_lea.vmem %s0, %s576
        $region36: #{clip_forward.2} parent=31 // pred_fallthru
          _
        // Predicated region
        $region37: #{clip_forward.2} parent=31 // pred_check
          %p578 = pneg %p107
        $region38: #{clip_forward.2} parent=31 // pred_check_branch
          %580 = sbr.rel (%p578) target = $region40
        $region39: #{clip_forward.2} parent=31 // pred_region
          %p581 = scmp.lt.s32.totalorder %s35, 1
          %s582 = scalar_select %p581, %s35, 1
          %s583 = scalar_lea.vmem %s2, %s582
        $region40: #{clip_forward.2} parent=31 // pred_fallthru
          _
        // Predicated region
        $region41: #{clip_forward.2} parent=31 // pred_check
          %p584 = pneg %p133
        $region42: #{clip_forward.2} parent=31 // pred_check_branch
          %586 = sbr.rel (%p584) target = $region44
        $region43: #{clip_forward.2} parent=31 // pred_region
          %p587 = scmp.lt.s32.totalorder %s35, 1
          %s588 = scalar_select %p587, %s35, 1
          %s589 = smul.addr %s588, 8
          %s590 = scalar_lea.vmem %s3, %s589
        $region44: #{clip_forward.2} parent=31 // pred_fallthru
          _
        // Predicated region
        $region45: #{clip_forward.2} parent=31 // pred_check
          %p591 = pneg %p159
        $region46: #{clip_forward.2} parent=31 // pred_check_branch
          %593 = sbr.rel (%p591) target = $region48
        $region47: #{clip_forward.2} parent=31 // pred_region
          %p594 = scmp.lt.s32.totalorder %s36, 1
          %s595 = scalar_select %p594, %s36, 1
          %s596 = scalar_lea.vmem %s4, %s595
        $region48: #{clip_forward.2} parent=31 // pred_fallthru
          _
        // Predicated region
        $region49: #{clip_forward.2} parent=31 // pred_check
          %p597 = pneg %p185
        $region50: #{clip_forward.2} parent=31 // pred_check_branch
          %599 = sbr.rel (%p597) target = $region52
        $region51: #{clip_forward.2} parent=31 // pred_region
          %p600 = scmp.lt.s32.totalorder %s36, 1
          %s601 = scalar_select %p600, %s36, 1
          %s602 = scalar_lea.vmem %s5, %s601
        $region52: #{clip_forward.2} parent=31 // pred_fallthru
          _
        // Predicated region
        $region53: #{clip_forward.2} parent=31 // pred_check
          %p603 = pneg %p211
        $region54: #{clip_forward.2} parent=31 // pred_check_branch
          %605 = sbr.rel (%p603) target = $region56
        $region55: #{clip_forward.2} parent=31 // pred_region
          %p606 = scmp.lt.s32.totalorder %s36, 1
          %s607 = scalar_select %p606, %s36, 1
          %s608 = smul.addr %s607, 4
          %s609 = smul.addr %s608, 4
          %s610 = scalar_lea.vmem %s6, %s609
        $region56: #{clip_forward.2} parent=31 // pred_fallthru
          _
        // Predicated region
        $region57: #{clip_forward.2} parent=31 // pred_check
          %p611 = pneg %p237
        $region58: #{clip_forward.2} parent=31 // pred_check_branch
          %613 = sbr.rel (%p611) target = $region60
        $region59: #{clip_forward.2} parent=31 // pred_region
          %p614 = scmp.lt.s32.totalorder %s36, 1
          %s615 = scalar_select %p614, %s36, 1
          %s616 = scalar_lea.vmem %s7, %s615
        $region60: #{clip_forward.2} parent=31 // pred_fallthru
          _
        // Predicated region
        $region61: #{clip_forward.2} parent=31 // pred_check
          %p617 = pneg %p263
        $region62: #{clip_forward.2} parent=31 // pred_check_branch
          %619 = sbr.rel (%p617) target = $region64
        $region63: #{clip_forward.2} parent=31 // pred_region
          %p620 = scmp.lt.s32.totalorder %s36, 1
          %s621 = scalar_select %p620, %s36, 1
          %s622 = smul.addr %s621, 4
          %s623 = smul.addr %s622, 4
          %s624 = scalar_lea.vmem %s8, %s623
        $region64: #{clip_forward.2} parent=31 // pred_fallthru
          _
        // Predicated region
        $region65: #{clip_forward.2} parent=31 // pred_check
          %p625 = pneg %p289
        $region66: #{clip_forward.2} parent=31 // pred_check_branch
          %627 = sbr.rel (%p625) target = $region68
        $region67: #{clip_forward.2} parent=31 // pred_region
          %p628 = scmp.lt.s32.totalorder %s36, 1
          %s629 = scalar_select %p628, %s36, 1
          %s630 = scalar_lea.vmem %s9, %s629
        $region68: #{clip_forward.2} parent=31 // pred_fallthru
          _
        // Predicated region
        $region69: #{clip_forward.2} parent=31 // pred_check
          %p631 = pneg %p315
        $region70: #{clip_forward.2} parent=31 // pred_check_branch
          %633 = sbr.rel (%p631) target = $region72
        $region71: #{clip_forward.2} parent=31 // pred_region
          %p634 = scmp.lt.s32.totalorder %s36, 1
          %s635 = scalar_select %p634, %s36, 1
          %s636 = scalar_lea.vmem %s10, %s635
        $region72: #{clip_forward.2} parent=31 // pred_fallthru
          _
        // Predicated region
        $region73: #{clip_forward.2} parent=31 // pred_check
          %p637 = pneg %p341
        $region74: #{clip_forward.2} parent=31 // pred_check_branch
          %639 = sbr.rel (%p637) target = $region76
        $region75: #{clip_forward.2} parent=31 // pred_region
          %p640 = scmp.lt.s32.totalorder %s36, 1
          %s641 = scalar_select %p640, %s36, 1
          %s642 = scalar_lea.vmem %s11, %s641
        $region76: #{clip_forward.2} parent=31 // pred_fallthru
          _
        // Predicated region
        $region77: #{clip_forward.2} parent=31 // pred_check
          %p643 = pneg %p367
        $region78: #{clip_forward.2} parent=31 // pred_check_branch
          %645 = sbr.rel (%p643) target = $region80
        $region79: #{clip_forward.2} parent=31 // pred_region
          %p646 = scmp.lt.s32.totalorder %s36, 1
          %s647 = scalar_select %p646, %s36, 1
          %s648 = smul.addr %s647, 4
          %s649 = smul.addr %s648, 4
          %s650 = scalar_lea.vmem %s12, %s649
        $region80: #{clip_forward.2} parent=31 // pred_fallthru
          _
        // Predicated region
        $region81: #{clip_forward.2} parent=31 // pred_check
          %p651 = pneg %p393
        $region82: #{clip_forward.2} parent=31 // pred_check_branch
          %653 = sbr.rel (%p651) target = $region84
        $region83: #{clip_forward.2} parent=31 // pred_region
          %p654 = scmp.lt.s32.totalorder %s36, 1
          %s655 = scalar_select %p654, %s36, 1
          %s656 = scalar_lea.vmem %s13, %s655
        $region84: #{clip_forward.2} parent=31 // pred_fallthru
          _
        // Predicated region
        $region85: #{clip_forward.2} parent=31 // pred_check
          %p657 = pneg %p419
        $region86: #{clip_forward.2} parent=31 // pred_check_branch
          %659 = sbr.rel (%p657) target = $region88
        $region87: #{clip_forward.2} parent=31 // pred_region
          %p660 = scmp.lt.s32.totalorder %s36, 1
          %s661 = scalar_select %p660, %s36, 1
          %s662 = smul.addr %s661, 16
          %s663 = smul.addr %s662, 4
          %s664 = scalar_lea.vmem %s14, %s663
        $region88: #{clip_forward.2} parent=31 // pred_fallthru
          _
        // Predicated region
        $region89: #{clip_forward.2} parent=31 // pred_check
          %p665 = pneg %p445
        $region90: #{clip_forward.2} parent=31 // pred_check_branch
          %667 = sbr.rel (%p665) target = $region92
        $region91: #{clip_forward.2} parent=31 // pred_region
          %p668 = scmp.lt.s32.totalorder %s36, 1
          %s669 = scalar_select %p668, %s36, 1
          %s670 = scalar_lea.vmem %s15, %s669
        $region92: #{clip_forward.2} parent=31 // pred_fallthru
          _
      $region32: #{clip_forward.2} parent=5 // pred_fallthru
        _
      %p671 = scmp.le.s32.totalorder 1, %s28
      %p672 = scmp.lt.s32.totalorder %s28, 5
      %p673 = pnand %p671, %p672
      %p674 = pneg %p673
      // Predicated region
      $region93: #{clip_forward.2} parent=5 // pred_check
        _
      $region94: #{clip_forward.2} parent=5 // pred_check_branch
        %676 = sbr.rel (%p673) target = $region96
      $region95: #{clip_forward.2} parent=5 // pred_region
        %s677 = ssub.s32 %s28, 1
        %p678 = scmp.lt.s32.totalorder %s37, 1
        %s679 = scalar_select %p678, %s37, 1
        %s680 = smul.addr %s679, 8
        %s681 = scalar_lea.vmem %s0, %s680
        %p682 = pneg %p66
        %p683 = pneg %p63
        %p684 = pneg %p87
        %p685 = pneg %p84
        %p686 = scmp.lt.s32.totalorder %s37, 1
        %s687 = scalar_select %p686, %s37, 1
        %s688 = scalar_lea.vmem %s2, %s687
        %p689 = pneg %p113
        %p690 = pneg %p110
        %p691 = scmp.lt.s32.totalorder %s37, 1
        %s692 = scalar_select %p691, %s37, 1
        %s693 = smul.addr %s692, 8
        %s694 = scalar_lea.vmem %s3, %s693
        %p695 = pneg %p139
        %p696 = pneg %p136
        %p697 = scmp.lt.s32.totalorder %s38, 1
        %s698 = scalar_select %p697, %s38, 1
        %s699 = scalar_lea.vmem %s4, %s698
        %p700 = pneg %p165
        %p701 = pneg %p162
        %p702 = scmp.lt.s32.totalorder %s38, 1
        %s703 = scalar_select %p702, %s38, 1
        %s704 = scalar_lea.vmem %s5, %s703
        %p705 = pneg %p191
        %p706 = pneg %p188
        %p707 = scmp.lt.s32.totalorder %s38, 1
        %s708 = scalar_select %p707, %s38, 1
        %s709 = smul.addr %s708, 4
        %s710 = smul.addr %s709, 4
        %s711 = scalar_lea.vmem %s6, %s710
        %p712 = pneg %p217
        %p713 = pneg %p214
        %p714 = scmp.lt.s32.totalorder %s38, 1
        %s715 = scalar_select %p714, %s38, 1
        %s716 = scalar_lea.vmem %s7, %s715
        %p717 = pneg %p243
        %p718 = pneg %p240
        %p719 = scmp.lt.s32.totalorder %s38, 1
        %s720 = scalar_select %p719, %s38, 1
        %s721 = smul.addr %s720, 4
        %s722 = smul.addr %s721, 4
        %s723 = scalar_lea.vmem %s8, %s722
        %p724 = pneg %p269
        %p725 = pneg %p266
        %p726 = scmp.lt.s32.totalorder %s38, 1
        %s727 = scalar_select %p726, %s38, 1
        %s728 = scalar_lea.vmem %s9, %s727
        %p729 = pneg %p295
        %p730 = pneg %p292
        %p731 = scmp.lt.s32.totalorder %s38, 1
        %s732 = scalar_select %p731, %s38, 1
        %s733 = scalar_lea.vmem %s10, %s732
        %p734 = pneg %p321
        %p735 = pneg %p318
        %p736 = scmp.lt.s32.totalorder %s38, 1
        %s737 = scalar_select %p736, %s38, 1
        %s738 = scalar_lea.vmem %s11, %s737
        %p739 = pneg %p347
        %p740 = pneg %p344
        %p741 = scmp.lt.s32.totalorder %s38, 1
        %s742 = scalar_select %p741, %s38, 1
        %s743 = smul.addr %s742, 4
        %s744 = smul.addr %s743, 4
        %s745 = scalar_lea.vmem %s12, %s744
        %p746 = pneg %p373
        %p747 = pneg %p370
        %p748 = scmp.lt.s32.totalorder %s38, 1
        %s749 = scalar_select %p748, %s38, 1
        %s750 = scalar_lea.vmem %s13, %s749
        %p751 = pneg %p399
        %p752 = pneg %p396
        %p753 = scmp.lt.s32.totalorder %s38, 1
        %s754 = scalar_select %p753, %s38, 1
        %s755 = smul.addr %s754, 16
        %s756 = smul.addr %s755, 4
        %s757 = scalar_lea.vmem %s14, %s756
        %p758 = pneg %p425
        %p759 = pneg %p422
        %p760 = scmp.lt.s32.totalorder %s38, 1
        %s761 = scalar_select %p760, %s38, 1
        %s762 = scalar_lea.vmem %s15, %s761
        %p763 = pneg %p451
        %p764 = pneg %p448
        %p765 = pneg %p472
        %p766 = pneg %p469
        %p767 = pneg %p493
        %p768 = pneg %p490
        %p769 = pneg %p514
        %p770 = pneg %p511
        %p771 = pneg %p540
        %p772 = pneg %p537
        %s773 = sand.u32 %s527, 1
        %s774 = scalar_lea.sflag [#allocation4], %s773
        %s775 = sand.u32 %s527, 1
        %s776 = scalar_lea.vmem [#allocation3], %s775
        %p777 = scmp.lt.s32.totalorder %s37, 1
        %s778 = scalar_select %p777, %s37, 1
        %s779 = smul.addr %s778, 8
        %s780 = scalar_lea.vmem %s0, %s779
        %p781 = scmp.lt.s32.totalorder %s37, 1
        %s782 = scalar_select %p781, %s37, 1
        %s783 = scalar_lea.vmem %s2, %s782
        %p784 = scmp.lt.s32.totalorder %s37, 1
        %s785 = scalar_select %p784, %s37, 1
        %s786 = smul.addr %s785, 8
        %s787 = scalar_lea.vmem %s3, %s786
        %p788 = scmp.lt.s32.totalorder %s38, 1
        %s789 = scalar_select %p788, %s38, 1
        %s790 = scalar_lea.vmem %s4, %s789
        %p791 = scmp.lt.s32.totalorder %s38, 1
        %s792 = scalar_select %p791, %s38, 1
        %s793 = scalar_lea.vmem %s5, %s792
        %p794 = scmp.lt.s32.totalorder %s38, 1
        %s795 = scalar_select %p794, %s38, 1
        %s796 = smul.addr %s795, 4
        %s797 = smul.addr %s796, 4
        %s798 = scalar_lea.vmem %s6, %s797
        %p799 = scmp.lt.s32.totalorder %s38, 1
        %s800 = scalar_select %p799, %s38, 1
        %s801 = scalar_lea.vmem %s7, %s800
        %p802 = scmp.lt.s32.totalorder %s38, 1
        %s803 = scalar_select %p802, %s38, 1
        %s804 = smul.addr %s803, 4
        %s805 = smul.addr %s804, 4
        %s806 = scalar_lea.vmem %s8, %s805
        %p807 = scmp.lt.s32.totalorder %s38, 1
        %s808 = scalar_select %p807, %s38, 1
        %s809 = scalar_lea.vmem %s9, %s808
        %p810 = scmp.lt.s32.totalorder %s38, 1
        %s811 = scalar_select %p810, %s38, 1
        %s812 = scalar_lea.vmem %s10, %s811
        %p813 = scmp.lt.s32.totalorder %s38, 1
        %s814 = scalar_select %p813, %s38, 1
        %s815 = scalar_lea.vmem %s11, %s814
        %p816 = scmp.lt.s32.totalorder %s38, 1
        %s817 = scalar_select %p816, %s38, 1
        %s818 = smul.addr %s817, 4
        %s819 = smul.addr %s818, 4
        %s820 = scalar_lea.vmem %s12, %s819
        %p821 = scmp.lt.s32.totalorder %s38, 1
        %s822 = scalar_select %p821, %s38, 1
        %s823 = scalar_lea.vmem %s13, %s822
        %p824 = scmp.lt.s32.totalorder %s38, 1
        %s825 = scalar_select %p824, %s38, 1
        %s826 = smul.addr %s825, 16
        %s827 = smul.addr %s826, 4
        %s828 = scalar_lea.vmem %s14, %s827
        %p829 = scmp.lt.s32.totalorder %s38, 1
        %s830 = scalar_select %p829, %s38, 1
        %s831 = scalar_lea.vmem %s15, %s830
        %p833 = scmp.eq.s32.totalorder %s38, 0
        // Predicated region
        $region97: #{clip_forward.2} parent=95 // pred_check
          %p834 = pneg %p833
        $region98: #{clip_forward.2} parent=95 // pred_check_branch
          %836 = sbr.rel (%p834) target = $region100
        $region99: #{clip_forward.2} parent=95 // pred_region
          %v837 = vld [vmem:[%s780] sm:$0xff]
          %v838 = vld [vmem:[%s1] sm:$0xff]
          %v839 = vadd.f32 %v837, %v838
          %vm840 = vcmask 261120
          %841 = vst.msk [vmem:[#allocation2] sm:$0xff] %vm840, %v839
        $region100: #{clip_forward.2} parent=95 // pred_fallthru
          _
        %v842 = vlaneseq
        %v843 = vshrl.u32 %v842, 7
        %v844 = vlaneseq
        %v845 = vand.u32 %v844, 127
        %vm846 = vcmp.le.s32.totalorder %v845, %v843
        %v847 = vsel %vm846, 0.0, -1e+09
        %v848 = vld [vmem:[%s783] sm:$0x1]
        %v850 = vlaneseq
        %v851 = vshrl.u32 %v850, 7
        %v852 = vsub.s32 0, %v851
        %v853 = vrot.slane %v848, %v852
        %v855 = vadd.f32 %v847, %v853
        %v856 = vld [vmem:[#allocation2] sm:$0xff]
        %v857 = vld [vmem:[%s790] sm:$0x1]
        %v858 = vld [vmem:[%s793] sm:$0x1]
        %v859 = vld [vmem:[%s798] sm:$0xf]
        %v860 = vld [vmem:[%s798 + $0x4] sm:$0xf]
        %v861 = vld [vmem:[%s798 + $0x8] sm:$0xf]
        %v862 = vld [vmem:[%s798 + $0xc] sm:$0xf]
        %v863 = vld [vmem:[%s801] sm:$0x1]
        %v864 = vld [vmem:[%s806] sm:$0xf]
        %v865 = vld [vmem:[%s806 + $0x4] sm:$0xf]
        %v866 = vld [vmem:[%s806 + $0x8] sm:$0xf]
        %v867 = vld [vmem:[%s806 + $0xc] sm:$0xf]
        %v868 = vld [vmem:[%s809] sm:$0x1]
        %v869 = vld [vmem:[%s812] sm:$0x1]
        %v870 = vld [vmem:[%s815] sm:$0x1]
        %v871 = vld [vmem:[%s820] sm:$0xf]
        %v872 = vld [vmem:[%s820 + $0x4] sm:$0xf]
        %v873 = vld [vmem:[%s820 + $0x8] sm:$0xf]
        %v874 = vld [vmem:[%s820 + $0xc] sm:$0xf]
        %v875 = vld [vmem:[%s823] sm:$0x1]
        %v876 = vld [vmem:[%s828] sm:$0xf]
        %v877 = vld [vmem:[%s828 + $0x4] sm:$0xf]
        %v878 = vld [vmem:[%s828 + $0x8] sm:$0xf]
        %v879 = vld [vmem:[%s828 + $0xc] sm:$0xf]
        %v880 = vld [vmem:[%s828 + $0x10] sm:$0xf]
        %v881 = vld [vmem:[%s828 + $0x14] sm:$0xf]
        %v882 = vld [vmem:[%s828 + $0x18] sm:$0xf]
        %v883 = vld [vmem:[%s828 + $0x1c] sm:$0xf]
        %v884 = vld [vmem:[%s828 + $0x20] sm:$0xf]
        %v885 = vld [vmem:[%s828 + $0x24] sm:$0xf]
        %v886 = vld [vmem:[%s828 + $0x28] sm:$0xf]
        %v887 = vld [vmem:[%s828 + $0x2c] sm:$0xf]
        %v888 = vld [vmem:[%s828 + $0x30] sm:$0xf]
        %v889 = vld [vmem:[%s828 + $0x34] sm:$0xf]
        %v890 = vld [vmem:[%s828 + $0x38] sm:$0xf]
        %v891 = vld [vmem:[%s828 + $0x3c] sm:$0xf]
        %v892 = vld [vmem:[%s831] sm:$0x1]
        %vm893 = vcmask 261120
        %v894 = vsel %vm893, %v856, 0.0
        %895 = vadd.xlane.f32.xlu0 %v894
        %v896 = vpop.xlane.xlu0 %895
        %v897 = vrcp.pop 32.0
        %v898 = vmul.f32 %v896, %v897
        %v899 = vsub.f32 %v856, %v898
        %v900 = vmul.f32 %v899, %v899
        %v901 = vsel %vm893, %v900, 0.0
        %902 = vadd.xlane.f32.xlu0 %v901
        %v903 = vpop.xlane.xlu0 %902
        %v904 = vmul.f32 %v903, %v897
        %v905 = vadd.f32 %v904, 1e-05
        %v906 = vrsqrt.pop %v905
        %v907 = vmul.f32 %v899, %v906
        %v909 = vlaneseq
        %v910 = vshrl.u32 %v909, 7
        %v911 = vsub.s32 0, %v910
        %v912 = vrot.slane %v857, %v911
        %v914 = vmul.f32 %v907, %v912
        %v916 = vlaneseq
        %v917 = vshrl.u32 %v916, 7
        %v918 = vsub.s32 0, %v917
        %v919 = vrot.slane %v858, %v918
        %v921 = vadd.f32 %v914, %v919
        %v922 = vpack.c.bf16 %v921, %v921
        %v924 = vlaneseq
        %v925 = vshrl.u32 %v924, 7
        %v926 = vsub.s32 0, %v925
        %v927 = vrot.slane %v863, %v926
        %v933 = vunpack.c.l.b16 %v859
        %v934 = vunpack.c.l.b16 %v860
        %v935 = vunpack.c.l.b16 %v861
        %v936 = vunpack.c.l.b16 %v862
        %v937 = vpack.c.b16 %v934, %v933
        %v938 = vpack.c.b16 %v936, %v935
        %v942 = vsel %vm893, %v922, 0
        %944 = vmatprep.subr.bf16.mxu0 0
        %945 = vmatpush1.bf16.msra.mxu0 %v937
        %946 = vmatprep.subr.bf16.mxu0 0
        %947 = vmatpush1.bf16.msra.mxu0 %v938
        %948 = vmatprep.subr.bf16.mxu0 0
        %949 = vmatpush1.bf16.msra.mxu0 0
        %950 = vmatprep.subr.bf16.mxu0 0
        %951 = vmatpush1.bf16.msra.mxu0 0
        %952 = vmatprep.subr.bf16.mxu0 0
        %953 = vmatpush1.bf16.msra.mxu0 0
        %954 = vmatprep.subr.bf16.mxu0 0
        %955 = vmatpush1.bf16.msra.mxu0 0
        %956 = vmatprep.subr.bf16.mxu0 0
        %957 = vmatpush1.bf16.msra.mxu0 0
        %958 = vmatprep.subr.bf16.mxu0 0
        %959 = vmatpush1.bf16.msra.mxu0 0
        %960 = vmatprep.subr.bf16.mxu0 0
        %961 = vmatpush1.bf16.msra.mxu0 0
        %962 = vmatprep.subr.bf16.mxu0 0
        %963 = vmatpush1.bf16.msra.mxu0 0
        %964 = vmatprep.subr.bf16.mxu0 0
        %965 = vmatpush1.bf16.msra.mxu0 0
        %966 = vmatprep.subr.bf16.mxu0 0
        %967 = vmatpush1.bf16.msra.mxu0 0
        %968 = vmatprep.subr.bf16.mxu0 0
        %969 = vmatpush1.bf16.msra.mxu0 0
        %970 = vmatprep.subr.bf16.mxu0 0
        %971 = vmatpush1.bf16.msra.mxu0 0
        %972 = vmatprep.subr.bf16.mxu0 0
        %973 = vmatpush1.bf16.msra.mxu0 0
        %974 = vmatprep.subr.bf16.mxu0 0
        %975 = vmatpush1.bf16.msra.mxu0 0
        %976 = vmatprep.mubr.bf16.mxu0 0
        %977 = vmatmul.mubr.bf16.gmra.mrb[0].mxu0 %v942
        %v978 = vpop.f32.mrb[0].mxu0
        %v979 = vadd.f32 %v927, %v978
        %v980 = vpop.f32.mrb[0].mxu0
        %v981 = vpop.f32.mrb[0].mxu0
        %v982 = vpop.f32.mrb[0].mxu0
        %983 = vdwg.mxu0
        %v984 = vpack.c.bf16 %v979, %v979
        %986 = vrot.lane.b32.xlu0 %v984, 112
        %v987 = vpop.permute.xlu0 %986
        %988 = vrot.lane.b32.xlu0 %v984, 96
        %v989 = vpop.permute.xlu0 %988
        %990 = vrot.lane.b32.xlu0 %v987, 96
        %v991 = vpop.permute.xlu0 %990
        %994 = vxpose.xlu0.c.b16.start [1/8] %v989, 128
        %995 = vxpose.xlu0.c.b16.cont [2/8] 0, 128
        %996 = vxpose.xlu0.c.b16.cont [3/8] 0, 128
        %997 = vxpose.xlu0.c.b16.cont [4/8] 0, 128
        %998 = vxpose.xlu0.c.b16.cont [5/8] 0, 128
        %999 = vxpose.xlu0.c.b16.cont [6/8] 0, 128
        %1000 = vxpose.xlu0.c.b16.cont [7/8] 0, 128
        %1001 = vxpose.xlu0.c.b16.end [8/8] 0, 128
        %v1002 = vpop.trf.xlu0
        %v1003 = vpop.trf.xlu0
        %v1004 = vpop.trf.xlu0
        %v1005 = vpop.trf.xlu0
        %v1006 = vpop.trf.xlu0
        %v1007 = vpop.trf.xlu0
        %v1008 = vpop.trf.xlu0
        %v1009 = vpop.trf.xlu0
        %1010 = vxpose.xlu0.c.b16.start [1/8] %v991, 128
        %1011 = vxpose.xlu0.c.b16.cont [2/8] 0, 128
        %1012 = vxpose.xlu0.c.b16.cont [3/8] 0, 128
        %1013 = vxpose.xlu0.c.b16.cont [4/8] 0, 128
        %1014 = vxpose.xlu0.c.b16.cont [5/8] 0, 128
        %1015 = vxpose.xlu0.c.b16.cont [6/8] 0, 128
        %1016 = vxpose.xlu0.c.b16.cont [7/8] 0, 128
        %1017 = vxpose.xlu0.c.b16.end [8/8] 0, 128
        %v1018 = vpop.trf.xlu0
        %v1019 = vpop.trf.xlu0
        %v1020 = vpop.trf.xlu0
        %v1021 = vpop.trf.xlu0
        %v1022 = vpop.trf.xlu0
        %v1023 = vpop.trf.xlu0
        %v1024 = vpop.trf.xlu0
        %v1025 = vpop.trf.xlu0
        %vm1026 = vcmask 130048
        %v1028 = vsel %vm1026, %v984, 0
        %1030 = vmatprep.subr.bf16.mxu0 0
        %1031 = vmatpush1.bf16.msra.mxu0 %v1002
        %1032 = vmatprep.subr.bf16.mxu0 0
        %1033 = vmatpush1.bf16.msra.mxu0 0
        %1034 = vmatprep.subr.bf16.mxu0 0
        %1035 = vmatpush1.bf16.msra.mxu0 0
        %1036 = vmatprep.subr.bf16.mxu0 0
        %1037 = vmatpush1.bf16.msra.mxu0 0
        %1038 = vmatprep.subr.bf16.mxu0 0
        %1039 = vmatpush1.bf16.msra.mxu0 0
        %1040 = vmatprep.subr.bf16.mxu0 0
        %1041 = vmatpush1.bf16.msra.mxu0 0
        %1042 = vmatprep.subr.bf16.mxu0 0
        %1043 = vmatpush1.bf16.msra.mxu0 0
        %1044 = vmatprep.subr.bf16.mxu0 0
        %1045 = vmatpush1.bf16.msra.mxu0 0
        %1046 = vmatprep.subr.bf16.mxu0 0
        %1047 = vmatpush1.bf16.msra.mxu0 0
        %1048 = vmatprep.subr.bf16.mxu0 0
        %1049 = vmatpush1.bf16.msra.mxu0 0
        %1050 = vmatprep.subr.bf16.mxu0 0
        %1051 = vmatpush1.bf16.msra.mxu0 0
        %1052 = vmatprep.subr.bf16.mxu0 0
        %1053 = vmatpush1.bf16.msra.mxu0 0
        %1054 = vmatprep.subr.bf16.mxu0 0
        %1055 = vmatpush1.bf16.msra.mxu0 0
        %1056 = vmatprep.subr.bf16.mxu0 0
        %1057 = vmatpush1.bf16.msra.mxu0 0
        %1058 = vmatprep.subr.bf16.mxu0 0
        %1059 = vmatpush1.bf16.msra.mxu0 0
        %1060 = vmatprep.subr.bf16.mxu0 0
        %1061 = vmatpush1.bf16.msra.mxu0 0
        %1062 = vmatprep.mubr.bf16.mxu0 0
        %1063 = vmatmul.mubr.bf16.gmra.mrb[0].mxu0 %v1028
        %v1064 = vpop.f32.mrb[0].mxu0
        %v1065 = vadd.f32 %v855, %v1064
        %v1066 = vpop.f32.mrb[0].mxu0
        %v1067 = vpop.f32.mrb[0].mxu0
        %v1068 = vpop.f32.mrb[0].mxu0
        %1069 = vdwg.mxu0
        %v1071 = vsel %vm1026, %v987, 0
        %1073 = vmatprep.subr.bf16.mxu0 0
        %1074 = vmatpush1.bf16.msra.mxu0 %v1018
        %1075 = vmatprep.subr.bf16.mxu0 0
        %1076 = vmatpush1.bf16.msra.mxu0 0
        %1077 = vmatprep.subr.bf16.mxu0 0
        %1078 = vmatpush1.bf16.msra.mxu0 0
        %1079 = vmatprep.subr.bf16.mxu0 0
        %1080 = vmatpush1.bf16.msra.mxu0 0
        %1081 = vmatprep.subr.bf16.mxu0 0
        %1082 = vmatpush1.bf16.msra.mxu0 0
        %1083 = vmatprep.subr.bf16.mxu0 0
        %1084 = vmatpush1.bf16.msra.mxu0 0
        %1085 = vmatprep.subr.bf16.mxu0 0
        %1086 = vmatpush1.bf16.msra.mxu0 0
        %1087 = vmatprep.subr.bf16.mxu0 0
        %1088 = vmatpush1.bf16.msra.mxu0 0
        %1089 = vmatprep.subr.bf16.mxu0 0
        %1090 = vmatpush1.bf16.msra.mxu0 0
        %1091 = vmatprep.subr.bf16.mxu0 0
        %1092 = vmatpush1.bf16.msra.mxu0 0
        %1093 = vmatprep.subr.bf16.mxu0 0
        %1094 = vmatpush1.bf16.msra.mxu0 0
        %1095 = vmatprep.subr.bf16.mxu0 0
        %1096 = vmatpush1.bf16.msra.mxu0 0
        %1097 = vmatprep.subr.bf16.mxu0 0
        %1098 = vmatpush1.bf16.msra.mxu0 0
        %1099 = vmatprep.subr.bf16.mxu0 0
        %1100 = vmatpush1.bf16.msra.mxu0 0
        %1101 = vmatprep.subr.bf16.mxu0 0
        %1102 = vmatpush1.bf16.msra.mxu0 0
        %1103 = vmatprep.subr.bf16.mxu0 0
        %1104 = vmatpush1.bf16.msra.mxu0 0
        %1105 = vmatprep.mubr.bf16.mxu0 0
        %1106 = vmatmul.mubr.bf16.gmra.mrb[0].mxu0 %v1071
        %v1107 = vpop.f32.mrb[0].mxu0
        %v1108 = vadd.f32 %v855, %v1107
        %v1109 = vpop.f32.mrb[0].mxu0
        %v1110 = vpop.f32.mrb[0].mxu0
        %v1111 = vpop.f32.mrb[0].mxu0
        %1112 = vdwg.mxu0
        %vm1113 = vcmask 64512
        %v1114 = vsel %vm1113, %v1065, -inf
        %1115 = vmax.xlane.f32.xlu0 %v1114
        %v1116 = vpop.xlane.xlu0 %1115
        %v1117 = vsel %vm1113, %v1108, -inf
        %1118 = vmax.xlane.f32.xlu0 %v1117
        %v1119 = vpop.xlane.xlu0 %1118
        %v1120 = vsub.f32 %v1065, %v1116
        %v1121 = vsub.f32 %v1108, %v1119
        %v1122 = vmul.f32 %v1120, 1.442695
        %v1123 = vpow.pop %v1122
        %v1124 = vmul.f32 %v1121, 1.442695
        %v1125 = vpow.pop %v1124
        %v1126 = vsel %vm1113, %v1123, 0.0
        %1127 = vadd.xlane.f32.xlu0 %v1126
        %v1128 = vpop.xlane.xlu0 %1127
        %v1129 = vsel %vm1113, %v1125, 0.0
        %1130 = vadd.xlane.f32.xlu0 %v1129
        %v1131 = vpop.xlane.xlu0 %1130
        %v1132 = vrcp.pop %v1128
        %v1133 = vrcp.pop %v1131
        %v1134 = vmul.f32 %v1123, %v1132
        %v1135 = vmul.f32 %v1125, %v1133
        %v1136 = vpack.c.bf16 %v1134, %v1134
        %v1137 = vpack.c.bf16 %v1135, %v1135
        %1138 = vrot.lane.b32.xlu0 %v984, 64
        %v1139 = vpop.permute.xlu0 %1138
        %1140 = vrot.lane.b32.xlu0 %v987, 64
        %v1141 = vpop.permute.xlu0 %1140
        %1144 = vxpose.xlu0.c.b16.start [1/8] %v1139, 128
        %1145 = vxpose.xlu0.c.b16.cont [2/8] 0, 128
        %1146 = vxpose.xlu0.c.b16.cont [3/8] 0, 128
        %1147 = vxpose.xlu0.c.b16.cont [4/8] 0, 128
        %1148 = vxpose.xlu0.c.b16.cont [5/8] 0, 128
        %1149 = vxpose.xlu0.c.b16.cont [6/8] 0, 128
        %1150 = vxpose.xlu0.c.b16.cont [7/8] 0, 128
        %1151 = vxpose.xlu0.c.b16.end [8/8] 0, 128
        %v1152 = vpop.trf.xlu0
        %v1153 = vpop.trf.xlu0
        %v1154 = vpop.trf.xlu0
        %v1155 = vpop.trf.xlu0
        %v1156 = vpop.trf.xlu0
        %v1157 = vpop.trf.xlu0
        %v1158 = vpop.trf.xlu0
        %v1159 = vpop.trf.xlu0
        %1160 = vxpose.xlu0.c.b16.start [1/8] %v1141, 128
        %1161 = vxpose.xlu0.c.b16.cont [2/8] 0, 128
        %1162 = vxpose.xlu0.c.b16.cont [3/8] 0, 128
        %1163 = vxpose.xlu0.c.b16.cont [4/8] 0, 128
        %1164 = vxpose.xlu0.c.b16.cont [5/8] 0, 128
        %1165 = vxpose.xlu0.c.b16.cont [6/8] 0, 128
        %1166 = vxpose.xlu0.c.b16.cont [7/8] 0, 128
        %1167 = vxpose.xlu0.c.b16.end [8/8] 0, 128
        %v1168 = vpop.trf.xlu0
        %v1169 = vpop.trf.xlu0
        %v1170 = vpop.trf.xlu0
        %v1171 = vpop.trf.xlu0
        %v1172 = vpop.trf.xlu0
        %v1173 = vpop.trf.xlu0
        %v1174 = vpop.trf.xlu0
        %v1175 = vpop.trf.xlu0
        %v1177 = vsel %vm1113, %v1152, 0
        %v1180 = vsel %vm1113, %v1136, 0
        %1182 = vmatprep.subr.bf16.mxu0 0
        %1183 = vmatpush1.bf16.xpose.msra.mxu0 %v1180
        %1184 = vmatprep.subr.bf16.mxu0 0
        %1185 = vmatpush1.bf16.xpose.msra.mxu0 0
        %1186 = vmatprep.subr.bf16.mxu0 0
        %1187 = vmatpush1.bf16.xpose.msra.mxu0 0
        %1188 = vmatprep.subr.bf16.mxu0 0
        %1189 = vmatpush1.bf16.xpose.msra.mxu0 0
        %1190 = vmatprep.subr.bf16.mxu0 0
        %1191 = vmatpush1.bf16.xpose.msra.mxu0 0
        %1192 = vmatprep.subr.bf16.mxu0 0
        %1193 = vmatpush1.bf16.xpose.msra.mxu0 0
        %1194 = vmatprep.subr.bf16.mxu0 0
        %1195 = vmatpush1.bf16.xpose.msra.mxu0 0
        %1196 = vmatprep.subr.bf16.mxu0 0
        %1197 = vmatpush1.bf16.xpose.msra.mxu0 0
        %1198 = vmatprep.subr.bf16.mxu0 0
        %1199 = vmatpush1.bf16.xpose.msra.mxu0 0
        %1200 = vmatprep.subr.bf16.mxu0 0
        %1201 = vmatpush1.bf16.xpose.msra.mxu0 0
        %1202 = vmatprep.subr.bf16.mxu0 0
        %1203 = vmatpush1.bf16.xpose.msra.mxu0 0
        %1204 = vmatprep.subr.bf16.mxu0 0
        %1205 = vmatpush1.bf16.xpose.msra.mxu0 0
        %1206 = vmatprep.subr.bf16.mxu0 0
        %1207 = vmatpush1.bf16.xpose.msra.mxu0 0
        %1208 = vmatprep.subr.bf16.mxu0 0
        %1209 = vmatpush1.bf16.xpose.msra.mxu0 0
        %1210 = vmatprep.subr.bf16.mxu0 0
        %1211 = vmatpush1.bf16.xpose.msra.mxu0 0
        %1212 = vmatprep.subr.bf16.mxu0 0
        %1213 = vmatpush1.bf16.xpose.msra.mxu0 0
        %1214 = vmatprep.mubr.bf16.mxu0 0
        %1215 = vmatmul.mubr.bf16.gmra.mrb[0].mxu0 %v1177
        %v1216 = vpop.f32.mrb[0].mxu0
        %v1217 = vadd.f32 0.0, %v1216
        %v1218 = vpop.f32.mrb[0].mxu0
        %v1219 = vpop.f32.mrb[0].mxu0
        %v1220 = vadd.f32 0.0, %v1219
        %v1221 = vpop.f32.mrb[0].mxu0
        %1222 = vdwg.mxu0
        %v1224 = vsel %vm1113, %v1168, 0
        %v1227 = vsel %vm1113, %v1137, 0
        %1229 = vmatprep.subr.bf16.mxu0 0
        %1230 = vmatpush1.bf16.xpose.msra.mxu0 %v1227
        %1231 = vmatprep.subr.bf16.mxu0 0
        %1232 = vmatpush1.bf16.xpose.msra.mxu0 0
        %1233 = vmatprep.subr.bf16.mxu0 0
        %1234 = vmatpush1.bf16.xpose.msra.mxu0 0
        %1235 = vmatprep.subr.bf16.mxu0 0
        %1236 = vmatpush1.bf16.xpose.msra.mxu0 0
        %1237 = vmatprep.subr.bf16.mxu0 0
        %1238 = vmatpush1.bf16.xpose.msra.mxu0 0
        %1239 = vmatprep.subr.bf16.mxu0 0
        %1240 = vmatpush1.bf16.xpose.msra.mxu0 0
        %1241 = vmatprep.subr.bf16.mxu0 0
        %1242 = vmatpush1.bf16.xpose.msra.mxu0 0
        %1243 = vmatprep.subr.bf16.mxu0 0
        %1244 = vmatpush1.bf16.xpose.msra.mxu0 0
        %1245 = vmatprep.subr.bf16.mxu0 0
        %1246 = vmatpush1.bf16.xpose.msra.mxu0 0
        %1247 = vmatprep.subr.bf16.mxu0 0
        %1248 = vmatpush1.bf16.xpose.msra.mxu0 0
        %1249 = vmatprep.subr.bf16.mxu0 0
        %1250 = vmatpush1.bf16.xpose.msra.mxu0 0
        %1251 = vmatprep.subr.bf16.mxu0 0
        %1252 = vmatpush1.bf16.xpose.msra.mxu0 0
        %1253 = vmatprep.subr.bf16.mxu0 0
        %1254 = vmatpush1.bf16.xpose.msra.mxu0 0
        %1255 = vmatprep.subr.bf16.mxu0 0
        %1256 = vmatpush1.bf16.xpose.msra.mxu0 0
        %1257 = vmatprep.subr.bf16.mxu0 0
        %1258 = vmatpush1.bf16.xpose.msra.mxu0 0
        %1259 = vmatprep.subr.bf16.mxu0 0
        %1260 = vmatpush1.bf16.xpose.msra.mxu0 0
        %1261 = vmatprep.mubr.bf16.mxu0 0
        %1262 = vmatmul.mubr.bf16.gmra.mrb[0].mxu0 %v1224
        %v1263 = vpop.f32.mrb[0].mxu0
        %v1264 = vadd.f32 0.0, %v1263
        %v1265 = vpop.f32.mrb[0].mxu0
        %v1266 = vpop.f32.mrb[0].mxu0
        %v1267 = vadd.f32 0.0, %v1266
        %v1268 = vpop.f32.mrb[0].mxu0
        %1269 = vdwg.mxu0
        %1270 = vxpose.xlu0.b32.start [1/16] %v1217, 128
        %1271 = vxpose.xlu0.b32.cont [2/16] %v1220, 128
        %1272 = vxpose.xlu0.b32.cont [3/16] 0.0, 128
        %1273 = vxpose.xlu0.b32.cont [4/16] 0.0, 128
        %1274 = vxpose.xlu0.b32.cont [5/16] 0.0, 128
        %1275 = vxpose.xlu0.b32.cont [6/16] 0.0, 128
        %1276 = vxpose.xlu0.b32.cont [7/16] 0.0, 128
        %1277 = vxpose.xlu0.b32.cont [8/16] 0.0, 128
        %1278 = vxpose.xlu0.b32.cont [9/16] 0.0, 128
        %1279 = vxpose.xlu0.b32.cont [10/16] 0.0, 128
        %1280 = vxpose.xlu0.b32.cont [11/16] 0.0, 128
        %1281 = vxpose.xlu0.b32.cont [12/16] 0.0, 128
        %1282 = vxpose.xlu0.b32.cont [13/16] 0.0, 128
        %1283 = vxpose.xlu0.b32.cont [14/16] 0.0, 128
        %1284 = vxpose.xlu0.b32.cont [15/16] 0.0, 128
        %1285 = vxpose.xlu0.b32.end [16/16] 0.0, 128
        %v1286 = vpop.trf.xlu0
        %v1287 = vpop.trf.xlu0
        %v1288 = vpop.trf.xlu0
        %v1289 = vpop.trf.xlu0
        %v1290 = vpop.trf.xlu0
        %v1291 = vpop.trf.xlu0
        %v1292 = vpop.trf.xlu0
        %v1293 = vpop.trf.xlu0
        %v1294 = vpop.trf.xlu0
        %v1295 = vpop.trf.xlu0
        %v1296 = vpop.trf.xlu0
        %v1297 = vpop.trf.xlu0
        %v1298 = vpop.trf.xlu0
        %v1299 = vpop.trf.xlu0
        %v1300 = vpop.trf.xlu0
        %v1301 = vpop.trf.xlu0
        %1302 = vxpose.xlu0.b32.start [1/16] %v1264, 128
        %1303 = vxpose.xlu0.b32.cont [2/16] %v1267, 128
        %1304 = vxpose.xlu0.b32.cont [3/16] 0.0, 128
        %1305 = vxpose.xlu0.b32.cont [4/16] 0.0, 128
        %1306 = vxpose.xlu0.b32.cont [5/16] 0.0, 128
        %1307 = vxpose.xlu0.b32.cont [6/16] 0.0, 128
        %1308 = vxpose.xlu0.b32.cont [7/16] 0.0, 128
        %1309 = vxpose.xlu0.b32.cont [8/16] 0.0, 128
        %1310 = vxpose.xlu0.b32.cont [9/16] 0.0, 128
        %1311 = vxpose.xlu0.b32.cont [10/16] 0.0, 128
        %1312 = vxpose.xlu0.b32.cont [11/16] 0.0, 128
        %1313 = vxpose.xlu0.b32.cont [12/16] 0.0, 128
        %1314 = vxpose.xlu0.b32.cont [13/16] 0.0, 128
        %1315 = vxpose.xlu0.b32.cont [14/16] 0.0, 128
        %1316 = vxpose.xlu0.b32.cont [15/16] 0.0, 128
        %1317 = vxpose.xlu0.b32.end [16/16] 0.0, 128
        %v1318 = vpop.trf.xlu0
        %v1319 = vpop.trf.xlu0
        %v1320 = vpop.trf.xlu0
        %v1321 = vpop.trf.xlu0
        %v1322 = vpop.trf.xlu0
        %v1323 = vpop.trf.xlu0
        %v1324 = vpop.trf.xlu0
        %v1325 = vpop.trf.xlu0
        %v1326 = vpop.trf.xlu0
        %v1327 = vpop.trf.xlu0
        %v1328 = vpop.trf.xlu0
        %v1329 = vpop.trf.xlu0
        %v1330 = vpop.trf.xlu0
        %v1331 = vpop.trf.xlu0
        %v1332 = vpop.trf.xlu0
        %v1333 = vpop.trf.xlu0
        %v1334 = vcombine.high %v1286, 0.0
        %v1336 = vunpack.c.l.s4 1983009808
        %v1337 = vunpack.c.0.s8 %v1336
        %v1338 = vlaneseq
        %v1339 = vshrl.u32 %v1338, 7
        %v1340 = vsub.s32 %v1337, %v1339
        %v1341 = vrot.slane %v1286, %v1340
        %v1343 = vunpack.c.l.s4 1983009808
        %v1344 = vunpack.c.0.s8 %v1343
        %v1345 = vlaneseq
        %v1346 = vshrl.u32 %v1345, 7
        %v1347 = vsub.s32 %v1344, %v1346
        %v1348 = vrot.slane %v1334, %v1347
        %v1349 = vcombine.high %v1318, 0.0
        %v1351 = vunpack.c.l.s4 1983009808
        %v1352 = vunpack.c.0.s8 %v1351
        %v1353 = vlaneseq
        %v1354 = vshrl.u32 %v1353, 7
        %v1355 = vsub.s32 %v1352, %v1354
        %v1356 = vrot.slane %v1318, %v1355
        %v1358 = vunpack.c.l.s4 1983009808
        %v1359 = vunpack.c.0.s8 %v1358
        %v1360 = vlaneseq
        %v1361 = vshrl.u32 %v1360, 7
        %v1362 = vsub.s32 %v1359, %v1361
        %v1363 = vrot.slane %v1349, %v1362
        %v1364 = vcombine.low %v1341, %v1356
        %v1365 = vcombine.high %v1341, %v1356
        %v1367 = vunpack.c.l.s4 1934713408
        %v1368 = vunpack.c.0.s8 %v1367
        %v1369 = vlaneseq
        %v1370 = vshrl.u32 %v1369, 7
        %v1371 = vsub.s32 %v1368, %v1370
        %v1372 = vrot.slane %v1364, %v1371
        %v1374 = vunpack.c.l.s4 1934713408
        %v1375 = vunpack.c.0.s8 %v1374
        %v1376 = vlaneseq
        %v1377 = vshrl.u32 %v1376, 7
        %v1378 = vsub.s32 %v1375, %v1377
        %v1379 = vrot.slane %v1365, %v1378
        %v1380 = vcombine.low %v1348, %v1363
        %v1381 = vcombine.high %v1348, %v1363
        %v1383 = vunpack.c.l.s4 1934713408
        %v1384 = vunpack.c.0.s8 %v1383
        %v1385 = vlaneseq
        %v1386 = vshrl.u32 %v1385, 7
        %v1387 = vsub.s32 %v1384, %v1386
        %v1388 = vrot.slane %v1380, %v1387
        %v1390 = vunpack.c.l.s4 1934713408
        %v1391 = vunpack.c.0.s8 %v1390
        %v1392 = vlaneseq
        %v1393 = vshrl.u32 %v1392, 7
        %v1394 = vsub.s32 %v1391, %v1393
        %v1395 = vrot.slane %v1381, %v1394
        %v1396 = vcombine.high %v1372, 0.0
        %v1397 = vcombine.high %v1379, 0.0
        %v1398 = vcombine.high %v1388, 0.0
        %v1399 = vcombine.high %v1395, 0.0
        %v1400 = vcombine.low %v1372, %v1379
        %v1402 = vunpack.c.l.s4 1983009808
        %v1403 = vunpack.c.0.s8 %v1402
        %v1404 = vlaneseq
        %v1405 = vshrl.u32 %v1404, 7
        %v1406 = vsub.s32 %v1403, %v1405
        %v1407 = vrot.slane %v1400, %v1406
        %v1408 = vcombine.low %v1396, %v1397
        %v1410 = vunpack.c.l.s4 1983009808
        %v1411 = vunpack.c.0.s8 %v1410
        %v1412 = vlaneseq
        %v1413 = vshrl.u32 %v1412, 7
        %v1414 = vsub.s32 %v1411, %v1413
        %v1415 = vrot.slane %v1408, %v1414
        %v1416 = vcombine.low %v1388, %v1395
        %v1418 = vunpack.c.l.s4 1983009808
        %v1419 = vunpack.c.0.s8 %v1418
        %v1420 = vlaneseq
        %v1421 = vshrl.u32 %v1420, 7
        %v1422 = vsub.s32 %v1419, %v1421
        %v1423 = vrot.slane %v1416, %v1422
        %v1424 = vcombine.low %v1398, %v1399
        %v1426 = vunpack.c.l.s4 1983009808
        %v1427 = vunpack.c.0.s8 %v1426
        %v1428 = vlaneseq
        %v1429 = vshrl.u32 %v1428, 7
        %v1430 = vsub.s32 %v1427, %v1429
        %v1431 = vrot.slane %v1424, %v1430
        %v1432 = vcombine.low %v1407, %v1415
        %v1434 = vunpack.c.l.s4 1934713408
        %v1435 = vunpack.c.0.s8 %v1434
        %v1436 = vlaneseq
        %v1437 = vshrl.u32 %v1436, 7
        %v1438 = vsub.s32 %v1435, %v1437
        %v1439 = vrot.slane %v1432, %v1438
        %v1440 = vcombine.low %v1423, %v1431
        %v1442 = vunpack.c.l.s4 1934713408
        %v1443 = vunpack.c.0.s8 %v1442
        %v1444 = vlaneseq
        %v1445 = vshrl.u32 %v1444, 7
        %v1446 = vsub.s32 %v1443, %v1445
        %v1447 = vrot.slane %v1440, %v1446
        %v1448 = vcombine.low %v1439, %v1447
        %v1449 = vcombine.high %v1439, %v1447
        %1451 = vrot.lane.b32.xlu0 %v1449, 16
        %v1452 = vpop.permute.xlu0 %1451
        %v1454 = vsel %vm1026, %v1448, %v1452
        %v1455 = vpack.c.bf16 %v1454, %v1454
        %v1457 = vlaneseq
        %v1458 = vshrl.u32 %v1457, 7
        %v1459 = vsub.s32 0, %v1458
        %v1460 = vrot.slane %v868, %v1459
        %v1466 = vunpack.c.l.b16 %v864
        %v1467 = vunpack.c.l.b16 %v865
        %v1468 = vunpack.c.l.b16 %v866
        %v1469 = vunpack.c.l.b16 %v867
        %v1470 = vpack.c.b16 %v1467, %v1466
        %v1471 = vpack.c.b16 %v1469, %v1468
        %v1475 = vsel %vm893, %v1455, 0
        %1477 = vmatprep.subr.bf16.mxu0 0
        %1478 = vmatpush1.bf16.msra.mxu0 %v1470
        %1479 = vmatprep.subr.bf16.mxu0 0
        %1480 = vmatpush1.bf16.msra.mxu0 %v1471
        %1481 = vmatprep.subr.bf16.mxu0 0
        %1482 = vmatpush1.bf16.msra.mxu0 0
        %1483 = vmatprep.subr.bf16.mxu0 0
        %1484 = vmatpush1.bf16.msra.mxu0 0
        %1485 = vmatprep.subr.bf16.mxu0 0
        %1486 = vmatpush1.bf16.msra.mxu0 0
        %1487 = vmatprep.subr.bf16.mxu0 0
        %1488 = vmatpush1.bf16.msra.mxu0 0
        %1489 = vmatprep.subr.bf16.mxu0 0
        %1490 = vmatpush1.bf16.msra.mxu0 0
        %1491 = vmatprep.subr.bf16.mxu0 0
        %1492 = vmatpush1.bf16.msra.mxu0 0
        %1493 = vmatprep.subr.bf16.mxu0 0
        %1494 = vmatpush1.bf16.msra.mxu0 0
        %1495 = vmatprep.subr.bf16.mxu0 0
        %1496 = vmatpush1.bf16.msra.mxu0 0
        %1497 = vmatprep.subr.bf16.mxu0 0
        %1498 = vmatpush1.bf16.msra.mxu0 0
        %1499 = vmatprep.subr.bf16.mxu0 0
        %1500 = vmatpush1.bf16.msra.mxu0 0
        %1501 = vmatprep.subr.bf16.mxu0 0
        %1502 = vmatpush1.bf16.msra.mxu0 0
        %1503 = vmatprep.subr.bf16.mxu0 0
        %1504 = vmatpush1.bf16.msra.mxu0 0
        %1505 = vmatprep.subr.bf16.mxu0 0
        %1506 = vmatpush1.bf16.msra.mxu0 0
        %1507 = vmatprep.subr.bf16.mxu0 0
        %1508 = vmatpush1.bf16.msra.mxu0 0
        %1509 = vmatprep.mubr.bf16.mxu0 0
        %1510 = vmatmul.mubr.bf16.gmra.mrb[0].mxu0 %v1475
        %v1511 = vpop.f32.mrb[0].mxu0
        %v1512 = vadd.f32 %v1460, %v1511
        %v1513 = vpop.f32.mrb[0].mxu0
        %v1514 = vpop.f32.mrb[0].mxu0
        %v1515 = vpop.f32.mrb[0].mxu0
        %1516 = vdwg.mxu0
        %v1517 = vadd.f32 %v856, %v1512
        %v1518 = vsel %vm893, %v1517, 0.0
        %1519 = vadd.xlane.f32.xlu0 %v1518
        %v1520 = vpop.xlane.xlu0 %1519
        %v1521 = vmul.f32 %v1520, %v897
        %v1522 = vsub.f32 %v1517, %v1521
        %v1523 = vmul.f32 %v1522, %v1522
        %v1524 = vsel %vm893, %v1523, 0.0
        %1525 = vadd.xlane.f32.xlu0 %v1524
        %v1526 = vpop.xlane.xlu0 %1525
        %v1527 = vmul.f32 %v1526, %v897
        %v1528 = vadd.f32 %v1527, 1e-05
        %v1529 = vrsqrt.pop %v1528
        %v1530 = vmul.f32 %v1522, %v1529
        %v1532 = vlaneseq
        %v1533 = vshrl.u32 %v1532, 7
        %v1534 = vsub.s32 0, %v1533
        %v1535 = vrot.slane %v869, %v1534
        %v1537 = vmul.f32 %v1530, %v1535
        %v1539 = vlaneseq
        %v1540 = vshrl.u32 %v1539, 7
        %v1541 = vsub.s32 0, %v1540
        %v1542 = vrot.slane %v870, %v1541
        %v1544 = vadd.f32 %v1537, %v1542
        %v1545 = vpack.c.bf16 %v1544, %v1544
        %v1547 = vlaneseq
        %v1548 = vshrl.u32 %v1547, 7
        %v1549 = vsub.s32 0, %v1548
        %v1550 = vrot.slane %v875, %v1549
        %v1556 = vunpack.c.l.b16 %v871
        %v1557 = vunpack.c.l.b16 %v872
        %v1558 = vunpack.c.l.b16 %v873
        %v1559 = vunpack.c.l.b16 %v874
        %v1560 = vpack.c.b16 %v1557, %v1556
        %v1561 = vpack.c.b16 %v1559, %v1558
        %v1565 = vsel %vm893, %v1545, 0
        %1567 = vmatprep.subr.bf16.mxu0 0
        %1568 = vmatpush1.bf16.msra.mxu0 %v1560
        %1569 = vmatprep.subr.bf16.mxu0 0
        %1570 = vmatpush1.bf16.msra.mxu0 %v1561
        %1571 = vmatprep.subr.bf16.mxu0 0
        %1572 = vmatpush1.bf16.msra.mxu0 0
        %1573 = vmatprep.subr.bf16.mxu0 0
        %1574 = vmatpush1.bf16.msra.mxu0 0
        %1575 = vmatprep.subr.bf16.mxu0 0
        %1576 = vmatpush1.bf16.msra.mxu0 0
        %1577 = vmatprep.subr.bf16.mxu0 0
        %1578 = vmatpush1.bf16.msra.mxu0 0
        %1579 = vmatprep.subr.bf16.mxu0 0
        %1580 = vmatpush1.bf16.msra.mxu0 0
        %1581 = vmatprep.subr.bf16.mxu0 0
        %1582 = vmatpush1.bf16.msra.mxu0 0
        %1583 = vmatprep.subr.bf16.mxu0 0
        %1584 = vmatpush1.bf16.msra.mxu0 0
        %1585 = vmatprep.subr.bf16.mxu0 0
        %1586 = vmatpush1.bf16.msra.mxu0 0
        %1587 = vmatprep.subr.bf16.mxu0 0
        %1588 = vmatpush1.bf16.msra.mxu0 0
        %1589 = vmatprep.subr.bf16.mxu0 0
        %1590 = vmatpush1.bf16.msra.mxu0 0
        %1591 = vmatprep.subr.bf16.mxu0 0
        %1592 = vmatpush1.bf16.msra.mxu0 0
        %1593 = vmatprep.subr.bf16.mxu0 0
        %1594 = vmatpush1.bf16.msra.mxu0 0
        %1595 = vmatprep.subr.bf16.mxu0 0
        %1596 = vmatpush1.bf16.msra.mxu0 0
        %1597 = vmatprep.subr.bf16.mxu0 0
        %1598 = vmatpush1.bf16.msra.mxu0 0
        %1599 = vmatprep.mubr.bf16.mxu0 0
        %1600 = vmatmul.mubr.bf16.gmra.mrb[0].mxu0 %v1565
        %v1601 = vpop.f32.mrb[0].mxu0
        %v1602 = vadd.f32 %v1550, %v1601
        %v1603 = vpop.f32.mrb[0].mxu0
        %v1604 = vpop.f32.mrb[0].mxu0
        %v1605 = vpop.f32.mrb[0].mxu0
        %1606 = vdwg.mxu0
        %v1607 = vmul.f32 %v1602, 1.702
        %v1608 = vxor.u32 %v1607, 2147483648
        %v1609 = vmul.f32 %v1608, 1.442695
        %v1610 = vpow.pop %v1609
        %v1611 = vadd.f32 %v1610, 1.0
        %v1612 = vrcp.pop %v1611
        %v1613 = vmul.f32 1.0, %v1612
        %v1614 = vmul.f32 %v1602, %v1613
        %v1615 = vpack.c.bf16 %v1614, %v1614
        %v1617 = vlaneseq
        %v1618 = vshrl.u32 %v1617, 7
        %v1619 = vsub.s32 0, %v1618
        %v1620 = vrot.slane %v892, %v1619
        %v1638 = vunpack.c.l.b16 %v876
        %v1639 = vunpack.c.l.b16 %v877
        %v1640 = vunpack.c.l.b16 %v878
        %v1641 = vunpack.c.l.b16 %v879
        %v1642 = vunpack.c.l.b16 %v880
        %v1643 = vunpack.c.l.b16 %v881
        %v1644 = vunpack.c.l.b16 %v882
        %v1645 = vunpack.c.l.b16 %v883
        %v1646 = vunpack.c.l.b16 %v884
        %v1647 = vunpack.c.l.b16 %v885
        %v1648 = vunpack.c.l.b16 %v886
        %v1649 = vunpack.c.l.b16 %v887
        %v1650 = vunpack.c.l.b16 %v888
        %v1651 = vunpack.c.l.b16 %v889
        %v1652 = vunpack.c.l.b16 %v890
        %v1653 = vunpack.c.l.b16 %v891
        %v1654 = vpack.c.b16 %v1639, %v1638
        %v1655 = vpack.c.b16 %v1641, %v1640
        %v1656 = vpack.c.b16 %v1643, %v1642
        %v1657 = vpack.c.b16 %v1645, %v1644
        %v1658 = vpack.c.b16 %v1647, %v1646
        %v1659 = vpack.c.b16 %v1649, %v1648
        %v1660 = vpack.c.b16 %v1651, %v1650
        %v1661 = vpack.c.b16 %v1653, %v1652
        %1670 = vmatprep.subr.bf16.mxu0 0
        %1671 = vmatpush1.bf16.msra.mxu0 %v1654
        %1672 = vmatprep.subr.bf16.mxu0 0
        %1673 = vmatpush1.bf16.msra.mxu0 %v1655
        %1674 = vmatprep.subr.bf16.mxu0 0
        %1675 = vmatpush1.bf16.msra.mxu0 %v1656
        %1676 = vmatprep.subr.bf16.mxu0 0
        %1677 = vmatpush1.bf16.msra.mxu0 %v1657
        %1678 = vmatprep.subr.bf16.mxu0 0
        %1679 = vmatpush1.bf16.msra.mxu0 %v1658
        %1680 = vmatprep.subr.bf16.mxu0 0
        %1681 = vmatpush1.bf16.msra.mxu0 %v1659
        %1682 = vmatprep.subr.bf16.mxu0 0
        %1683 = vmatpush1.bf16.msra.mxu0 %v1660
        %1684 = vmatprep.subr.bf16.mxu0 0
        %1685 = vmatpush1.bf16.msra.mxu0 %v1661
        %1686 = vmatprep.subr.bf16.mxu0 0
        %1687 = vmatpush1.bf16.msra.mxu0 0
        %1688 = vmatprep.subr.bf16.mxu0 0
        %1689 = vmatpush1.bf16.msra.mxu0 0
        %1690 = vmatprep.subr.bf16.mxu0 0
        %1691 = vmatpush1.bf16.msra.mxu0 0
        %1692 = vmatprep.subr.bf16.mxu0 0
        %1693 = vmatpush1.bf16.msra.mxu0 0
        %1694 = vmatprep.subr.bf16.mxu0 0
        %1695 = vmatpush1.bf16.msra.mxu0 0
        %1696 = vmatprep.subr.bf16.mxu0 0
        %1697 = vmatpush1.bf16.msra.mxu0 0
        %1698 = vmatprep.subr.bf16.mxu0 0
        %1699 = vmatpush1.bf16.msra.mxu0 0
        %1700 = vmatprep.subr.bf16.mxu0 0
        %1701 = vmatpush1.bf16.msra.mxu0 0
        %1702 = vmatprep.mubr.bf16.mxu0 0
        %1703 = vmatmul.mubr.bf16.gmra.mrb[0].mxu0 %v1615
        %v1704 = vpop.f32.mrb[0].mxu0
        %v1705 = vadd.f32 %v1620, %v1704
        %v1706 = vpop.f32.mrb[0].mxu0
        %v1707 = vpop.f32.mrb[0].mxu0
        %v1708 = vpop.f32.mrb[0].mxu0
        %1709 = vdwg.mxu0
        %v1710 = vadd.f32 %v1517, %v1705
        %1711 = vst.msk [vmem:[#allocation2] sm:$0xff] %vm893, %v1710
        %p1712 = scmp.eq.s32.totalorder %s38, 1
        // Predicated region
        $region101: #{clip_forward.2} parent=95 // pred_check
          %p1713 = pneg %p1712
        $region102: #{clip_forward.2} parent=95 // pred_check_branch
          %1715 = sbr.rel (%p1713) target = $region104
        $region103: #{clip_forward.2} parent=95 // pred_region
          %v1716 = vld [vmem:[%s787] sm:$0xff]
          %1718 = vset.pattern.permute.xlu0 0
          %1719 = vperm.xlu0 %1718, %v1716
          %v1720 = vpop.permute.xlu0 %1719
          %v1722 = vmul.f32 %v1710, %v1720
          %v1723 = vsel %vm893, %v1722, 0.0
          %v1724 = vrot.slane %v1723, 4
          %v1725 = vadd.f32 %v1723, %v1724
          %v1726 = vrot.slane %v1725, 2
          %v1727 = vadd.f32 %v1725, %v1726
          %v1728 = vrot.slane %v1727, 1
          %v1729 = vadd.f32 %v1727, %v1728
          %v1730 = vld [vmem:[%s16] sm:$0x1]
          %v1731 = vld [vmem:[%s17] sm:$0x1]
          %v1732 = vsel %vm893, %v1729, 0.0
          %1733 = vadd.xlane.f32.xlu0 %v1732
          %v1734 = vpop.xlane.xlu0 %1733
          %v1735 = vmul.f32 %v1734, %v897
          %v1736 = vsub.f32 %v1729, %v1735
          %v1737 = vmul.f32 %v1736, %v1736
          %v1738 = vsel %vm893, %v1737, 0.0
          %1739 = vadd.xlane.f32.xlu0 %v1738
          %v1740 = vpop.xlane.xlu0 %1739
          %v1741 = vmul.f32 %v1740, %v897
          %v1742 = vadd.f32 %v1741, 1e-05
          %v1743 = vrsqrt.pop %v1742
          %v1744 = vmul.f32 %v1736, %v1743
          %v1745 = vmul.f32 %v1744, %v1730
          %v1746 = vadd.f32 %v1745, %v1731
          %v1747 = vpack.c.bf16 %v1746, %v1746
          %v1748 = vld [vmem:[%s18] sm:$0xf]
          %v1749 = vld [vmem:[%s18 + $0x4] sm:$0xf]
          %v1750 = vld [vmem:[%s18 + $0x8] sm:$0xf]
          %v1751 = vld [vmem:[%s18 + $0xc] sm:$0xf]
          %v1756 = vunpack.c.l.b16 %v1748
          %v1757 = vunpack.c.l.b16 %v1749
          %v1758 = vunpack.c.l.b16 %v1750
          %v1759 = vunpack.c.l.b16 %v1751
          %v1760 = vpack.c.b16 %v1757, %v1756
          %v1761 = vpack.c.b16 %v1759, %v1758
          %v1765 = vsel %vm893, %v1747, 0
          %1767 = vmatprep.subr.bf16.mxu0 0
          %1768 = vmatpush1.bf16.msra.mxu0 %v1760
          %1769 = vmatprep.subr.bf16.mxu0 0
          %1770 = vmatpush1.bf16.msra.mxu0 %v1761
          %1771 = vmatprep.subr.bf16.mxu0 0
          %1772 = vmatpush1.bf16.msra.mxu0 0
          %1773 = vmatprep.subr.bf16.mxu0 0
          %1774 = vmatpush1.bf16.msra.mxu0 0
          %1775 = vmatprep.subr.bf16.mxu0 0
          %1776 = vmatpush1.bf16.msra.mxu0 0
          %1777 = vmatprep.subr.bf16.mxu0 0
          %1778 = vmatpush1.bf16.msra.mxu0 0
          %1779 = vmatprep.subr.bf16.mxu0 0
          %1780 = vmatpush1.bf16.msra.mxu0 0
          %1781 = vmatprep.subr.bf16.mxu0 0
          %1782 = vmatpush1.bf16.msra.mxu0 0
          %1783 = vmatprep.subr.bf16.mxu0 0
          %1784 = vmatpush1.bf16.msra.mxu0 0
          %1785 = vmatprep.subr.bf16.mxu0 0
          %1786 = vmatpush1.bf16.msra.mxu0 0
          %1787 = vmatprep.subr.bf16.mxu0 0
          %1788 = vmatpush1.bf16.msra.mxu0 0
          %1789 = vmatprep.subr.bf16.mxu0 0
          %1790 = vmatpush1.bf16.msra.mxu0 0
          %1791 = vmatprep.subr.bf16.mxu0 0
          %1792 = vmatpush1.bf16.msra.mxu0 0
          %1793 = vmatprep.subr.bf16.mxu0 0
          %1794 = vmatpush1.bf16.msra.mxu0 0
          %1795 = vmatprep.subr.bf16.mxu0 0
          %1796 = vmatpush1.bf16.msra.mxu0 0
          %1797 = vmatprep.subr.bf16.mxu0 0
          %1798 = vmatpush1.bf16.msra.mxu0 0
          %1799 = vmatprep.mubr.bf16.mxu0 0
          %1800 = vmatmul.mubr.bf16.gmra.mrb[0].mxu0 %v1765
          %v1801 = vpop.f32.mrb[0].mxu0
          %v1802 = vadd.f32 0.0, %v1801
          %v1803 = vpop.f32.mrb[0].mxu0
          %v1804 = vpop.f32.mrb[0].mxu0
          %v1805 = vpop.f32.mrb[0].mxu0
          %1806 = vdwg.mxu0
          %v1807 = vmul.f32 %v1802, %v1802
          %vm1808 = vcmask 122880
          %v1809 = vsel %vm1808, %v1807, 0.0
          %1810 = vadd.xlane.f32.xlu0 %v1809
          %v1811 = vpop.xlane.xlu0 %1810
          %v1812 = vmax.f32 %v1811, 1e-24
          %v1813 = vrsqrt.pop %v1812
          %v1814 = vmul.f32 %v1802, %v1813
          %1815 = vst.msk [vmem:[%s776] sm:$0x1] %vm1808, %v1814
        $region104: #{clip_forward.2} parent=95 // pred_fallthru
          _
        %s1816 = sand.u32 %s527, 1
        %s1817 = scalar_lea.sflag [#allocation4], %s1816
        %s1818 = sand.u32 %s527, 1
        %s1819 = scalar_lea.vmem [#allocation3], %s1818
        // Predicated region
        $region105: #{clip_forward.2} parent=95 // pred_check
          %p1820 = pneg %p537
        $region106: #{clip_forward.2} parent=95 // pred_check_branch
          %1822 = sbr.rel (%p1820) target = $region108
        $region107: #{clip_forward.2} parent=95 // pred_region
          %s1824 = ssub.s32 16, 16
          %1825 = vsyncadd %s1817, %s1824
          %s1826 = smul.addr %s37, 16
          %s1827 = scalar_lea.hbm %s19, %s1826
          %s1829 = sshll.u32 %s1819, 4
          %s1830 = int_to_ptr.vmem [resolvable:$true] %s1829
          %1832 = dma.vmem_to_hbm [thread:$0]  %s1830, 16, %s1827, %s1817
        $region108: #{clip_forward.2} parent=95 // pred_fallthru
          _
      $region96: #{clip_forward.2} parent=5 // pred_fallthru
        _
      %p1833 = scmp.le.s32.totalorder 2, %s28
      // Predicated region
      $region109: #{clip_forward.2} parent=5 // pred_check
        %p1834 = pneg %p1833
      $region110: #{clip_forward.2} parent=5 // pred_check_branch
        %1836 = sbr.rel (%p1834) target = $region112
      $region111: #{clip_forward.2} parent=5 // pred_region
        %s1837 = ssub.s32 %s28, 2
        // Predicated region
        $region113: #{clip_forward.2} parent=111 // pred_check
          %p1838 = pneg %p543
        $region114: #{clip_forward.2} parent=111 // pred_check_branch
          %1840 = sbr.rel (%p1838) target = $region116
        $region115: #{clip_forward.2} parent=111 // pred_region
          %s1841 = sand.u32 %s528, 1
          %s1842 = scalar_lea.sflag [#allocation4], %s1841
          %s1843 = sand.u32 %s528, 1
          %s1844 = scalar_lea.vmem [#allocation3], %s1843
          %1845 = dma.done %s1842, 16
        $region116: #{clip_forward.2} parent=111 // pred_fallthru
          _
      $region112: #{clip_forward.2} parent=5 // pred_fallthru
        _
    $region6: #{clip_forward.2} parent=1 // loop_footer
      %s32 = sadd.s32 1, %s28
    $region7: #{clip_forward.2} parent=1 // loop_footer_branch
      %27 = sbr.rel target = $region3
    $region8: #{clip_forward.2} parent=1 // loop_exit
      _
    %1846 = vsyncpa [#allocation4], 1
    %s1847 = scalar_lea.sflag [#allocation4], 1
    %1848 = vsyncpa %s1847, 1

// kernel: clip_forward.3
$region0: #{clip_forward.3}
  #allocation0 [shape = 'u32[]', space=smem, size = 0x4, offset = 0x4, fixed_abs, tag = 'smem constant byte address 0x4 - core index']
  #allocation1 [shape = 'u32[144,128]{1,0:T(1,128)}', space=vmem, size = 0x12000, scoped, tag = 'internal scratch']
  #allocation2 [shape = 'f32[5,32]{1,0:T(8,128)}', space=vmem, size = 0x1000, scoped, tag = 'scratch operand']
  %s0 = inlined_call_operand.vmem [shape: f32[2,5,192], index: 0, kind: input, shape index: {}]
  %s1 = inlined_call_operand.vmem [shape: bf16[192,32], index: 1, kind: input, shape index: {}]
  %s2 = inlined_call_operand.vmem [shape: f32[5,32], index: 2, kind: input, shape index: {}]
  %s3 = inlined_call_operand.vmem [shape: f32[1,32], index: 3, kind: input, shape index: {}]
  %s4 = inlined_call_operand.vmem [shape: f32[1,32], index: 4, kind: input, shape index: {}]
  %s5 = inlined_call_operand.vmem [shape: f32[2,1,32], index: 5, kind: input, shape index: {}]
  %s6 = inlined_call_operand.vmem [shape: f32[2,1,32], index: 6, kind: input, shape index: {}]
  %s7 = inlined_call_operand.vmem [shape: bf16[2,32,96], index: 7, kind: input, shape index: {}]
  %s8 = inlined_call_operand.vmem [shape: f32[2,1,96], index: 8, kind: input, shape index: {}]
  %s9 = inlined_call_operand.vmem [shape: bf16[2,32,32], index: 9, kind: input, shape index: {}]
  %s10 = inlined_call_operand.vmem [shape: f32[2,1,32], index: 10, kind: input, shape index: {}]
  %s11 = inlined_call_operand.vmem [shape: f32[2,1,32], index: 11, kind: input, shape index: {}]
  %s12 = inlined_call_operand.vmem [shape: f32[2,1,32], index: 12, kind: input, shape index: {}]
  %s13 = inlined_call_operand.vmem [shape: bf16[2,32,128], index: 13, kind: input, shape index: {}]
  %s14 = inlined_call_operand.vmem [shape: f32[2,1,128], index: 14, kind: input, shape index: {}]
  %s15 = inlined_call_operand.vmem [shape: bf16[2,128,32], index: 15, kind: input, shape index: {}]
  %s16 = inlined_call_operand.vmem [shape: f32[2,1,32], index: 16, kind: input, shape index: {}]
  %s17 = inlined_call_operand.vmem [shape: f32[1,32], index: 17, kind: input, shape index: {}]
  %s18 = inlined_call_operand.vmem [shape: f32[1,32], index: 18, kind: input, shape index: {}]
  %s19 = inlined_call_operand.vmem [shape: bf16[32,16], index: 19, kind: input, shape index: {}]
  %s20 = inlined_call_operand.hbm [shape: f32[2,1,16], index: 20, kind: output, shape index: {}]
  %s21 = sld [smem:[#allocation0]]
  $region121: #{clip_forward.3} parent=0
    _
  %s23 = ssub.s32 1, %s21
  %s24 = scalar_select 0, %s23, %s21
  $region1: #{clip_forward.3} parent=0
    #allocation3 [shape = 'u8[1024]{0}', space=vmem, size = 0x400, scoped, tag = 'output window, operand 0']
    #allocation4 [shape = 's32[2]{0}', space=sflag, size = 0x8, scoped, tag = 'scoped memory for clip_forward.3']
    %25 = vsyncpa [#allocation4], 0
    %s26 = scalar_lea.sflag [#allocation4], 1
    %27 = vsyncpa %s26, 0
    loop: start=0, step=1, limit=6
    $region2: #{clip_forward.3} parent=1 // loop_pre_header
      _
    $region3: #{clip_forward.3} parent=1 // loop_header
      %s29 = sphi 0, %s33
      %p30 = scmp.ge.s32.totalorder %s29, 6
      %s36 = sphi 0, %s48
      %s37 = sphi 0, %s44
      %s38 = sphi 0, %s36
      %s39 = sphi 0, %s37
      %s40 = sphi 0, %s38
      %s41 = sphi 0, %s39
      %s51 = sphi 0, %s53
      %s54 = sphi 0, %s51
      %s55 = sphi 0, %s54
      %s71 = sphi 0, %s55
      %s75 = sphi 0, %s75
      %s77 = sphi 0, %s75
      %s78 = sphi 0, %s77
      %s92 = sphi 0, %s78
      %s96 = sphi 0, %s96
      %s98 = sphi 0, %s96
      %s99 = sphi 0, %s98
      %s113 = sphi 0, %s99
      %s117 = sphi 0, %s117
      %s119 = sphi 0, %s117
      %s120 = sphi 0, %s119
      %s134 = sphi 0, %s120
      %s138 = sphi 0, %s138
      %s140 = sphi 0, %s138
      %s141 = sphi 0, %s140
      %s155 = sphi 0, %s141
      %s161 = sphi 0, %s163
      %s164 = sphi 0, %s161
      %s165 = sphi 0, %s164
      %s181 = sphi 0, %s165
      %s187 = sphi 0, %s189
      %s190 = sphi 0, %s187
      %s191 = sphi 0, %s190
      %s207 = sphi 0, %s191
      %s213 = sphi 0, %s215
      %s216 = sphi 0, %s213
      %s217 = sphi 0, %s216
      %s233 = sphi 0, %s217
      %s239 = sphi 0, %s241
      %s242 = sphi 0, %s239
      %s243 = sphi 0, %s242
      %s259 = sphi 0, %s243
      %s265 = sphi 0, %s267
      %s268 = sphi 0, %s265
      %s269 = sphi 0, %s268
      %s285 = sphi 0, %s269
      %s291 = sphi 0, %s293
      %s294 = sphi 0, %s291
      %s295 = sphi 0, %s294
      %s311 = sphi 0, %s295
      %s317 = sphi 0, %s319
      %s320 = sphi 0, %s317
      %s321 = sphi 0, %s320
      %s337 = sphi 0, %s321
      %s343 = sphi 0, %s345
      %s346 = sphi 0, %s343
      %s347 = sphi 0, %s346
      %s363 = sphi 0, %s347
      %s369 = sphi 0, %s371
      %s372 = sphi 0, %s369
      %s373 = sphi 0, %s372
      %s389 = sphi 0, %s373
      %s395 = sphi 0, %s397
      %s398 = sphi 0, %s395
      %s399 = sphi 0, %s398
      %s415 = sphi 0, %s399
      %s421 = sphi 0, %s423
      %s424 = sphi 0, %s421
      %s425 = sphi 0, %s424
      %s441 = sphi 0, %s425
      %s447 = sphi 0, %s449
      %s450 = sphi 0, %s447
      %s451 = sphi 0, %s450
      %s467 = sphi 0, %s451
      %s471 = sphi 0, %s471
      %s473 = sphi 0, %s471
      %s474 = sphi 0, %s473
      %s488 = sphi 0, %s474
      %s492 = sphi 0, %s492
      %s494 = sphi 0, %s492
      %s495 = sphi 0, %s494
      %s509 = sphi 0, %s495
      %s513 = sphi 0, %s513
      %s515 = sphi 0, %s513
      %s516 = sphi 0, %s515
      %s530 = sphi 0, %s516
      %s536 = sphi 0, %s538
      %s539 = sphi 0, %s536
      %s540 = sphi 0, %s539
      %s556 = sphi 0, %s540
    $region4: #{clip_forward.3} parent=1 // loop_header_branch
      %32 = sbr.rel (%p30) target = $region8
    $region5: #{clip_forward.3} parent=1 // loop_body
      %s34 = ssub.s32 %s29, 1
      %s35 = ssub.s32 %s29, 2
      %s42 = sadd.s32 1, %s37
      %p43 = scmp.ge.s32.totalorder %s42, 2
      %s44 = scalar_select %p43, 0, %s42
      %s45 = sadd.s32 1, %s36
      %s46 = scalar_select %p43, %s45, %s36
      %p47 = scmp.ge.s32.totalorder %s46, 2
      %s48 = scalar_select %p47, 0, %s46
      %s49 = ssub.s32 %s36, %s48
      %p50 = scmp.eq.s32.totalorder %s49, 0
      %s52 = sadd.s32 %s51, 1
      %s53 = scalar_select %p50, %s51, %s52
      %p56 = pneg %p50
      %p57 = scmp.eq.s32.totalorder %s29, 3
      %p58 = por %p56, %p57
      %p59 = scmp.ne.s32.totalorder %s51, %s54
      %p60 = scmp.eq.s32.totalorder %s29, 0
      %p61 = por %p59, %p60
      %p62 = scmp.ne.s32.totalorder %s51, %s54
      %p63 = scmp.eq.s32.totalorder %s34, 3
      %p64 = por %p62, %p63
      %p65 = scmp.ne.s32.totalorder %s54, %s55
      %p66 = scmp.eq.s32.totalorder %s34, 0
      %p67 = por %p65, %p66
      %p68 = scmp.ne.s32.totalorder %s54, %s55
      %p69 = scmp.eq.s32.totalorder %s35, 3
      %p70 = por %p68, %p69
      %p72 = scmp.ne.s32.totalorder %s55, %s71
      %p73 = scmp.eq.s32.totalorder %s35, 0
      %p74 = por %p72, %p73
      %s76 = sadd.s32 %s75, 1
      %p79 = scmp.eq.s32.totalorder %s29, 3
      %p80 = scmp.ne.s32.totalorder %s75, %s77
      %p81 = scmp.eq.s32.totalorder %s29, 0
      %p82 = por %p80, %p81
      %p83 = scmp.ne.s32.totalorder %s75, %s77
      %p84 = scmp.eq.s32.totalorder %s34, 3
      %p85 = por %p83, %p84
      %p86 = scmp.ne.s32.totalorder %s77, %s78
      %p87 = scmp.eq.s32.totalorder %s34, 0
      %p88 = por %p86, %p87
      %p89 = scmp.ne.s32.totalorder %s77, %s78
      %p90 = scmp.eq.s32.totalorder %s35, 3
      %p91 = por %p89, %p90
      %p93 = scmp.ne.s32.totalorder %s78, %s92
      %p94 = scmp.eq.s32.totalorder %s35, 0
      %p95 = por %p93, %p94
      %s97 = sadd.s32 %s96, 1
      %p100 = scmp.eq.s32.totalorder %s29, 3
      %p101 = scmp.ne.s32.totalorder %s96, %s98
      %p102 = scmp.eq.s32.totalorder %s29, 0
      %p103 = por %p101, %p102
      %p104 = scmp.ne.s32.totalorder %s96, %s98
      %p105 = scmp.eq.s32.totalorder %s34, 3
      %p106 = por %p104, %p105
      %p107 = scmp.ne.s32.totalorder %s98, %s99
      %p108 = scmp.eq.s32.totalorder %s34, 0
      %p109 = por %p107, %p108
      %p110 = scmp.ne.s32.totalorder %s98, %s99
      %p111 = scmp.eq.s32.totalorder %s35, 3
      %p112 = por %p110, %p111
      %p114 = scmp.ne.s32.totalorder %s99, %s113
      %p115 = scmp.eq.s32.totalorder %s35, 0
      %p116 = por %p114, %p115
      %s118 = sadd.s32 %s117, 1
      %p121 = scmp.eq.s32.totalorder %s29, 3
      %p122 = scmp.ne.s32.totalorder %s117, %s119
      %p123 = scmp.eq.s32.totalorder %s29, 0
      %p124 = por %p122, %p123
      %p125 = scmp.ne.s32.totalorder %s117, %s119
      %p126 = scmp.eq.s32.totalorder %s34, 3
      %p127 = por %p125, %p126
      %p128 = scmp.ne.s32.totalorder %s119, %s120
      %p129 = scmp.eq.s32.totalorder %s34, 0
      %p130 = por %p128, %p129
      %p131 = scmp.ne.s32.totalorder %s119, %s120
      %p132 = scmp.eq.s32.totalorder %s35, 3
      %p133 = por %p131, %p132
      %p135 = scmp.ne.s32.totalorder %s120, %s134
      %p136 = scmp.eq.s32.totalorder %s35, 0
      %p137 = por %p135, %p136
      %s139 = sadd.s32 %s138, 1
      %p142 = scmp.eq.s32.totalorder %s29, 3
      %p143 = scmp.ne.s32.totalorder %s138, %s140
      %p144 = scmp.eq.s32.totalorder %s29, 0
      %p145 = por %p143, %p144
      %p146 = scmp.ne.s32.totalorder %s138, %s140
      %p147 = scmp.eq.s32.totalorder %s34, 3
      %p148 = por %p146, %p147
      %p149 = scmp.ne.s32.totalorder %s140, %s141
      %p150 = scmp.eq.s32.totalorder %s34, 0
      %p151 = por %p149, %p150
      %p152 = scmp.ne.s32.totalorder %s140, %s141
      %p153 = scmp.eq.s32.totalorder %s35, 3
      %p154 = por %p152, %p153
      %p156 = scmp.ne.s32.totalorder %s141, %s155
      %p157 = scmp.eq.s32.totalorder %s35, 0
      %p158 = por %p156, %p157
      %s159 = ssub.s32 %s37, %s44
      %p160 = scmp.eq.s32.totalorder %s159, 0
      %s162 = sadd.s32 %s161, 1
      %s163 = scalar_select %p160, %s161, %s162
      %p166 = pneg %p160
      %p167 = scmp.eq.s32.totalorder %s29, 3
      %p168 = por %p166, %p167
      %p169 = scmp.ne.s32.totalorder %s161, %s164
      %p170 = scmp.eq.s32.totalorder %s29, 0
      %p171 = por %p169, %p170
      %p172 = scmp.ne.s32.totalorder %s161, %s164
      %p173 = scmp.eq.s32.totalorder %s34, 3
      %p174 = por %p172, %p173
      %p175 = scmp.ne.s32.totalorder %s164, %s165
      %p176 = scmp.eq.s32.totalorder %s34, 0
      %p177 = por %p175, %p176
      %p178 = scmp.ne.s32.totalorder %s164, %s165
      %p179 = scmp.eq.s32.totalorder %s35, 3
      %p180 = por %p178, %p179
      %p182 = scmp.ne.s32.totalorder %s165, %s181
      %p183 = scmp.eq.s32.totalorder %s35, 0
      %p184 = por %p182, %p183
      %s185 = ssub.s32 %s37, %s44
      %p186 = scmp.eq.s32.totalorder %s185, 0
      %s188 = sadd.s32 %s187, 1
      %s189 = scalar_select %p186, %s187, %s188
      %p192 = pneg %p186
      %p193 = scmp.eq.s32.totalorder %s29, 3
      %p194 = por %p192, %p193
      %p195 = scmp.ne.s32.totalorder %s187, %s190
      %p196 = scmp.eq.s32.totalorder %s29, 0
      %p197 = por %p195, %p196
      %p198 = scmp.ne.s32.totalorder %s187, %s190
      %p199 = scmp.eq.s32.totalorder %s34, 3
      %p200 = por %p198, %p199
      %p201 = scmp.ne.s32.totalorder %s190, %s191
      %p202 = scmp.eq.s32.totalorder %s34, 0
      %p203 = por %p201, %p202
      %p204 = scmp.ne.s32.totalorder %s190, %s191
      %p205 = scmp.eq.s32.totalorder %s35, 3
      %p206 = por %p204, %p205
      %p208 = scmp.ne.s32.totalorder %s191, %s207
      %p209 = scmp.eq.s32.totalorder %s35, 0
      %p210 = por %p208, %p209
      %s211 = ssub.s32 %s37, %s44
      %p212 = scmp.eq.s32.totalorder %s211, 0
      %s214 = sadd.s32 %s213, 1
      %s215 = scalar_select %p212, %s213, %s214
      %p218 = pneg %p212
      %p219 = scmp.eq.s32.totalorder %s29, 3
      %p220 = por %p218, %p219
      %p221 = scmp.ne.s32.totalorder %s213, %s216
      %p222 = scmp.eq.s32.totalorder %s29, 0
      %p223 = por %p221, %p222
      %p224 = scmp.ne.s32.totalorder %s213, %s216
      %p225 = scmp.eq.s32.totalorder %s34, 3
      %p226 = por %p224, %p225
      %p227 = scmp.ne.s32.totalorder %s216, %s217
      %p228 = scmp.eq.s32.totalorder %s34, 0
      %p229 = por %p227, %p228
      %p230 = scmp.ne.s32.totalorder %s216, %s217
      %p231 = scmp.eq.s32.totalorder %s35, 3
      %p232 = por %p230, %p231
      %p234 = scmp.ne.s32.totalorder %s217, %s233
      %p235 = scmp.eq.s32.totalorder %s35, 0
      %p236 = por %p234, %p235
      %s237 = ssub.s32 %s37, %s44
      %p238 = scmp.eq.s32.totalorder %s237, 0
      %s240 = sadd.s32 %s239, 1
      %s241 = scalar_select %p238, %s239, %s240
      %p244 = pneg %p238
      %p245 = scmp.eq.s32.totalorder %s29, 3
      %p246 = por %p244, %p245
      %p247 = scmp.ne.s32.totalorder %s239, %s242
      %p248 = scmp.eq.s32.totalorder %s29, 0
      %p249 = por %p247, %p248
      %p250 = scmp.ne.s32.totalorder %s239, %s242
      %p251 = scmp.eq.s32.totalorder %s34, 3
      %p252 = por %p250, %p251
      %p253 = scmp.ne.s32.totalorder %s242, %s243
      %p254 = scmp.eq.s32.totalorder %s34, 0
      %p255 = por %p253, %p254
      %p256 = scmp.ne.s32.totalorder %s242, %s243
      %p257 = scmp.eq.s32.totalorder %s35, 3
      %p258 = por %p256, %p257
      %p260 = scmp.ne.s32.totalorder %s243, %s259
      %p261 = scmp.eq.s32.totalorder %s35, 0
      %p262 = por %p260, %p261
      %s263 = ssub.s32 %s37, %s44
      %p264 = scmp.eq.s32.totalorder %s263, 0
      %s266 = sadd.s32 %s265, 1
      %s267 = scalar_select %p264, %s265, %s266
      %p270 = pneg %p264
      %p271 = scmp.eq.s32.totalorder %s29, 3
      %p272 = por %p270, %p271
      %p273 = scmp.ne.s32.totalorder %s265, %s268
      %p274 = scmp.eq.s32.totalorder %s29, 0
      %p275 = por %p273, %p274
      %p276 = scmp.ne.s32.totalorder %s265, %s268
      %p277 = scmp.eq.s32.totalorder %s34, 3
      %p278 = por %p276, %p277
      %p279 = scmp.ne.s32.totalorder %s268, %s269
      %p280 = scmp.eq.s32.totalorder %s34, 0
      %p281 = por %p279, %p280
      %p282 = scmp.ne.s32.totalorder %s268, %s269
      %p283 = scmp.eq.s32.totalorder %s35, 3
      %p284 = por %p282, %p283
      %p286 = scmp.ne.s32.totalorder %s269, %s285
      %p287 = scmp.eq.s32.totalorder %s35, 0
      %p288 = por %p286, %p287
      %s289 = ssub.s32 %s37, %s44
      %p290 = scmp.eq.s32.totalorder %s289, 0
      %s292 = sadd.s32 %s291, 1
      %s293 = scalar_select %p290, %s291, %s292
      %p296 = pneg %p290
      %p297 = scmp.eq.s32.totalorder %s29, 3
      %p298 = por %p296, %p297
      %p299 = scmp.ne.s32.totalorder %s291, %s294
      %p300 = scmp.eq.s32.totalorder %s29, 0
      %p301 = por %p299, %p300
      %p302 = scmp.ne.s32.totalorder %s291, %s294
      %p303 = scmp.eq.s32.totalorder %s34, 3
      %p304 = por %p302, %p303
      %p305 = scmp.ne.s32.totalorder %s294, %s295
      %p306 = scmp.eq.s32.totalorder %s34, 0
      %p307 = por %p305, %p306
      %p308 = scmp.ne.s32.totalorder %s294, %s295
      %p309 = scmp.eq.s32.totalorder %s35, 3
      %p310 = por %p308, %p309
      %p312 = scmp.ne.s32.totalorder %s295, %s311
      %p313 = scmp.eq.s32.totalorder %s35, 0
      %p314 = por %p312, %p313
      %s315 = ssub.s32 %s37, %s44
      %p316 = scmp.eq.s32.totalorder %s315, 0
      %s318 = sadd.s32 %s317, 1
      %s319 = scalar_select %p316, %s317, %s318
      %p322 = pneg %p316
      %p323 = scmp.eq.s32.totalorder %s29, 3
      %p324 = por %p322, %p323
      %p325 = scmp.ne.s32.totalorder %s317, %s320
      %p326 = scmp.eq.s32.totalorder %s29, 0
      %p327 = por %p325, %p326
      %p328 = scmp.ne.s32.totalorder %s317, %s320
      %p329 = scmp.eq.s32.totalorder %s34, 3
      %p330 = por %p328, %p329
      %p331 = scmp.ne.s32.totalorder %s320, %s321
      %p332 = scmp.eq.s32.totalorder %s34, 0
      %p333 = por %p331, %p332
      %p334 = scmp.ne.s32.totalorder %s320, %s321
      %p335 = scmp.eq.s32.totalorder %s35, 3
      %p336 = por %p334, %p335
      %p338 = scmp.ne.s32.totalorder %s321, %s337
      %p339 = scmp.eq.s32.totalorder %s35, 0
      %p340 = por %p338, %p339
      %s341 = ssub.s32 %s37, %s44
      %p342 = scmp.eq.s32.totalorder %s341, 0
      %s344 = sadd.s32 %s343, 1
      %s345 = scalar_select %p342, %s343, %s344
      %p348 = pneg %p342
      %p349 = scmp.eq.s32.totalorder %s29, 3
      %p350 = por %p348, %p349
      %p351 = scmp.ne.s32.totalorder %s343, %s346
      %p352 = scmp.eq.s32.totalorder %s29, 0
      %p353 = por %p351, %p352
      %p354 = scmp.ne.s32.totalorder %s343, %s346
      %p355 = scmp.eq.s32.totalorder %s34, 3
      %p356 = por %p354, %p355
      %p357 = scmp.ne.s32.totalorder %s346, %s347
      %p358 = scmp.eq.s32.totalorder %s34, 0
      %p359 = por %p357, %p358
      %p360 = scmp.ne.s32.totalorder %s346, %s347
      %p361 = scmp.eq.s32.totalorder %s35, 3
      %p362 = por %p360, %p361
      %p364 = scmp.ne.s32.totalorder %s347, %s363
      %p365 = scmp.eq.s32.totalorder %s35, 0
      %p366 = por %p364, %p365
      %s367 = ssub.s32 %s37, %s44
      %p368 = scmp.eq.s32.totalorder %s367, 0
      %s370 = sadd.s32 %s369, 1
      %s371 = scalar_select %p368, %s369, %s370
      %p374 = pneg %p368
      %p375 = scmp.eq.s32.totalorder %s29, 3
      %p376 = por %p374, %p375
      %p377 = scmp.ne.s32.totalorder %s369, %s372
      %p378 = scmp.eq.s32.totalorder %s29, 0
      %p379 = por %p377, %p378
      %p380 = scmp.ne.s32.totalorder %s369, %s372
      %p381 = scmp.eq.s32.totalorder %s34, 3
      %p382 = por %p380, %p381
      %p383 = scmp.ne.s32.totalorder %s372, %s373
      %p384 = scmp.eq.s32.totalorder %s34, 0
      %p385 = por %p383, %p384
      %p386 = scmp.ne.s32.totalorder %s372, %s373
      %p387 = scmp.eq.s32.totalorder %s35, 3
      %p388 = por %p386, %p387
      %p390 = scmp.ne.s32.totalorder %s373, %s389
      %p391 = scmp.eq.s32.totalorder %s35, 0
      %p392 = por %p390, %p391
      %s393 = ssub.s32 %s37, %s44
      %p394 = scmp.eq.s32.totalorder %s393, 0
      %s396 = sadd.s32 %s395, 1
      %s397 = scalar_select %p394, %s395, %s396
      %p400 = pneg %p394
      %p401 = scmp.eq.s32.totalorder %s29, 3
      %p402 = por %p400, %p401
      %p403 = scmp.ne.s32.totalorder %s395, %s398
      %p404 = scmp.eq.s32.totalorder %s29, 0
      %p405 = por %p403, %p404
      %p406 = scmp.ne.s32.totalorder %s395, %s398
      %p407 = scmp.eq.s32.totalorder %s34, 3
      %p408 = por %p406, %p407
      %p409 = scmp.ne.s32.totalorder %s398, %s399
      %p410 = scmp.eq.s32.totalorder %s34, 0
      %p411 = por %p409, %p410
      %p412 = scmp.ne.s32.totalorder %s398, %s399
      %p413 = scmp.eq.s32.totalorder %s35, 3
      %p414 = por %p412, %p413
      %p416 = scmp.ne.s32.totalorder %s399, %s415
      %p417 = scmp.eq.s32.totalorder %s35, 0
      %p418 = por %p416, %p417
      %s419 = ssub.s32 %s37, %s44
      %p420 = scmp.eq.s32.totalorder %s419, 0
      %s422 = sadd.s32 %s421, 1
      %s423 = scalar_select %p420, %s421, %s422
      %p426 = pneg %p420
      %p427 = scmp.eq.s32.totalorder %s29, 3
      %p428 = por %p426, %p427
      %p429 = scmp.ne.s32.totalorder %s421, %s424
      %p430 = scmp.eq.s32.totalorder %s29, 0
      %p431 = por %p429, %p430
      %p432 = scmp.ne.s32.totalorder %s421, %s424
      %p433 = scmp.eq.s32.totalorder %s34, 3
      %p434 = por %p432, %p433
      %p435 = scmp.ne.s32.totalorder %s424, %s425
      %p436 = scmp.eq.s32.totalorder %s34, 0
      %p437 = por %p435, %p436
      %p438 = scmp.ne.s32.totalorder %s424, %s425
      %p439 = scmp.eq.s32.totalorder %s35, 3
      %p440 = por %p438, %p439
      %p442 = scmp.ne.s32.totalorder %s425, %s441
      %p443 = scmp.eq.s32.totalorder %s35, 0
      %p444 = por %p442, %p443
      %s445 = ssub.s32 %s37, %s44
      %p446 = scmp.eq.s32.totalorder %s445, 0
      %s448 = sadd.s32 %s447, 1
      %s449 = scalar_select %p446, %s447, %s448
      %p452 = pneg %p446
      %p453 = scmp.eq.s32.totalorder %s29, 3
      %p454 = por %p452, %p453
      %p455 = scmp.ne.s32.totalorder %s447, %s450
      %p456 = scmp.eq.s32.totalorder %s29, 0
      %p457 = por %p455, %p456
      %p458 = scmp.ne.s32.totalorder %s447, %s450
      %p459 = scmp.eq.s32.totalorder %s34, 3
      %p460 = por %p458, %p459
      %p461 = scmp.ne.s32.totalorder %s450, %s451
      %p462 = scmp.eq.s32.totalorder %s34, 0
      %p463 = por %p461, %p462
      %p464 = scmp.ne.s32.totalorder %s450, %s451
      %p465 = scmp.eq.s32.totalorder %s35, 3
      %p466 = por %p464, %p465
      %p468 = scmp.ne.s32.totalorder %s451, %s467
      %p469 = scmp.eq.s32.totalorder %s35, 0
      %p470 = por %p468, %p469
      %s472 = sadd.s32 %s471, 1
      %p475 = scmp.eq.s32.totalorder %s29, 3
      %p476 = scmp.ne.s32.totalorder %s471, %s473
      %p477 = scmp.eq.s32.totalorder %s29, 0
      %p478 = por %p476, %p477
      %p479 = scmp.ne.s32.totalorder %s471, %s473
      %p480 = scmp.eq.s32.totalorder %s34, 3
      %p481 = por %p479, %p480
      %p482 = scmp.ne.s32.totalorder %s473, %s474
      %p483 = scmp.eq.s32.totalorder %s34, 0
      %p484 = por %p482, %p483
      %p485 = scmp.ne.s32.totalorder %s473, %s474
      %p486 = scmp.eq.s32.totalorder %s35, 3
      %p487 = por %p485, %p486
      %p489 = scmp.ne.s32.totalorder %s474, %s488
      %p490 = scmp.eq.s32.totalorder %s35, 0
      %p491 = por %p489, %p490
      %s493 = sadd.s32 %s492, 1
      %p496 = scmp.eq.s32.totalorder %s29, 3
      %p497 = scmp.ne.s32.totalorder %s492, %s494
      %p498 = scmp.eq.s32.totalorder %s29, 0
      %p499 = por %p497, %p498
      %p500 = scmp.ne.s32.totalorder %s492, %s494
      %p501 = scmp.eq.s32.totalorder %s34, 3
      %p502 = por %p500, %p501
      %p503 = scmp.ne.s32.totalorder %s494, %s495
      %p504 = scmp.eq.s32.totalorder %s34, 0
      %p505 = por %p503, %p504
      %p506 = scmp.ne.s32.totalorder %s494, %s495
      %p507 = scmp.eq.s32.totalorder %s35, 3
      %p508 = por %p506, %p507
      %p510 = scmp.ne.s32.totalorder %s495, %s509
      %p511 = scmp.eq.s32.totalorder %s35, 0
      %p512 = por %p510, %p511
      %s514 = sadd.s32 %s513, 1
      %p517 = scmp.eq.s32.totalorder %s29, 3
      %p518 = scmp.ne.s32.totalorder %s513, %s515
      %p519 = scmp.eq.s32.totalorder %s29, 0
      %p520 = por %p518, %p519
      %p521 = scmp.ne.s32.totalorder %s513, %s515
      %p522 = scmp.eq.s32.totalorder %s34, 3
      %p523 = por %p521, %p522
      %p524 = scmp.ne.s32.totalorder %s515, %s516
      %p525 = scmp.eq.s32.totalorder %s34, 0
      %p526 = por %p524, %p525
      %p527 = scmp.ne.s32.totalorder %s515, %s516
      %p528 = scmp.eq.s32.totalorder %s35, 3
      %p529 = por %p527, %p528
      %p531 = scmp.ne.s32.totalorder %s516, %s530
      %p532 = scmp.eq.s32.totalorder %s35, 0
      %p533 = por %p531, %p532
      %s534 = ssub.s32 %s36, %s48
      %p535 = scmp.eq.s32.totalorder %s534, 0
      %s537 = sadd.s32 %s536, 1
      %s538 = scalar_select %p535, %s536, %s537
      %p541 = pneg %p535
      %p542 = scmp.eq.s32.totalorder %s29, 3
      %p543 = por %p541, %p542
      %p544 = scmp.ne.s32.totalorder %s536, %s539
      %p545 = scmp.eq.s32.totalorder %s29, 0
      %p546 = por %p544, %p545
      %p547 = scmp.ne.s32.totalorder %s536, %s539
      %p548 = scmp.eq.s32.totalorder %s34, 3
      %p549 = por %p547, %p548
      %p550 = scmp.ne.s32.totalorder %s539, %s540
      %p551 = scmp.eq.s32.totalorder %s34, 0
      %p552 = por %p550, %p551
      %p553 = scmp.ne.s32.totalorder %s539, %s540
      %p554 = scmp.eq.s32.totalorder %s35, 3
      %p555 = por %p553, %p554
      %p557 = scmp.ne.s32.totalorder %s540, %s556
      %p558 = scmp.eq.s32.totalorder %s35, 0
      %p559 = por %p557, %p558
      %p560 = scmp.le.s32.totalorder 1, %s29
      %p561 = scmp.lt.s32.totalorder %s29, 5
      %p562 = pnand %p560, %p561
      %p563 = pneg %p562
      // Predicated region
      $region9: #{clip_forward.3} parent=5 // pred_check
        _
      $region10: #{clip_forward.3} parent=5 // pred_check_branch
        %565 = sbr.rel (%p562) target = $region12
      $region11: #{clip_forward.3} parent=5 // pred_region
        %s566 = ssub.s32 %s29, 1
        // Predicated region
        $region13: #{clip_forward.3} parent=11 // pred_check
          %p567 = pneg %p88
        $region14: #{clip_forward.3} parent=11 // pred_check_branch
          %569 = sbr.rel (%p567) target = $region16
        $region15: #{clip_forward.3} parent=11 // pred_region
          _
        $region16: #{clip_forward.3} parent=11 // pred_fallthru
          _
        // Predicated region
        $region17: #{clip_forward.3} parent=11 // pred_check
          %p570 = pneg %p109
        $region18: #{clip_forward.3} parent=11 // pred_check_branch
          %572 = sbr.rel (%p570) target = $region20
        $region19: #{clip_forward.3} parent=11 // pred_region
          _
        $region20: #{clip_forward.3} parent=11 // pred_fallthru
          _
        // Predicated region
        $region21: #{clip_forward.3} parent=11 // pred_check
          %p573 = pneg %p130
        $region22: #{clip_forward.3} parent=11 // pred_check_branch
          %575 = sbr.rel (%p573) target = $region24
        $region23: #{clip_forward.3} parent=11 // pred_region
          _
        $region24: #{clip_forward.3} parent=11 // pred_fallthru
          _
        // Predicated region
        $region25: #{clip_forward.3} parent=11 // pred_check
          %p576 = pneg %p151
        $region26: #{clip_forward.3} parent=11 // pred_check_branch
          %578 = sbr.rel (%p576) target = $region28
        $region27: #{clip_forward.3} parent=11 // pred_region
          _
        $region28: #{clip_forward.3} parent=11 // pred_fallthru
          _
        // Predicated region
        $region29: #{clip_forward.3} parent=11 // pred_check
          %p579 = pneg %p484
        $region30: #{clip_forward.3} parent=11 // pred_check_branch
          %581 = sbr.rel (%p579) target = $region32
        $region31: #{clip_forward.3} parent=11 // pred_region
          _
        $region32: #{clip_forward.3} parent=11 // pred_fallthru
          _
        // Predicated region
        $region33: #{clip_forward.3} parent=11 // pred_check
          %p582 = pneg %p505
        $region34: #{clip_forward.3} parent=11 // pred_check_branch
          %584 = sbr.rel (%p582) target = $region36
        $region35: #{clip_forward.3} parent=11 // pred_region
          _
        $region36: #{clip_forward.3} parent=11 // pred_fallthru
          _
        // Predicated region
        $region37: #{clip_forward.3} parent=11 // pred_check
          %p585 = pneg %p526
        $region38: #{clip_forward.3} parent=11 // pred_check_branch
          %587 = sbr.rel (%p585) target = $region40
        $region39: #{clip_forward.3} parent=11 // pred_region
          _
        $region40: #{clip_forward.3} parent=11 // pred_fallthru
          _
      $region12: #{clip_forward.3} parent=5 // pred_fallthru
        _
      %p588 = scmp.lt.s32.totalorder %s29, 4
      // Predicated region
      $region41: #{clip_forward.3} parent=5 // pred_check
        %p589 = pneg %p588
      $region42: #{clip_forward.3} parent=5 // pred_check_branch
        %591 = sbr.rel (%p589) target = $region44
      $region43: #{clip_forward.3} parent=5 // pred_region
        // Predicated region
        $region45: #{clip_forward.3} parent=43 // pred_check
          %p592 = pneg %p61
        $region46: #{clip_forward.3} parent=43 // pred_check_branch
          %594 = sbr.rel (%p592) target = $region48
        $region47: #{clip_forward.3} parent=43 // pred_region
          %p595 = scmp.lt.s32.totalorder %s36, 1
          %s596 = scalar_select %p595, %s36, 1
          %s597 = smul.addr %s596, 2
          %s598 = smul.addr %s597, 8
          %s599 = scalar_lea.vmem %s0, %s598
        $region48: #{clip_forward.3} parent=43 // pred_fallthru
          _
        // Predicated region
        $region49: #{clip_forward.3} parent=43 // pred_check
          %p600 = pneg %p171
        $region50: #{clip_forward.3} parent=43 // pred_check_branch
          %602 = sbr.rel (%p600) target = $region52
        $region51: #{clip_forward.3} parent=43 // pred_region
          %p603 = scmp.lt.s32.totalorder %s37, 1
          %s604 = scalar_select %p603, %s37, 1
          %s605 = scalar_lea.vmem %s5, %s604
        $region52: #{clip_forward.3} parent=43 // pred_fallthru
          _
        // Predicated region
        $region53: #{clip_forward.3} parent=43 // pred_check
          %p606 = pneg %p197
        $region54: #{clip_forward.3} parent=43 // pred_check_branch
          %608 = sbr.rel (%p606) target = $region56
        $region55: #{clip_forward.3} parent=43 // pred_region
          %p609 = scmp.lt.s32.totalorder %s37, 1
          %s610 = scalar_select %p609, %s37, 1
          %s611 = scalar_lea.vmem %s6, %s610
        $region56: #{clip_forward.3} parent=43 // pred_fallthru
          _
        // Predicated region
        $region57: #{clip_forward.3} parent=43 // pred_check
          %p612 = pneg %p223
        $region58: #{clip_forward.3} parent=43 // pred_check_branch
          %614 = sbr.rel (%p612) target = $region60
        $region59: #{clip_forward.3} parent=43 // pred_region
          %p615 = scmp.lt.s32.totalorder %s37, 1
          %s616 = scalar_select %p615, %s37, 1
          %s617 = smul.addr %s616, 4
          %s618 = smul.addr %s617, 4
          %s619 = scalar_lea.vmem %s7, %s618
        $region60: #{clip_forward.3} parent=43 // pred_fallthru
          _
        // Predicated region
        $region61: #{clip_forward.3} parent=43 // pred_check
          %p620 = pneg %p249
        $region62: #{clip_forward.3} parent=43 // pred_check_branch
          %622 = sbr.rel (%p620) target = $region64
        $region63: #{clip_forward.3} parent=43 // pred_region
          %p623 = scmp.lt.s32.totalorder %s37, 1
          %s624 = scalar_select %p623, %s37, 1
          %s625 = scalar_lea.vmem %s8, %s624
        $region64: #{clip_forward.3} parent=43 // pred_fallthru
          _
        // Predicated region
        $region65: #{clip_forward.3} parent=43 // pred_check
          %p626 = pneg %p275
        $region66: #{clip_forward.3} parent=43 // pred_check_branch
          %628 = sbr.rel (%p626) target = $region68
        $region67: #{clip_forward.3} parent=43 // pred_region
          %p629 = scmp.lt.s32.totalorder %s37, 1
          %s630 = scalar_select %p629, %s37, 1
          %s631 = smul.addr %s630, 4
          %s632 = smul.addr %s631, 4
          %s633 = scalar_lea.vmem %s9, %s632
        $region68: #{clip_forward.3} parent=43 // pred_fallthru
          _
        // Predicated region
        $region69: #{clip_forward.3} parent=43 // pred_check
          %p634 = pneg %p301
        $region70: #{clip_forward.3} parent=43 // pred_check_branch
          %636 = sbr.rel (%p634) target = $region72
        $region71: #{clip_forward.3} parent=43 // pred_region
          %p637 = scmp.lt.s32.totalorder %s37, 1
          %s638 = scalar_select %p637, %s37, 1
          %s639 = scalar_lea.vmem %s10, %s638
        $region72: #{clip_forward.3} parent=43 // pred_fallthru
          _
        // Predicated region
        $region73: #{clip_forward.3} parent=43 // pred_check
          %p640 = pneg %p327
        $region74: #{clip_forward.3} parent=43 // pred_check_branch
          %642 = sbr.rel (%p640) target = $region76
        $region75: #{clip_forward.3} parent=43 // pred_region
          %p643 = scmp.lt.s32.totalorder %s37, 1
          %s644 = scalar_select %p643, %s37, 1
          %s645 = scalar_lea.vmem %s11, %s644
        $region76: #{clip_forward.3} parent=43 // pred_fallthru
          _
        // Predicated region
        $region77: #{clip_forward.3} parent=43 // pred_check
          %p646 = pneg %p353
        $region78: #{clip_forward.3} parent=43 // pred_check_branch
          %648 = sbr.rel (%p646) target = $region80
        $region79: #{clip_forward.3} parent=43 // pred_region
          %p649 = scmp.lt.s32.totalorder %s37, 1
          %s650 = scalar_select %p649, %s37, 1
          %s651 = scalar_lea.vmem %s12, %s650
        $region80: #{clip_forward.3} parent=43 // pred_fallthru
          _
        // Predicated region
        $region81: #{clip_forward.3} parent=43 // pred_check
          %p652 = pneg %p379
        $region82: #{clip_forward.3} parent=43 // pred_check_branch
          %654 = sbr.rel (%p652) target = $region84
        $region83: #{clip_forward.3} parent=43 // pred_region
          %p655 = scmp.lt.s32.totalorder %s37, 1
          %s656 = scalar_select %p655, %s37, 1
          %s657 = smul.addr %s656, 4
          %s658 = smul.addr %s657, 4
          %s659 = scalar_lea.vmem %s13, %s658
        $region84: #{clip_forward.3} parent=43 // pred_fallthru
          _
        // Predicated region
        $region85: #{clip_forward.3} parent=43 // pred_check
          %p660 = pneg %p405
        $region86: #{clip_forward.3} parent=43 // pred_check_branch
          %662 = sbr.rel (%p660) target = $region88
        $region87: #{clip_forward.3} parent=43 // pred_region
          %p663 = scmp.lt.s32.totalorder %s37, 1
          %s664 = scalar_select %p663, %s37, 1
          %s665 = scalar_lea.vmem %s14, %s664
        $region88: #{clip_forward.3} parent=43 // pred_fallthru
          _
        // Predicated region
        $region89: #{clip_forward.3} parent=43 // pred_check
          %p666 = pneg %p431
        $region90: #{clip_forward.3} parent=43 // pred_check_branch
          %668 = sbr.rel (%p666) target = $region92
        $region91: #{clip_forward.3} parent=43 // pred_region
          %p669 = scmp.lt.s32.totalorder %s37, 1
          %s670 = scalar_select %p669, %s37, 1
          %s671 = smul.addr %s670, 16
          %s672 = smul.addr %s671, 4
          %s673 = scalar_lea.vmem %s15, %s672
        $region92: #{clip_forward.3} parent=43 // pred_fallthru
          _
        // Predicated region
        $region93: #{clip_forward.3} parent=43 // pred_check
          %p674 = pneg %p457
        $region94: #{clip_forward.3} parent=43 // pred_check_branch
          %676 = sbr.rel (%p674) target = $region96
        $region95: #{clip_forward.3} parent=43 // pred_region
          %p677 = scmp.lt.s32.totalorder %s37, 1
          %s678 = scalar_select %p677, %s37, 1
          %s679 = scalar_lea.vmem %s16, %s678
        $region96: #{clip_forward.3} parent=43 // pred_fallthru
          _
      $region44: #{clip_forward.3} parent=5 // pred_fallthru
        _
      %p680 = scmp.le.s32.totalorder 1, %s29
      %p681 = scmp.lt.s32.totalorder %s29, 5
      %p682 = pnand %p680, %p681
      %p683 = pneg %p682
      // Predicated region
      $region97: #{clip_forward.3} parent=5 // pred_check
        _
      $region98: #{clip_forward.3} parent=5 // pred_check_branch
        %685 = sbr.rel (%p682) target = $region100
      $region99: #{clip_forward.3} parent=5 // pred_region
        %s686 = ssub.s32 %s29, 1
        %p687 = scmp.lt.s32.totalorder %s38, 1
        %s688 = scalar_select %p687, %s38, 1
        %s689 = smul.addr %s688, 2
        %s690 = smul.addr %s689, 8
        %s691 = scalar_lea.vmem %s0, %s690
        %p692 = pneg %p67
        %p693 = pneg %p64
        %p694 = pneg %p88
        %p695 = pneg %p85
        %p696 = pneg %p109
        %p697 = pneg %p106
        %p698 = pneg %p130
        %p699 = pneg %p127
        %p700 = pneg %p151
        %p701 = pneg %p148
        %p702 = scmp.lt.s32.totalorder %s39, 1
        %s703 = scalar_select %p702, %s39, 1
        %s704 = scalar_lea.vmem %s5, %s703
        %p705 = pneg %p177
        %p706 = pneg %p174
        %p707 = scmp.lt.s32.totalorder %s39, 1
        %s708 = scalar_select %p707, %s39, 1
        %s709 = scalar_lea.vmem %s6, %s708
        %p710 = pneg %p203
        %p711 = pneg %p200
        %p712 = scmp.lt.s32.totalorder %s39, 1
        %s713 = scalar_select %p712, %s39, 1
        %s714 = smul.addr %s713, 4
        %s715 = smul.addr %s714, 4
        %s716 = scalar_lea.vmem %s7, %s715
        %p717 = pneg %p229
        %p718 = pneg %p226
        %p719 = scmp.lt.s32.totalorder %s39, 1
        %s720 = scalar_select %p719, %s39, 1
        %s721 = scalar_lea.vmem %s8, %s720
        %p722 = pneg %p255
        %p723 = pneg %p252
        %p724 = scmp.lt.s32.totalorder %s39, 1
        %s725 = scalar_select %p724, %s39, 1
        %s726 = smul.addr %s725, 4
        %s727 = smul.addr %s726, 4
        %s728 = scalar_lea.vmem %s9, %s727
        %p729 = pneg %p281
        %p730 = pneg %p278
        %p731 = scmp.lt.s32.totalorder %s39, 1
        %s732 = scalar_select %p731, %s39, 1
        %s733 = scalar_lea.vmem %s10, %s732
        %p734 = pneg %p307
        %p735 = pneg %p304
        %p736 = scmp.lt.s32.totalorder %s39, 1
        %s737 = scalar_select %p736, %s39, 1
        %s738 = scalar_lea.vmem %s11, %s737
        %p739 = pneg %p333
        %p740 = pneg %p330
        %p741 = scmp.lt.s32.totalorder %s39, 1
        %s742 = scalar_select %p741, %s39, 1
        %s743 = scalar_lea.vmem %s12, %s742
        %p744 = pneg %p359
        %p745 = pneg %p356
        %p746 = scmp.lt.s32.totalorder %s39, 1
        %s747 = scalar_select %p746, %s39, 1
        %s748 = smul.addr %s747, 4
        %s749 = smul.addr %s748, 4
        %s750 = scalar_lea.vmem %s13, %s749
        %p751 = pneg %p385
        %p752 = pneg %p382
        %p753 = scmp.lt.s32.totalorder %s39, 1
        %s754 = scalar_select %p753, %s39, 1
        %s755 = scalar_lea.vmem %s14, %s754
        %p756 = pneg %p411
        %p757 = pneg %p408
        %p758 = scmp.lt.s32.totalorder %s39, 1
        %s759 = scalar_select %p758, %s39, 1
        %s760 = smul.addr %s759, 16
        %s761 = smul.addr %s760, 4
        %s762 = scalar_lea.vmem %s15, %s761
        %p763 = pneg %p437
        %p764 = pneg %p434
        %p765 = scmp.lt.s32.totalorder %s39, 1
        %s766 = scalar_select %p765, %s39, 1
        %s767 = scalar_lea.vmem %s16, %s766
        %p768 = pneg %p463
        %p769 = pneg %p460
        %p770 = pneg %p484
        %p771 = pneg %p481
        %p772 = pneg %p505
        %p773 = pneg %p502
        %p774 = pneg %p526
        %p775 = pneg %p523
        %p776 = pneg %p552
        %p777 = pneg %p549
        %s778 = sand.u32 %s539, 1
        %s779 = scalar_lea.sflag [#allocation4], %s778
        %s780 = sand.u32 %s539, 1
        %s781 = scalar_lea.vmem [#allocation3], %s780
        %p782 = scmp.lt.s32.totalorder %s38, 1
        %s783 = scalar_select %p782, %s38, 1
        %s784 = smul.addr %s783, 2
        %s785 = smul.addr %s784, 8
        %s786 = scalar_lea.vmem %s0, %s785
        %p787 = scmp.lt.s32.totalorder %s39, 1
        %s788 = scalar_select %p787, %s39, 1
        %s789 = scalar_lea.vmem %s5, %s788
        %p790 = scmp.lt.s32.totalorder %s39, 1
        %s791 = scalar_select %p790, %s39, 1
        %s792 = scalar_lea.vmem %s6, %s791
        %p793 = scmp.lt.s32.totalorder %s39, 1
        %s794 = scalar_select %p793, %s39, 1
        %s795 = smul.addr %s794, 4
        %s796 = smul.addr %s795, 4
        %s797 = scalar_lea.vmem %s7, %s796
        %p798 = scmp.lt.s32.totalorder %s39, 1
        %s799 = scalar_select %p798, %s39, 1
        %s800 = scalar_lea.vmem %s8, %s799
        %p801 = scmp.lt.s32.totalorder %s39, 1
        %s802 = scalar_select %p801, %s39, 1
        %s803 = smul.addr %s802, 4
        %s804 = smul.addr %s803, 4
        %s805 = scalar_lea.vmem %s9, %s804
        %p806 = scmp.lt.s32.totalorder %s39, 1
        %s807 = scalar_select %p806, %s39, 1
        %s808 = scalar_lea.vmem %s10, %s807
        %p809 = scmp.lt.s32.totalorder %s39, 1
        %s810 = scalar_select %p809, %s39, 1
        %s811 = scalar_lea.vmem %s11, %s810
        %p812 = scmp.lt.s32.totalorder %s39, 1
        %s813 = scalar_select %p812, %s39, 1
        %s814 = scalar_lea.vmem %s12, %s813
        %p815 = scmp.lt.s32.totalorder %s39, 1
        %s816 = scalar_select %p815, %s39, 1
        %s817 = smul.addr %s816, 4
        %s818 = smul.addr %s817, 4
        %s819 = scalar_lea.vmem %s13, %s818
        %p820 = scmp.lt.s32.totalorder %s39, 1
        %s821 = scalar_select %p820, %s39, 1
        %s822 = scalar_lea.vmem %s14, %s821
        %p823 = scmp.lt.s32.totalorder %s39, 1
        %s824 = scalar_select %p823, %s39, 1
        %s825 = smul.addr %s824, 16
        %s826 = smul.addr %s825, 4
        %s827 = scalar_lea.vmem %s15, %s826
        %p828 = scmp.lt.s32.totalorder %s39, 1
        %s829 = scalar_select %p828, %s39, 1
        %s830 = scalar_lea.vmem %s16, %s829
        %p832 = scmp.eq.s32.totalorder %s39, 0
        // Predicated region
        $region101: #{clip_forward.3} parent=99 // pred_check
          %p833 = pneg %p832
        $region102: #{clip_forward.3} parent=99 // pred_check_branch
          %835 = sbr.rel (%p833) target = $region104
        $region103: #{clip_forward.3} parent=99 // pred_region
          %v836 = vld [vmem:[%s786] sm:$0x1f]
          %v837 = vld [vmem:[%s786 + $0x8] sm:$0x1f]
          %v838 = vpack.c.bf16 %v836, %v836
          %v839 = vpack.c.bf16 %v837, %v837
          %v840 = vld [vmem:[%s1] sm:$0xf]
          %v841 = vld [vmem:[%s1 + $0x4] sm:$0xf]
          %v842 = vld [vmem:[%s1 + $0x8] sm:$0xf]
          %v843 = vld [vmem:[%s1 + $0xc] sm:$0xf]
          %v844 = vld [vmem:[%s1 + $0x10] sm:$0xf]
          %v845 = vld [vmem:[%s1 + $0x14] sm:$0xf]
          %v846 = vld [vmem:[%s1 + $0x18] sm:$0xf]
          %v847 = vld [vmem:[%s1 + $0x1c] sm:$0xf]
          %v848 = vld [vmem:[%s1 + $0x20] sm:$0xf]
          %v849 = vld [vmem:[%s1 + $0x24] sm:$0xf]
          %v850 = vld [vmem:[%s1 + $0x28] sm:$0xf]
          %v851 = vld [vmem:[%s1 + $0x2c] sm:$0xf]
          %v852 = vld [vmem:[%s1 + $0x30] sm:$0xf]
          %v853 = vld [vmem:[%s1 + $0x34] sm:$0xf]
          %v854 = vld [vmem:[%s1 + $0x38] sm:$0xf]
          %v855 = vld [vmem:[%s1 + $0x3c] sm:$0xf]
          %v856 = vld [vmem:[%s1 + $0x40] sm:$0xf]
          %v857 = vld [vmem:[%s1 + $0x44] sm:$0xf]
          %v858 = vld [vmem:[%s1 + $0x48] sm:$0xf]
          %v859 = vld [vmem:[%s1 + $0x4c] sm:$0xf]
          %v860 = vld [vmem:[%s1 + $0x50] sm:$0xf]
          %v861 = vld [vmem:[%s1 + $0x54] sm:$0xf]
          %v862 = vld [vmem:[%s1 + $0x58] sm:$0xf]
          %v863 = vld [vmem:[%s1 + $0x5c] sm:$0xf]
          %v864 = vld [vmem:[%s2] sm:$0x1f]
          %v889 = vunpack.c.l.b16 %v840
          %v890 = vunpack.c.l.b16 %v841
          %v891 = vunpack.c.l.b16 %v842
          %v892 = vunpack.c.l.b16 %v843
          %v893 = vunpack.c.l.b16 %v844
          %v894 = vunpack.c.l.b16 %v845
          %v895 = vunpack.c.l.b16 %v846
          %v896 = vunpack.c.l.b16 %v847
          %v897 = vunpack.c.l.b16 %v848
          %v898 = vunpack.c.l.b16 %v849
          %v899 = vunpack.c.l.b16 %v850
          %v900 = vunpack.c.l.b16 %v851
          %v901 = vunpack.c.l.b16 %v852
          %v902 = vunpack.c.l.b16 %v853
          %v903 = vunpack.c.l.b16 %v854
          %v904 = vunpack.c.l.b16 %v855
          %v905 = vunpack.c.l.b16 %v856
          %v906 = vunpack.c.l.b16 %v857
          %v907 = vunpack.c.l.b16 %v858
          %v908 = vunpack.c.l.b16 %v859
          %v909 = vunpack.c.l.b16 %v860
          %v910 = vunpack.c.l.b16 %v861
          %v911 = vunpack.c.l.b16 %v862
          %v912 = vunpack.c.l.b16 %v863
          %v913 = vpack.c.b16 %v890, %v889
          %v914 = vpack.c.b16 %v892, %v891
          %v915 = vpack.c.b16 %v894, %v893
          %v916 = vpack.c.b16 %v896, %v895
          %v917 = vpack.c.b16 %v898, %v897
          %v918 = vpack.c.b16 %v900, %v899
          %v919 = vpack.c.b16 %v902, %v901
          %v920 = vpack.c.b16 %v904, %v903
          %v921 = vpack.c.b16 %v906, %v905
          %v922 = vpack.c.b16 %v908, %v907
          %v923 = vpack.c.b16 %v910, %v909
          %v924 = vpack.c.b16 %v912, %v911
          %vm937 = vcmask 523264
          %v939 = vsel %vm937, %v839, 0
          %941 = vmatprep.subr.bf16.mxu0 0
          %942 = vmatpush1.bf16.msra.mxu0 %v913
          %943 = vmatprep.subr.bf16.mxu0 0
          %944 = vmatpush1.bf16.msra.mxu0 %v914
          %945 = vmatprep.subr.bf16.mxu0 0
          %946 = vmatpush1.bf16.msra.mxu0 %v915
          %947 = vmatprep.subr.bf16.mxu0 0
          %948 = vmatpush1.bf16.msra.mxu0 %v916
          %949 = vmatprep.subr.bf16.mxu0 0
          %950 = vmatpush1.bf16.msra.mxu0 %v917
          %951 = vmatprep.subr.bf16.mxu0 0
          %952 = vmatpush1.bf16.msra.mxu0 %v918
          %953 = vmatprep.subr.bf16.mxu0 0
          %954 = vmatpush1.bf16.msra.mxu0 %v919
          %955 = vmatprep.subr.bf16.mxu0 0
          %956 = vmatpush1.bf16.msra.mxu0 %v920
          %957 = vmatprep.subr.bf16.mxu0 0
          %958 = vmatpush1.bf16.msra.mxu0 %v921
          %959 = vmatprep.subr.bf16.mxu0 0
          %960 = vmatpush1.bf16.msra.mxu0 %v922
          %961 = vmatprep.subr.bf16.mxu0 0
          %962 = vmatpush1.bf16.msra.mxu0 %v923
          %963 = vmatprep.subr.bf16.mxu0 0
          %964 = vmatpush1.bf16.msra.mxu0 %v924
          %965 = vmatprep.subr.bf16.mxu0 0
          %966 = vmatpush1.bf16.msra.mxu0 0
          %967 = vmatprep.subr.bf16.mxu0 0
          %968 = vmatpush1.bf16.msra.mxu0 0
          %969 = vmatprep.subr.bf16.mxu0 0
          %970 = vmatpush1.bf16.msra.mxu0 0
          %971 = vmatprep.subr.bf16.mxu0 0
          %972 = vmatpush1.bf16.msra.mxu0 0
          %973 = vmatprep.mubr.bf16.mxu0 %v939
          %974 = vmatmul.mubr.bf16.gmra.mrb[0].mxu0 %v838
          %v975 = vpop.f32.mrb[0].mxu0
          %v976 = vadd.f32 %v864, %v975
          %v977 = vpop.f32.mrb[0].mxu0
          %v978 = vpop.f32.mrb[0].mxu0
          %v979 = vpop.f32.mrb[0].mxu0
          %980 = vdwg.mxu0
          %v981 = vld [vmem:[%s3] sm:$0x1]
          %v982 = vld [vmem:[%s4] sm:$0x1]
          %vm983 = vcmask 258048
          %v984 = vsel %vm983, %v976, 0.0
          %985 = vadd.xlane.f32.xlu0 %v984
          %v986 = vpop.xlane.xlu0 %985
          %v987 = vrcp.pop 32.0
          %v988 = vmul.f32 %v986, %v987
          %v989 = vsub.f32 %v976, %v988
          %v990 = vmul.f32 %v989, %v989
          %v991 = vsel %vm983, %v990, 0.0
          %992 = vadd.xlane.f32.xlu0 %v991
          %v993 = vpop.xlane.xlu0 %992
          %v994 = vmul.f32 %v993, %v987
          %v995 = vadd.f32 %v994, 1e-05
          %v996 = vrsqrt.pop %v995
          %v997 = vmul.f32 %v989, %v996
          %v999 = vlaneseq
          %v1000 = vshrl.u32 %v999, 7
          %v1001 = vsub.s32 0, %v1000
          %v1002 = vrot.slane %v981, %v1001
          %v1004 = vmul.f32 %v997, %v1002
          %v1006 = vlaneseq
          %v1007 = vshrl.u32 %v1006, 7
          %v1008 = vsub.s32 0, %v1007
          %v1009 = vrot.slane %v982, %v1008
          %v1011 = vadd.f32 %v1004, %v1009
          %1012 = vst.msk [vmem:[#allocation2] sm:$0x1f] %vm983, %v1011
        $region104: #{clip_forward.3} parent=99 // pred_fallthru
          _
        %v1013 = vld [vmem:[#allocation2] sm:$0x1f]
        %v1014 = vld [vmem:[%s789] sm:$0x1]
        %v1015 = vld [vmem:[%s792] sm:$0x1]
        %v1016 = vld [vmem:[%s797] sm:$0xf]
        %v1017 = vld [vmem:[%s797 + $0x4] sm:$0xf]
        %v1018 = vld [vmem:[%s797 + $0x8] sm:$0xf]
        %v1019 = vld [vmem:[%s797 + $0xc] sm:$0xf]
        %v1020 = vld [vmem:[%s800] sm:$0x1]
        %v1021 = vld [vmem:[%s805] sm:$0xf]
        %v1022 = vld [vmem:[%s805 + $0x4] sm:$0xf]
        %v1023 = vld [vmem:[%s805 + $0x8] sm:$0xf]
        %v1024 = vld [vmem:[%s805 + $0xc] sm:$0xf]
        %v1025 = vld [vmem:[%s808] sm:$0x1]
        %v1026 = vld [vmem:[%s811] sm:$0x1]
        %v1027 = vld [vmem:[%s814] sm:$0x1]
        %v1028 = vld [vmem:[%s819] sm:$0xf]
        %v1029 = vld [vmem:[%s819 + $0x4] sm:$0xf]
        %v1030 = vld [vmem:[%s819 + $0x8] sm:$0xf]
        %v1031 = vld [vmem:[%s819 + $0xc] sm:$0xf]
        %v1032 = vld [vmem:[%s822] sm:$0x1]
        %v1033 = vld [vmem:[%s827] sm:$0xf]
        %v1034 = vld [vmem:[%s827 + $0x4] sm:$0xf]
        %v1035 = vld [vmem:[%s827 + $0x8] sm:$0xf]
        %v1036 = vld [vmem:[%s827 + $0xc] sm:$0xf]
        %v1037 = vld [vmem:[%s827 + $0x10] sm:$0xf]
        %v1038 = vld [vmem:[%s827 + $0x14] sm:$0xf]
        %v1039 = vld [vmem:[%s827 + $0x18] sm:$0xf]
        %v1040 = vld [vmem:[%s827 + $0x1c] sm:$0xf]
        %v1041 = vld [vmem:[%s827 + $0x20] sm:$0xf]
        %v1042 = vld [vmem:[%s827 + $0x24] sm:$0xf]
        %v1043 = vld [vmem:[%s827 + $0x28] sm:$0xf]
        %v1044 = vld [vmem:[%s827 + $0x2c] sm:$0xf]
        %v1045 = vld [vmem:[%s827 + $0x30] sm:$0xf]
        %v1046 = vld [vmem:[%s827 + $0x34] sm:$0xf]
        %v1047 = vld [vmem:[%s827 + $0x38] sm:$0xf]
        %v1048 = vld [vmem:[%s827 + $0x3c] sm:$0xf]
        %v1049 = vld [vmem:[%s830] sm:$0x1]
        %vm1050 = vcmask 258048
        %v1051 = vsel %vm1050, %v1013, 0.0
        %1052 = vadd.xlane.f32.xlu0 %v1051
        %v1053 = vpop.xlane.xlu0 %1052
        %v1054 = vrcp.pop 32.0
        %v1055 = vmul.f32 %v1053, %v1054
        %v1056 = vsub.f32 %v1013, %v1055
        %v1057 = vmul.f32 %v1056, %v1056
        %v1058 = vsel %vm1050, %v1057, 0.0
        %1059 = vadd.xlane.f32.xlu0 %v1058
        %v1060 = vpop.xlane.xlu0 %1059
        %v1061 = vmul.f32 %v1060, %v1054
        %v1062 = vadd.f32 %v1061, 1e-05
        %v1063 = vrsqrt.pop %v1062
        %v1064 = vmul.f32 %v1056, %v1063
        %v1066 = vlaneseq
        %v1067 = vshrl.u32 %v1066, 7
        %v1068 = vsub.s32 0, %v1067
        %v1069 = vrot.slane %v1014, %v1068
        %v1071 = vmul.f32 %v1064, %v1069
        %v1073 = vlaneseq
        %v1074 = vshrl.u32 %v1073, 7
        %v1075 = vsub.s32 0, %v1074
        %v1076 = vrot.slane %v1015, %v1075
        %v1078 = vadd.f32 %v1071, %v1076
        %v1079 = vpack.c.bf16 %v1078, %v1078
        %v1081 = vlaneseq
        %v1082 = vshrl.u32 %v1081, 7
        %v1083 = vsub.s32 0, %v1082
        %v1084 = vrot.slane %v1020, %v1083
        %v1090 = vunpack.c.l.b16 %v1016
        %v1091 = vunpack.c.l.b16 %v1017
        %v1092 = vunpack.c.l.b16 %v1018
        %v1093 = vunpack.c.l.b16 %v1019
        %v1094 = vpack.c.b16 %v1091, %v1090
        %v1095 = vpack.c.b16 %v1093, %v1092
        %vm1098 = vcmask 261120
        %v1100 = vsel %vm1098, %v1079, 0
        %1102 = vmatprep.subr.bf16.mxu0 0
        %1103 = vmatpush1.bf16.msra.mxu0 %v1094
        %1104 = vmatprep.subr.bf16.mxu0 0
        %1105 = vmatpush1.bf16.msra.mxu0 %v1095
        %1106 = vmatprep.subr.bf16.mxu0 0
        %1107 = vmatpush1.bf16.msra.mxu0 0
        %1108 = vmatprep.subr.bf16.mxu0 0
        %1109 = vmatpush1.bf16.msra.mxu0 0
        %1110 = vmatprep.subr.bf16.mxu0 0
        %1111 = vmatpush1.bf16.msra.mxu0 0
        %1112 = vmatprep.subr.bf16.mxu0 0
        %1113 = vmatpush1.bf16.msra.mxu0 0
        %1114 = vmatprep.subr.bf16.mxu0 0
        %1115 = vmatpush1.bf16.msra.mxu0 0
        %1116 = vmatprep.subr.bf16.mxu0 0
        %1117 = vmatpush1.bf16.msra.mxu0 0
        %1118 = vmatprep.subr.bf16.mxu0 0
        %1119 = vmatpush1.bf16.msra.mxu0 0
        %1120 = vmatprep.subr.bf16.mxu0 0
        %1121 = vmatpush1.bf16.msra.mxu0 0
        %1122 = vmatprep.subr.bf16.mxu0 0
        %1123 = vmatpush1.bf16.msra.mxu0 0
        %1124 = vmatprep.subr.bf16.mxu0 0
        %1125 = vmatpush1.bf16.msra.mxu0 0
        %1126 = vmatprep.subr.bf16.mxu0 0
        %1127 = vmatpush1.bf16.msra.mxu0 0
        %1128 = vmatprep.subr.bf16.mxu0 0
        %1129 = vmatpush1.bf16.msra.mxu0 0
        %1130 = vmatprep.subr.bf16.mxu0 0
        %1131 = vmatpush1.bf16.msra.mxu0 0
        %1132 = vmatprep.subr.bf16.mxu0 0
        %1133 = vmatpush1.bf16.msra.mxu0 0
        %1134 = vmatprep.mubr.bf16.mxu0 0
        %1135 = vmatmul.mubr.bf16.gmra.mrb[0].mxu0 %v1100
        %v1136 = vpop.f32.mrb[0].mxu0
        %v1137 = vadd.f32 %v1084, %v1136
        %v1138 = vpop.f32.mrb[0].mxu0
        %v1139 = vpop.f32.mrb[0].mxu0
        %v1140 = vpop.f32.mrb[0].mxu0
        %1141 = vdwg.mxu0
        %v1142 = vpack.c.bf16 %v1137, %v1137
        %1144 = vrot.lane.b32.xlu0 %v1142, 112
        %v1145 = vpop.permute.xlu0 %1144
        %1146 = vrot.lane.b32.xlu0 %v1142, 96
        %v1147 = vpop.permute.xlu0 %1146
        %1148 = vrot.lane.b32.xlu0 %v1145, 96
        %v1149 = vpop.permute.xlu0 %1148
        %1152 = vxpose.xlu0.c.b16.start [1/8] %v1147, 128
        %1153 = vxpose.xlu0.c.b16.cont [2/8] 0, 128
        %1154 = vxpose.xlu0.c.b16.cont [3/8] 0, 128
        %1155 = vxpose.xlu0.c.b16.cont [4/8] 0, 128
        %1156 = vxpose.xlu0.c.b16.cont [5/8] 0, 128
        %1157 = vxpose.xlu0.c.b16.cont [6/8] 0, 128
        %1158 = vxpose.xlu0.c.b16.cont [7/8] 0, 128
        %1159 = vxpose.xlu0.c.b16.end [8/8] 0, 128
        %v1160 = vpop.trf.xlu0
        %v1161 = vpop.trf.xlu0
        %v1162 = vpop.trf.xlu0
        %v1163 = vpop.trf.xlu0
        %v1164 = vpop.trf.xlu0
        %v1165 = vpop.trf.xlu0
        %v1166 = vpop.trf.xlu0
        %v1167 = vpop.trf.xlu0
        %1168 = vxpose.xlu0.c.b16.start [1/8] %v1149, 128
        %1169 = vxpose.xlu0.c.b16.cont [2/8] 0, 128
        %1170 = vxpose.xlu0.c.b16.cont [3/8] 0, 128
        %1171 = vxpose.xlu0.c.b16.cont [4/8] 0, 128
        %1172 = vxpose.xlu0.c.b16.cont [5/8] 0, 128
        %1173 = vxpose.xlu0.c.b16.cont [6/8] 0, 128
        %1174 = vxpose.xlu0.c.b16.cont [7/8] 0, 128
        %1175 = vxpose.xlu0.c.b16.end [8/8] 0, 128
        %v1176 = vpop.trf.xlu0
        %v1177 = vpop.trf.xlu0
        %v1178 = vpop.trf.xlu0
        %v1179 = vpop.trf.xlu0
        %v1180 = vpop.trf.xlu0
        %v1181 = vpop.trf.xlu0
        %v1182 = vpop.trf.xlu0
        %v1183 = vpop.trf.xlu0
        %vm1184 = vcmask 130048
        %v1186 = vsel %vm1184, %v1142, 0
        %1188 = vmatprep.subr.bf16.mxu0 0
        %1189 = vmatpush1.bf16.msra.mxu0 %v1160
        %1190 = vmatprep.subr.bf16.mxu0 0
        %1191 = vmatpush1.bf16.msra.mxu0 0
        %1192 = vmatprep.subr.bf16.mxu0 0
        %1193 = vmatpush1.bf16.msra.mxu0 0
        %1194 = vmatprep.subr.bf16.mxu0 0
        %1195 = vmatpush1.bf16.msra.mxu0 0
        %1196 = vmatprep.subr.bf16.mxu0 0
        %1197 = vmatpush1.bf16.msra.mxu0 0
        %1198 = vmatprep.subr.bf16.mxu0 0
        %1199 = vmatpush1.bf16.msra.mxu0 0
        %1200 = vmatprep.subr.bf16.mxu0 0
        %1201 = vmatpush1.bf16.msra.mxu0 0
        %1202 = vmatprep.subr.bf16.mxu0 0
        %1203 = vmatpush1.bf16.msra.mxu0 0
        %1204 = vmatprep.subr.bf16.mxu0 0
        %1205 = vmatpush1.bf16.msra.mxu0 0
        %1206 = vmatprep.subr.bf16.mxu0 0
        %1207 = vmatpush1.bf16.msra.mxu0 0
        %1208 = vmatprep.subr.bf16.mxu0 0
        %1209 = vmatpush1.bf16.msra.mxu0 0
        %1210 = vmatprep.subr.bf16.mxu0 0
        %1211 = vmatpush1.bf16.msra.mxu0 0
        %1212 = vmatprep.subr.bf16.mxu0 0
        %1213 = vmatpush1.bf16.msra.mxu0 0
        %1214 = vmatprep.subr.bf16.mxu0 0
        %1215 = vmatpush1.bf16.msra.mxu0 0
        %1216 = vmatprep.subr.bf16.mxu0 0
        %1217 = vmatpush1.bf16.msra.mxu0 0
        %1218 = vmatprep.subr.bf16.mxu0 0
        %1219 = vmatpush1.bf16.msra.mxu0 0
        %1220 = vmatprep.mubr.bf16.mxu0 0
        %1221 = vmatmul.mubr.bf16.gmra.mrb[0].mxu0 %v1186
        %v1222 = vpop.f32.mrb[0].mxu0
        %v1223 = vadd.f32 0.0, %v1222
        %v1224 = vpop.f32.mrb[0].mxu0
        %v1225 = vpop.f32.mrb[0].mxu0
        %v1226 = vpop.f32.mrb[0].mxu0
        %1227 = vdwg.mxu0
        %v1229 = vsel %vm1184, %v1145, 0
        %1231 = vmatprep.subr.bf16.mxu0 0
        %1232 = vmatpush1.bf16.msra.mxu0 %v1176
        %1233 = vmatprep.subr.bf16.mxu0 0
        %1234 = vmatpush1.bf16.msra.mxu0 0
        %1235 = vmatprep.subr.bf16.mxu0 0
        %1236 = vmatpush1.bf16.msra.mxu0 0
        %1237 = vmatprep.subr.bf16.mxu0 0
        %1238 = vmatpush1.bf16.msra.mxu0 0
        %1239 = vmatprep.subr.bf16.mxu0 0
        %1240 = vmatpush1.bf16.msra.mxu0 0
        %1241 = vmatprep.subr.bf16.mxu0 0
        %1242 = vmatpush1.bf16.msra.mxu0 0
        %1243 = vmatprep.subr.bf16.mxu0 0
        %1244 = vmatpush1.bf16.msra.mxu0 0
        %1245 = vmatprep.subr.bf16.mxu0 0
        %1246 = vmatpush1.bf16.msra.mxu0 0
        %1247 = vmatprep.subr.bf16.mxu0 0
        %1248 = vmatpush1.bf16.msra.mxu0 0
        %1249 = vmatprep.subr.bf16.mxu0 0
        %1250 = vmatpush1.bf16.msra.mxu0 0
        %1251 = vmatprep.subr.bf16.mxu0 0
        %1252 = vmatpush1.bf16.msra.mxu0 0
        %1253 = vmatprep.subr.bf16.mxu0 0
        %1254 = vmatpush1.bf16.msra.mxu0 0
        %1255 = vmatprep.subr.bf16.mxu0 0
        %1256 = vmatpush1.bf16.msra.mxu0 0
        %1257 = vmatprep.subr.bf16.mxu0 0
        %1258 = vmatpush1.bf16.msra.mxu0 0
        %1259 = vmatprep.subr.bf16.mxu0 0
        %1260 = vmatpush1.bf16.msra.mxu0 0
        %1261 = vmatprep.subr.bf16.mxu0 0
        %1262 = vmatpush1.bf16.msra.mxu0 0
        %1263 = vmatprep.mubr.bf16.mxu0 0
        %1264 = vmatmul.mubr.bf16.gmra.mrb[0].mxu0 %v1229
        %v1265 = vpop.f32.mrb[0].mxu0
        %v1266 = vadd.f32 0.0, %v1265
        %v1267 = vpop.f32.mrb[0].mxu0
        %v1268 = vpop.f32.mrb[0].mxu0
        %v1269 = vpop.f32.mrb[0].mxu0
        %1270 = vdwg.mxu0
        %vm1271 = vcmask 36864
        %v1272 = vsel %vm1271, %v1223, -inf
        %1273 = vmax.xlane.f32.xlu0 %v1272
        %v1274 = vpop.xlane.xlu0 %1273
        %v1275 = vsel %vm1271, %v1266, -inf
        %1276 = vmax.xlane.f32.xlu0 %v1275
        %v1277 = vpop.xlane.xlu0 %1276
        %v1278 = vsub.f32 %v1223, %v1274
        %v1279 = vsub.f32 %v1266, %v1277
        %v1280 = vmul.f32 %v1278, 1.442695
        %v1281 = vpow.pop %v1280
        %v1282 = vmul.f32 %v1279, 1.442695
        %v1283 = vpow.pop %v1282
        %v1284 = vsel %vm1271, %v1281, 0.0
        %1285 = vadd.xlane.f32.xlu0 %v1284
        %v1286 = vpop.xlane.xlu0 %1285
        %v1287 = vsel %vm1271, %v1283, 0.0
        %1288 = vadd.xlane.f32.xlu0 %v1287
        %v1289 = vpop.xlane.xlu0 %1288
        %v1290 = vrcp.pop %v1286
        %v1291 = vrcp.pop %v1289
        %v1292 = vmul.f32 %v1281, %v1290
        %v1293 = vmul.f32 %v1283, %v1291
        %v1294 = vpack.c.bf16 %v1292, %v1292
        %v1295 = vpack.c.bf16 %v1293, %v1293
        %1296 = vrot.lane.b32.xlu0 %v1142, 64
        %v1297 = vpop.permute.xlu0 %1296
        %1298 = vrot.lane.b32.xlu0 %v1145, 64
        %v1299 = vpop.permute.xlu0 %1298
        %1302 = vxpose.xlu0.c.b16.start [1/8] %v1297, 128
        %1303 = vxpose.xlu0.c.b16.cont [2/8] 0, 128
        %1304 = vxpose.xlu0.c.b16.cont [3/8] 0, 128
        %1305 = vxpose.xlu0.c.b16.cont [4/8] 0, 128
        %1306 = vxpose.xlu0.c.b16.cont [5/8] 0, 128
        %1307 = vxpose.xlu0.c.b16.cont [6/8] 0, 128
        %1308 = vxpose.xlu0.c.b16.cont [7/8] 0, 128
        %1309 = vxpose.xlu0.c.b16.end [8/8] 0, 128
        %v1310 = vpop.trf.xlu0
        %v1311 = vpop.trf.xlu0
        %v1312 = vpop.trf.xlu0
        %v1313 = vpop.trf.xlu0
        %v1314 = vpop.trf.xlu0
        %v1315 = vpop.trf.xlu0
        %v1316 = vpop.trf.xlu0
        %v1317 = vpop.trf.xlu0
        %1318 = vxpose.xlu0.c.b16.start [1/8] %v1299, 128
        %1319 = vxpose.xlu0.c.b16.cont [2/8] 0, 128
        %1320 = vxpose.xlu0.c.b16.cont [3/8] 0, 128
        %1321 = vxpose.xlu0.c.b16.cont [4/8] 0, 128
        %1322 = vxpose.xlu0.c.b16.cont [5/8] 0, 128
        %1323 = vxpose.xlu0.c.b16.cont [6/8] 0, 128
        %1324 = vxpose.xlu0.c.b16.cont [7/8] 0, 128
        %1325 = vxpose.xlu0.c.b16.end [8/8] 0, 128
        %v1326 = vpop.trf.xlu0
        %v1327 = vpop.trf.xlu0
        %v1328 = vpop.trf.xlu0
        %v1329 = vpop.trf.xlu0
        %v1330 = vpop.trf.xlu0
        %v1331 = vpop.trf.xlu0
        %v1332 = vpop.trf.xlu0
        %v1333 = vpop.trf.xlu0
        %vm1334 = vcmask 39936
        %v1336 = vsel %vm1334, %v1310, 0
        %v1339 = vsel %vm1334, %v1294, 0
        %1341 = vmatprep.subr.bf16.mxu0 0
        %1342 = vmatpush1.bf16.xpose.msra.mxu0 %v1339
        %1343 = vmatprep.subr.bf16.mxu0 0
        %1344 = vmatpush1.bf16.xpose.msra.mxu0 0
        %1345 = vmatprep.subr.bf16.mxu0 0
        %1346 = vmatpush1.bf16.xpose.msra.mxu0 0
        %1347 = vmatprep.subr.bf16.mxu0 0
        %1348 = vmatpush1.bf16.xpose.msra.mxu0 0
        %1349 = vmatprep.subr.bf16.mxu0 0
        %1350 = vmatpush1.bf16.xpose.msra.mxu0 0
        %1351 = vmatprep.subr.bf16.mxu0 0
        %1352 = vmatpush1.bf16.xpose.msra.mxu0 0
        %1353 = vmatprep.subr.bf16.mxu0 0
        %1354 = vmatpush1.bf16.xpose.msra.mxu0 0
        %1355 = vmatprep.subr.bf16.mxu0 0
        %1356 = vmatpush1.bf16.xpose.msra.mxu0 0
        %1357 = vmatprep.subr.bf16.mxu0 0
        %1358 = vmatpush1.bf16.xpose.msra.mxu0 0
        %1359 = vmatprep.subr.bf16.mxu0 0
        %1360 = vmatpush1.bf16.xpose.msra.mxu0 0
        %1361 = vmatprep.subr.bf16.mxu0 0
        %1362 = vmatpush1.bf16.xpose.msra.mxu0 0
        %1363 = vmatprep.subr.bf16.mxu0 0
        %1364 = vmatpush1.bf16.xpose.msra.mxu0 0
        %1365 = vmatprep.subr.bf16.mxu0 0
        %1366 = vmatpush1.bf16.xpose.msra.mxu0 0
        %1367 = vmatprep.subr.bf16.mxu0 0
        %1368 = vmatpush1.bf16.xpose.msra.mxu0 0
        %1369 = vmatprep.subr.bf16.mxu0 0
        %1370 = vmatpush1.bf16.xpose.msra.mxu0 0
        %1371 = vmatprep.subr.bf16.mxu0 0
        %1372 = vmatpush1.bf16.xpose.msra.mxu0 0
        %1373 = vmatprep.mubr.bf16.mxu0 0
        %1374 = vmatmul.mubr.bf16.gmra.mrb[0].mxu0 %v1336
        %v1375 = vpop.f32.mrb[0].mxu0
        %v1376 = vadd.f32 0.0, %v1375
        %v1377 = vpop.f32.mrb[0].mxu0
        %v1378 = vpop.f32.mrb[0].mxu0
        %v1379 = vadd.f32 0.0, %v1378
        %v1380 = vpop.f32.mrb[0].mxu0
        %1381 = vdwg.mxu0
        %v1383 = vsel %vm1334, %v1326, 0
        %v1386 = vsel %vm1334, %v1295, 0
        %1388 = vmatprep.subr.bf16.mxu0 0
        %1389 = vmatpush1.bf16.xpose.msra.mxu0 %v1386
        %1390 = vmatprep.subr.bf16.mxu0 0
        %1391 = vmatpush1.bf16.xpose.msra.mxu0 0
        %1392 = vmatprep.subr.bf16.mxu0 0
        %1393 = vmatpush1.bf16.xpose.msra.mxu0 0
        %1394 = vmatprep.subr.bf16.mxu0 0
        %1395 = vmatpush1.bf16.xpose.msra.mxu0 0
        %1396 = vmatprep.subr.bf16.mxu0 0
        %1397 = vmatpush1.bf16.xpose.msra.mxu0 0
        %1398 = vmatprep.subr.bf16.mxu0 0
        %1399 = vmatpush1.bf16.xpose.msra.mxu0 0
        %1400 = vmatprep.subr.bf16.mxu0 0
        %1401 = vmatpush1.bf16.xpose.msra.mxu0 0
        %1402 = vmatprep.subr.bf16.mxu0 0
        %1403 = vmatpush1.bf16.xpose.msra.mxu0 0
        %1404 = vmatprep.subr.bf16.mxu0 0
        %1405 = vmatpush1.bf16.xpose.msra.mxu0 0
        %1406 = vmatprep.subr.bf16.mxu0 0
        %1407 = vmatpush1.bf16.xpose.msra.mxu0 0
        %1408 = vmatprep.subr.bf16.mxu0 0
        %1409 = vmatpush1.bf16.xpose.msra.mxu0 0
        %1410 = vmatprep.subr.bf16.mxu0 0
        %1411 = vmatpush1.bf16.xpose.msra.mxu0 0
        %1412 = vmatprep.subr.bf16.mxu0 0
        %1413 = vmatpush1.bf16.xpose.msra.mxu0 0
        %1414 = vmatprep.subr.bf16.mxu0 0
        %1415 = vmatpush1.bf16.xpose.msra.mxu0 0
        %1416 = vmatprep.subr.bf16.mxu0 0
        %1417 = vmatpush1.bf16.xpose.msra.mxu0 0
        %1418 = vmatprep.subr.bf16.mxu0 0
        %1419 = vmatpush1.bf16.xpose.msra.mxu0 0
        %1420 = vmatprep.mubr.bf16.mxu0 0
        %1421 = vmatmul.mubr.bf16.gmra.mrb[0].mxu0 %v1383
        %v1422 = vpop.f32.mrb[0].mxu0
        %v1423 = vadd.f32 0.0, %v1422
        %v1424 = vpop.f32.mrb[0].mxu0
        %v1425 = vpop.f32.mrb[0].mxu0
        %v1426 = vadd.f32 0.0, %v1425
        %v1427 = vpop.f32.mrb[0].mxu0
        %1428 = vdwg.mxu0
        %1429 = vxpose.xlu0.b32.start [1/16] %v1376, 128
        %1430 = vxpose.xlu0.b32.cont [2/16] %v1379, 128
        %1431 = vxpose.xlu0.b32.cont [3/16] 0.0, 128
        %1432 = vxpose.xlu0.b32.cont [4/16] 0.0, 128
        %1433 = vxpose.xlu0.b32.cont [5/16] 0.0, 128
        %1434 = vxpose.xlu0.b32.cont [6/16] 0.0, 128
        %1435 = vxpose.xlu0.b32.cont [7/16] 0.0, 128
        %1436 = vxpose.xlu0.b32.cont [8/16] 0.0, 128
        %1437 = vxpose.xlu0.b32.cont [9/16] 0.0, 128
        %1438 = vxpose.xlu0.b32.cont [10/16] 0.0, 128
        %1439 = vxpose.xlu0.b32.cont [11/16] 0.0, 128
        %1440 = vxpose.xlu0.b32.cont [12/16] 0.0, 128
        %1441 = vxpose.xlu0.b32.cont [13/16] 0.0, 128
        %1442 = vxpose.xlu0.b32.cont [14/16] 0.0, 128
        %1443 = vxpose.xlu0.b32.cont [15/16] 0.0, 128
        %1444 = vxpose.xlu0.b32.end [16/16] 0.0, 128
        %v1445 = vpop.trf.xlu0
        %v1446 = vpop.trf.xlu0
        %v1447 = vpop.trf.xlu0
        %v1448 = vpop.trf.xlu0
        %v1449 = vpop.trf.xlu0
        %v1450 = vpop.trf.xlu0
        %v1451 = vpop.trf.xlu0
        %v1452 = vpop.trf.xlu0
        %v1453 = vpop.trf.xlu0
        %v1454 = vpop.trf.xlu0
        %v1455 = vpop.trf.xlu0
        %v1456 = vpop.trf.xlu0
        %v1457 = vpop.trf.xlu0
        %v1458 = vpop.trf.xlu0
        %v1459 = vpop.trf.xlu0
        %v1460 = vpop.trf.xlu0
        %1461 = vxpose.xlu0.b32.start [1/16] %v1423, 128
        %1462 = vxpose.xlu0.b32.cont [2/16] %v1426, 128
        %1463 = vxpose.xlu0.b32.cont [3/16] 0.0, 128
        %1464 = vxpose.xlu0.b32.cont [4/16] 0.0, 128
        %1465 = vxpose.xlu0.b32.cont [5/16] 0.0, 128
        %1466 = vxpose.xlu0.b32.cont [6/16] 0.0, 128
        %1467 = vxpose.xlu0.b32.cont [7/16] 0.0, 128
        %1468 = vxpose.xlu0.b32.cont [8/16] 0.0, 128
        %1469 = vxpose.xlu0.b32.cont [9/16] 0.0, 128
        %1470 = vxpose.xlu0.b32.cont [10/16] 0.0, 128
        %1471 = vxpose.xlu0.b32.cont [11/16] 0.0, 128
        %1472 = vxpose.xlu0.b32.cont [12/16] 0.0, 128
        %1473 = vxpose.xlu0.b32.cont [13/16] 0.0, 128
        %1474 = vxpose.xlu0.b32.cont [14/16] 0.0, 128
        %1475 = vxpose.xlu0.b32.cont [15/16] 0.0, 128
        %1476 = vxpose.xlu0.b32.end [16/16] 0.0, 128
        %v1477 = vpop.trf.xlu0
        %v1478 = vpop.trf.xlu0
        %v1479 = vpop.trf.xlu0
        %v1480 = vpop.trf.xlu0
        %v1481 = vpop.trf.xlu0
        %v1482 = vpop.trf.xlu0
        %v1483 = vpop.trf.xlu0
        %v1484 = vpop.trf.xlu0
        %v1485 = vpop.trf.xlu0
        %v1486 = vpop.trf.xlu0
        %v1487 = vpop.trf.xlu0
        %v1488 = vpop.trf.xlu0
        %v1489 = vpop.trf.xlu0
        %v1490 = vpop.trf.xlu0
        %v1491 = vpop.trf.xlu0
        %v1492 = vpop.trf.xlu0
        %v1494 = vunpack.c.l.s4 1983009808
        %v1495 = vunpack.c.0.s8 %v1494
        %v1496 = vlaneseq
        %v1497 = vshrl.u32 %v1496, 7
        %v1498 = vsub.s32 %v1495, %v1497
        %v1499 = vrot.slane %v1445, %v1498
        %v1500 = vcombine.high %v1445, 0.0
        %v1502 = vunpack.c.l.s4 1983009808
        %v1503 = vunpack.c.0.s8 %v1502
        %v1504 = vlaneseq
        %v1505 = vshrl.u32 %v1504, 7
        %v1506 = vsub.s32 %v1503, %v1505
        %v1507 = vrot.slane %v1477, %v1506
        %v1508 = vcombine.high %v1477, 0.0
        %v1509 = vcombine.low %v1499, %v1507
        %v1510 = vcombine.high %v1499, %v1507
        %v1512 = vunpack.c.l.s4 1934713408
        %v1513 = vunpack.c.0.s8 %v1512
        %v1514 = vlaneseq
        %v1515 = vshrl.u32 %v1514, 7
        %v1516 = vsub.s32 %v1513, %v1515
        %v1517 = vrot.slane %v1509, %v1516
        %v1519 = vunpack.c.l.s4 1934713408
        %v1520 = vunpack.c.0.s8 %v1519
        %v1521 = vlaneseq
        %v1522 = vshrl.u32 %v1521, 7
        %v1523 = vsub.s32 %v1520, %v1522
        %v1524 = vrot.slane %v1510, %v1523
        %v1525 = vcombine.low %v1500, %v1508
        %v1526 = vcombine.high %v1517, 0.0
        %v1527 = vcombine.high %v1524, 0.0
        %v1528 = vcombine.low %v1517, %v1524
        %v1530 = vunpack.c.l.s4 1983009808
        %v1531 = vunpack.c.0.s8 %v1530
        %v1532 = vlaneseq
        %v1533 = vshrl.u32 %v1532, 7
        %v1534 = vsub.s32 %v1531, %v1533
        %v1535 = vrot.slane %v1528, %v1534
        %v1536 = vcombine.low %v1526, %v1527
        %v1538 = vunpack.c.l.s4 1983009808
        %v1539 = vunpack.c.0.s8 %v1538
        %v1540 = vlaneseq
        %v1541 = vshrl.u32 %v1540, 7
        %v1542 = vsub.s32 %v1539, %v1541
        %v1543 = vrot.slane %v1536, %v1542
        %v1544 = vcombine.low %v1535, %v1543
        %v1546 = vunpack.c.l.s4 1934713408
        %v1547 = vunpack.c.0.s8 %v1546
        %v1548 = vlaneseq
        %v1549 = vshrl.u32 %v1548, 7
        %v1550 = vsub.s32 %v1547, %v1549
        %v1551 = vrot.slane %v1544, %v1550
        %v1553 = vunpack.c.l.s4 1934713408
        %v1554 = vunpack.c.0.s8 %v1553
        %v1555 = vlaneseq
        %v1556 = vshrl.u32 %v1555, 7
        %v1557 = vsub.s32 %v1554, %v1556
        %v1558 = vrot.slane %v1525, %v1557
        %v1560 = vunpack.c.l.s4 1934713408
        %v1561 = vunpack.c.0.s8 %v1560
        %v1562 = vlaneseq
        %v1563 = vshrl.u32 %v1562, 7
        %v1564 = vsub.s32 %v1561, %v1563
        %v1565 = vrot.slane %v1558, %v1564
        %v1566 = vcombine.low %v1551, %v1565
        %v1567 = vcombine.high %v1551, %v1565
        %1569 = vrot.lane.b32.xlu0 %v1567, 16
        %v1570 = vpop.permute.xlu0 %1569
        %v1572 = vsel %vm1184, %v1566, %v1570
        %v1573 = vpack.c.bf16 %v1572, %v1572
        %v1575 = vlaneseq
        %v1576 = vshrl.u32 %v1575, 7
        %v1577 = vsub.s32 0, %v1576
        %v1578 = vrot.slane %v1025, %v1577
        %v1584 = vunpack.c.l.b16 %v1021
        %v1585 = vunpack.c.l.b16 %v1022
        %v1586 = vunpack.c.l.b16 %v1023
        %v1587 = vunpack.c.l.b16 %v1024
        %v1588 = vpack.c.b16 %v1585, %v1584
        %v1589 = vpack.c.b16 %v1587, %v1586
        %v1593 = vsel %vm1098, %v1573, 0
        %1595 = vmatprep.subr.bf16.mxu0 0
        %1596 = vmatpush1.bf16.msra.mxu0 %v1588
        %1597 = vmatprep.subr.bf16.mxu0 0
        %1598 = vmatpush1.bf16.msra.mxu0 %v1589
        %1599 = vmatprep.subr.bf16.mxu0 0
        %1600 = vmatpush1.bf16.msra.mxu0 0
        %1601 = vmatprep.subr.bf16.mxu0 0
        %1602 = vmatpush1.bf16.msra.mxu0 0
        %1603 = vmatprep.subr.bf16.mxu0 0
        %1604 = vmatpush1.bf16.msra.mxu0 0
        %1605 = vmatprep.subr.bf16.mxu0 0
        %1606 = vmatpush1.bf16.msra.mxu0 0
        %1607 = vmatprep.subr.bf16.mxu0 0
        %1608 = vmatpush1.bf16.msra.mxu0 0
        %1609 = vmatprep.subr.bf16.mxu0 0
        %1610 = vmatpush1.bf16.msra.mxu0 0
        %1611 = vmatprep.subr.bf16.mxu0 0
        %1612 = vmatpush1.bf16.msra.mxu0 0
        %1613 = vmatprep.subr.bf16.mxu0 0
        %1614 = vmatpush1.bf16.msra.mxu0 0
        %1615 = vmatprep.subr.bf16.mxu0 0
        %1616 = vmatpush1.bf16.msra.mxu0 0
        %1617 = vmatprep.subr.bf16.mxu0 0
        %1618 = vmatpush1.bf16.msra.mxu0 0
        %1619 = vmatprep.subr.bf16.mxu0 0
        %1620 = vmatpush1.bf16.msra.mxu0 0
        %1621 = vmatprep.subr.bf16.mxu0 0
        %1622 = vmatpush1.bf16.msra.mxu0 0
        %1623 = vmatprep.subr.bf16.mxu0 0
        %1624 = vmatpush1.bf16.msra.mxu0 0
        %1625 = vmatprep.subr.bf16.mxu0 0
        %1626 = vmatpush1.bf16.msra.mxu0 0
        %1627 = vmatprep.mubr.bf16.mxu0 0
        %1628 = vmatmul.mubr.bf16.gmra.mrb[0].mxu0 %v1593
        %v1629 = vpop.f32.mrb[0].mxu0
        %v1630 = vadd.f32 %v1578, %v1629
        %v1631 = vpop.f32.mrb[0].mxu0
        %v1632 = vpop.f32.mrb[0].mxu0
        %v1633 = vpop.f32.mrb[0].mxu0
        %1634 = vdwg.mxu0
        %v1635 = vadd.f32 %v1013, %v1630
        %v1636 = vsel %vm1050, %v1635, 0.0
        %1637 = vadd.xlane.f32.xlu0 %v1636
        %v1638 = vpop.xlane.xlu0 %1637
        %v1639 = vmul.f32 %v1638, %v1054
        %v1640 = vsub.f32 %v1635, %v1639
        %v1641 = vmul.f32 %v1640, %v1640
        %v1642 = vsel %vm1050, %v1641, 0.0
        %1643 = vadd.xlane.f32.xlu0 %v1642
        %v1644 = vpop.xlane.xlu0 %1643
        %v1645 = vmul.f32 %v1644, %v1054
        %v1646 = vadd.f32 %v1645, 1e-05
        %v1647 = vrsqrt.pop %v1646
        %v1648 = vmul.f32 %v1640, %v1647
        %v1650 = vlaneseq
        %v1651 = vshrl.u32 %v1650, 7
        %v1652 = vsub.s32 0, %v1651
        %v1653 = vrot.slane %v1026, %v1652
        %v1655 = vmul.f32 %v1648, %v1653
        %v1657 = vlaneseq
        %v1658 = vshrl.u32 %v1657, 7
        %v1659 = vsub.s32 0, %v1658
        %v1660 = vrot.slane %v1027, %v1659
        %v1662 = vadd.f32 %v1655, %v1660
        %v1663 = vpack.c.bf16 %v1662, %v1662
        %v1665 = vlaneseq
        %v1666 = vshrl.u32 %v1665, 7
        %v1667 = vsub.s32 0, %v1666
        %v1668 = vrot.slane %v1032, %v1667
        %v1674 = vunpack.c.l.b16 %v1028
        %v1675 = vunpack.c.l.b16 %v1029
        %v1676 = vunpack.c.l.b16 %v1030
        %v1677 = vunpack.c.l.b16 %v1031
        %v1678 = vpack.c.b16 %v1675, %v1674
        %v1679 = vpack.c.b16 %v1677, %v1676
        %v1683 = vsel %vm1098, %v1663, 0
        %1685 = vmatprep.subr.bf16.mxu0 0
        %1686 = vmatpush1.bf16.msra.mxu0 %v1678
        %1687 = vmatprep.subr.bf16.mxu0 0
        %1688 = vmatpush1.bf16.msra.mxu0 %v1679
        %1689 = vmatprep.subr.bf16.mxu0 0
        %1690 = vmatpush1.bf16.msra.mxu0 0
        %1691 = vmatprep.subr.bf16.mxu0 0
        %1692 = vmatpush1.bf16.msra.mxu0 0
        %1693 = vmatprep.subr.bf16.mxu0 0
        %1694 = vmatpush1.bf16.msra.mxu0 0
        %1695 = vmatprep.subr.bf16.mxu0 0
        %1696 = vmatpush1.bf16.msra.mxu0 0
        %1697 = vmatprep.subr.bf16.mxu0 0
        %1698 = vmatpush1.bf16.msra.mxu0 0
        %1699 = vmatprep.subr.bf16.mxu0 0
        %1700 = vmatpush1.bf16.msra.mxu0 0
        %1701 = vmatprep.subr.bf16.mxu0 0
        %1702 = vmatpush1.bf16.msra.mxu0 0
        %1703 = vmatprep.subr.bf16.mxu0 0
        %1704 = vmatpush1.bf16.msra.mxu0 0
        %1705 = vmatprep.subr.bf16.mxu0 0
        %1706 = vmatpush1.bf16.msra.mxu0 0
        %1707 = vmatprep.subr.bf16.mxu0 0
        %1708 = vmatpush1.bf16.msra.mxu0 0
        %1709 = vmatprep.subr.bf16.mxu0 0
        %1710 = vmatpush1.bf16.msra.mxu0 0
        %1711 = vmatprep.subr.bf16.mxu0 0
        %1712 = vmatpush1.bf16.msra.mxu0 0
        %1713 = vmatprep.subr.bf16.mxu0 0
        %1714 = vmatpush1.bf16.msra.mxu0 0
        %1715 = vmatprep.subr.bf16.mxu0 0
        %1716 = vmatpush1.bf16.msra.mxu0 0
        %1717 = vmatprep.mubr.bf16.mxu0 0
        %1718 = vmatmul.mubr.bf16.gmra.mrb[0].mxu0 %v1683
        %v1719 = vpop.f32.mrb[0].mxu0
        %v1720 = vadd.f32 %v1668, %v1719
        %v1721 = vpop.f32.mrb[0].mxu0
        %v1722 = vpop.f32.mrb[0].mxu0
        %v1723 = vpop.f32.mrb[0].mxu0
        %1724 = vdwg.mxu0
        %v1725 = vmul.f32 %v1720, 1.702
        %v1726 = vxor.u32 %v1725, 2147483648
        %v1727 = vmul.f32 %v1726, 1.442695
        %v1728 = vpow.pop %v1727
        %v1729 = vadd.f32 %v1728, 1.0
        %v1730 = vrcp.pop %v1729
        %v1731 = vmul.f32 1.0, %v1730
        %v1732 = vmul.f32 %v1720, %v1731
        %v1733 = vpack.c.bf16 %v1732, %v1732
        %v1735 = vlaneseq
        %v1736 = vshrl.u32 %v1735, 7
        %v1737 = vsub.s32 0, %v1736
        %v1738 = vrot.slane %v1049, %v1737
        %v1756 = vunpack.c.l.b16 %v1033
        %v1757 = vunpack.c.l.b16 %v1034
        %v1758 = vunpack.c.l.b16 %v1035
        %v1759 = vunpack.c.l.b16 %v1036
        %v1760 = vunpack.c.l.b16 %v1037
        %v1761 = vunpack.c.l.b16 %v1038
        %v1762 = vunpack.c.l.b16 %v1039
        %v1763 = vunpack.c.l.b16 %v1040
        %v1764 = vunpack.c.l.b16 %v1041
        %v1765 = vunpack.c.l.b16 %v1042
        %v1766 = vunpack.c.l.b16 %v1043
        %v1767 = vunpack.c.l.b16 %v1044
        %v1768 = vunpack.c.l.b16 %v1045
        %v1769 = vunpack.c.l.b16 %v1046
        %v1770 = vunpack.c.l.b16 %v1047
        %v1771 = vunpack.c.l.b16 %v1048
        %v1772 = vpack.c.b16 %v1757, %v1756
        %v1773 = vpack.c.b16 %v1759, %v1758
        %v1774 = vpack.c.b16 %v1761, %v1760
        %v1775 = vpack.c.b16 %v1763, %v1762
        %v1776 = vpack.c.b16 %v1765, %v1764
        %v1777 = vpack.c.b16 %v1767, %v1766
        %v1778 = vpack.c.b16 %v1769, %v1768
        %v1779 = vpack.c.b16 %v1771, %v1770
        %1788 = vmatprep.subr.bf16.mxu0 0
        %1789 = vmatpush1.bf16.msra.mxu0 %v1772
        %1790 = vmatprep.subr.bf16.mxu0 0
        %1791 = vmatpush1.bf16.msra.mxu0 %v1773
        %1792 = vmatprep.subr.bf16.mxu0 0
        %1793 = vmatpush1.bf16.msra.mxu0 %v1774
        %1794 = vmatprep.subr.bf16.mxu0 0
        %1795 = vmatpush1.bf16.msra.mxu0 %v1775
        %1796 = vmatprep.subr.bf16.mxu0 0
        %1797 = vmatpush1.bf16.msra.mxu0 %v1776
        %1798 = vmatprep.subr.bf16.mxu0 0
        %1799 = vmatpush1.bf16.msra.mxu0 %v1777
        %1800 = vmatprep.subr.bf16.mxu0 0
        %1801 = vmatpush1.bf16.msra.mxu0 %v1778
        %1802 = vmatprep.subr.bf16.mxu0 0
        %1803 = vmatpush1.bf16.msra.mxu0 %v1779
        %1804 = vmatprep.subr.bf16.mxu0 0
        %1805 = vmatpush1.bf16.msra.mxu0 0
        %1806 = vmatprep.subr.bf16.mxu0 0
        %1807 = vmatpush1.bf16.msra.mxu0 0
        %1808 = vmatprep.subr.bf16.mxu0 0
        %1809 = vmatpush1.bf16.msra.mxu0 0
        %1810 = vmatprep.subr.bf16.mxu0 0
        %1811 = vmatpush1.bf16.msra.mxu0 0
        %1812 = vmatprep.subr.bf16.mxu0 0
        %1813 = vmatpush1.bf16.msra.mxu0 0
        %1814 = vmatprep.subr.bf16.mxu0 0
        %1815 = vmatpush1.bf16.msra.mxu0 0
        %1816 = vmatprep.subr.bf16.mxu0 0
        %1817 = vmatpush1.bf16.msra.mxu0 0
        %1818 = vmatprep.subr.bf16.mxu0 0
        %1819 = vmatpush1.bf16.msra.mxu0 0
        %1820 = vmatprep.mubr.bf16.mxu0 0
        %1821 = vmatmul.mubr.bf16.gmra.mrb[0].mxu0 %v1733
        %v1822 = vpop.f32.mrb[0].mxu0
        %v1823 = vadd.f32 %v1738, %v1822
        %v1824 = vpop.f32.mrb[0].mxu0
        %v1825 = vpop.f32.mrb[0].mxu0
        %v1826 = vpop.f32.mrb[0].mxu0
        %1827 = vdwg.mxu0
        %v1828 = vadd.f32 %v1635, %v1823
        %1829 = vst.msk [vmem:[#allocation2] sm:$0x1f] %vm1050, %v1828
        %p1830 = scmp.eq.s32.totalorder %s39, 1
        // Predicated region
        $region105: #{clip_forward.3} parent=99 // pred_check
          %p1831 = pneg %p1830
        $region106: #{clip_forward.3} parent=99 // pred_check_branch
          %1833 = sbr.rel (%p1831) target = $region108
        $region107: #{clip_forward.3} parent=99 // pred_region
          %v1834 = vld [vmem:[%s17] sm:$0x1]
          %v1835 = vld [vmem:[%s18] sm:$0x1]
          %vm1836 = vcmask 253952
          %v1837 = vsel %vm1836, %v1828, 0.0
          %1838 = vadd.xlane.f32.xlu0 %v1837
          %v1839 = vpop.xlane.xlu0 %1838
          %v1840 = vmul.f32 %v1839, %v1054
          %v1841 = vsub.f32 %v1828, %v1840
          %v1842 = vmul.f32 %v1841, %v1841
          %v1843 = vsel %vm1836, %v1842, 0.0
          %1844 = vadd.xlane.f32.xlu0 %v1843
          %v1845 = vpop.xlane.xlu0 %1844
          %v1846 = vmul.f32 %v1845, %v1054
          %v1847 = vadd.f32 %v1846, 1e-05
          %v1848 = vrsqrt.pop %v1847
          %v1849 = vmul.f32 %v1841, %v1848
          %v1850 = vmul.f32 %v1849, %v1834
          %v1851 = vadd.f32 %v1850, %v1835
          %v1852 = vpack.c.bf16 %v1851, %v1851
          %v1853 = vld [vmem:[%s19] sm:$0xf]
          %v1854 = vld [vmem:[%s19 + $0x4] sm:$0xf]
          %v1855 = vld [vmem:[%s19 + $0x8] sm:$0xf]
          %v1856 = vld [vmem:[%s19 + $0xc] sm:$0xf]
          %v1861 = vunpack.c.l.b16 %v1853
          %v1862 = vunpack.c.l.b16 %v1854
          %v1863 = vunpack.c.l.b16 %v1855
          %v1864 = vunpack.c.l.b16 %v1856
          %v1865 = vpack.c.b16 %v1862, %v1861
          %v1866 = vpack.c.b16 %v1864, %v1863
          %v1870 = vsel %vm1098, %v1852, 0
          %1872 = vmatprep.subr.bf16.mxu0 0
          %1873 = vmatpush1.bf16.msra.mxu0 %v1865
          %1874 = vmatprep.subr.bf16.mxu0 0
          %1875 = vmatpush1.bf16.msra.mxu0 %v1866
          %1876 = vmatprep.subr.bf16.mxu0 0
          %1877 = vmatpush1.bf16.msra.mxu0 0
          %1878 = vmatprep.subr.bf16.mxu0 0
          %1879 = vmatpush1.bf16.msra.mxu0 0
          %1880 = vmatprep.subr.bf16.mxu0 0
          %1881 = vmatpush1.bf16.msra.mxu0 0
          %1882 = vmatprep.subr.bf16.mxu0 0
          %1883 = vmatpush1.bf16.msra.mxu0 0
          %1884 = vmatprep.subr.bf16.mxu0 0
          %1885 = vmatpush1.bf16.msra.mxu0 0
          %1886 = vmatprep.subr.bf16.mxu0 0
          %1887 = vmatpush1.bf16.msra.mxu0 0
          %1888 = vmatprep.subr.bf16.mxu0 0
          %1889 = vmatpush1.bf16.msra.mxu0 0
          %1890 = vmatprep.subr.bf16.mxu0 0
          %1891 = vmatpush1.bf16.msra.mxu0 0
          %1892 = vmatprep.subr.bf16.mxu0 0
          %1893 = vmatpush1.bf16.msra.mxu0 0
          %1894 = vmatprep.subr.bf16.mxu0 0
          %1895 = vmatpush1.bf16.msra.mxu0 0
          %1896 = vmatprep.subr.bf16.mxu0 0
          %1897 = vmatpush1.bf16.msra.mxu0 0
          %1898 = vmatprep.subr.bf16.mxu0 0
          %1899 = vmatpush1.bf16.msra.mxu0 0
          %1900 = vmatprep.subr.bf16.mxu0 0
          %1901 = vmatpush1.bf16.msra.mxu0 0
          %1902 = vmatprep.subr.bf16.mxu0 0
          %1903 = vmatpush1.bf16.msra.mxu0 0
          %1904 = vmatprep.mubr.bf16.mxu0 0
          %1905 = vmatmul.mubr.bf16.gmra.mrb[0].mxu0 %v1870
          %v1906 = vpop.f32.mrb[0].mxu0
          %v1907 = vadd.f32 0.0, %v1906
          %v1908 = vpop.f32.mrb[0].mxu0
          %v1909 = vpop.f32.mrb[0].mxu0
          %v1910 = vpop.f32.mrb[0].mxu0
          %1911 = vdwg.mxu0
          %v1912 = vmul.f32 %v1907, %v1907
          %vm1913 = vcmask 122880
          %v1914 = vsel %vm1913, %v1912, 0.0
          %1915 = vadd.xlane.f32.xlu0 %v1914
          %v1916 = vpop.xlane.xlu0 %1915
          %v1917 = vmax.f32 %v1916, 1e-24
          %v1918 = vrsqrt.pop %v1917
          %v1919 = vmul.f32 %v1907, %v1918
          %1920 = vst.msk [vmem:[%s781] sm:$0x1] %vm1913, %v1919
        $region108: #{clip_forward.3} parent=99 // pred_fallthru
          _
        %s1921 = sand.u32 %s539, 1
        %s1922 = scalar_lea.sflag [#allocation4], %s1921
        %s1923 = sand.u32 %s539, 1
        %s1924 = scalar_lea.vmem [#allocation3], %s1923
        // Predicated region
        $region109: #{clip_forward.3} parent=99 // pred_check
          %p1925 = pneg %p549
        $region110: #{clip_forward.3} parent=99 // pred_check_branch
          %1927 = sbr.rel (%p1925) target = $region112
        $region111: #{clip_forward.3} parent=99 // pred_region
          %s1929 = ssub.s32 16, 16
          %1930 = vsyncadd %s1922, %s1929
          %s1931 = smul.addr %s38, 16
          %s1932 = scalar_lea.hbm %s20, %s1931
          %s1934 = sshll.u32 %s1924, 4
          %s1935 = int_to_ptr.vmem [resolvable:$true] %s1934
          %1937 = dma.vmem_to_hbm [thread:$0]  %s1935, 16, %s1932, %s1922
        $region112: #{clip_forward.3} parent=99 // pred_fallthru
          _
      $region100: #{clip_forward.3} parent=5 // pred_fallthru
        _
      %p1938 = scmp.le.s32.totalorder 2, %s29
      // Predicated region
      $region113: #{clip_forward.3} parent=5 // pred_check
        %p1939 = pneg %p1938
      $region114: #{clip_forward.3} parent=5 // pred_check_branch
        %1941 = sbr.rel (%p1939) target = $region116
      $region115: #{clip_forward.3} parent=5 // pred_region
        %s1942 = ssub.s32 %s29, 2
        // Predicated region
        $region117: #{clip_forward.3} parent=115 // pred_check
          %p1943 = pneg %p555
        $region118: #{clip_forward.3} parent=115 // pred_check_branch
          %1945 = sbr.rel (%p1943) target = $region120
        $region119: #{clip_forward.3} parent=115 // pred_region
          %s1946 = sand.u32 %s540, 1
          %s1947 = scalar_lea.sflag [#allocation4], %s1946
          %s1948 = sand.u32 %s540, 1
          %s1949 = scalar_lea.vmem [#allocation3], %s1948
          %1950 = dma.done %s1947, 16
        $region120: #{clip_forward.3} parent=115 // pred_fallthru
          _
      $region116: #{clip_forward.3} parent=5 // pred_fallthru
        _
    $region6: #{clip_forward.3} parent=1 // loop_footer
      %s33 = sadd.s32 1, %s29
    $region7: #{clip_forward.3} parent=1 // loop_footer_branch
      %28 = sbr.rel target = $region3
    $region8: #{clip_forward.3} parent=1 // loop_exit
      _
    %1951 = vsyncpa [#allocation4], 1
    %s1952 = scalar_lea.sflag [#allocation4], 1
    %1953 = vsyncpa %s1952, 1

</llo_original>
